<compile_context>
chip_gen: v6e
topology: v6e:2x2x1
jax: 0.10.0
libtpu: 0.0.40
codegen_flags: <defaults>
</compile_context>

<pallas_src>
import functools

import jax
import jax.numpy as jnp
from jax.experimental import pallas as pl
from jax.experimental.pallas import tpu as pltpu


def _ru(x, m):
    return (x + m - 1) // m * m


# ---------------------------------------------------------------------------
# Pallas kernel: one output-row tile.
#   x_ref : (TM_IN, cinp)      bf16  flattened padded rows (tile + halo)
#   w_ref : (k*k*cinp, coutp)  bf16  BN-folded weights, tap-major
#   b_ref : (1, coutp)         f32   folded BN bias
#   o_ref : (TM, coutp)        bf16
#   scratch (only for small Cin): (TM, k*k*cinp) bf16 VMEM -- taps folded into the
#   MXU contraction dimension.
# ---------------------------------------------------------------------------
def _conv_bn_relu_kernel(x_ref, w_ref, b_ref, o_ref, *scratch, offsets, cinp, relu):
    tm = o_ref.shape[0]
    if scratch:
        # Fold the k*k taps into one big contraction (K = k*k*cinp): build the LHS
        # in a VMEM scratch from statically shifted row windows, then one MXU matmul.
        lhs_ref, = scratch
        for t, off in enumerate(offsets):                      # static, unrolled
            lhs_ref[:, pl.ds(t * cinp, cinp)] = x_ref[pl.ds(off, tm), :]
        acc = jnp.dot(lhs_ref[...], w_ref[...], preferred_element_type=jnp.float32)
    else:
        # Large Cin: K = cinp per tap is already MXU-friendly; accumulate per tap.
        acc = jnp.zeros(o_ref.shape, jnp.float32)
        for t, off in enumerate(offsets):                      # static, unrolled
            acc = acc + jnp.dot(x_ref[pl.ds(off, tm), :],
                                w_ref[pl.ds(t * cinp, cinp), :],
                                preferred_element_type=jnp.float32)
    acc = acc + b_ref[...]
    if relu:
        acc = jnp.maximum(acc, 0.0)
    o_ref[...] = acc.astype(o_ref.dtype)


# ---------------------------------------------------------------------------
# One-time parameter preparation: fold BN (+ optional conv bias) into the conv
# weights, rewrite stride-s as a stride-1 conv on a space-to-depth input, pad to
# TPU-friendly tiles.
# ---------------------------------------------------------------------------
def _fold_stride_into_weights(w_hwio, stride):
    """stride-s (k x k, Cin) conv == stride-1 (k2 x k2, s*s*Cin) conv on the
    space-to-depth input, k2 = ceil(k/s); missing taps are zero-filled."""
    k = w_hwio.shape[0]
    if stride == 1:
        return w_hwio
    s = stride
    k2 = -(-k // s)
    cin, cout = w_hwio.shape[2], w_hwio.shape[3]
    w2 = jnp.zeros((k2, k2, s, s, cin, cout), w_hwio.dtype)
    for a in range(k2):
        for p in range(s):
            di = a * s + p
            if di >= k:
                continue
            for b in range(k2):
                for q in range(s):
                    dj = b * s + q
                    if dj >= k:
                        continue
                    w2 = w2.at[a, b, p, q].set(w_hwio[di, dj])
    return w2.reshape(k2, k2, s * s * cin, cout)


def prepare_conv_bn_params(w_oihw, gamma, beta, run_mean, run_var, *,
                           eps=1e-3, stride=1, padding="same", conv_bias=None):
    # eps=1e-3 matches nn.BatchNorm2d(out_channels, eps=0.001) in the module spec.
    cout, cin, k, _ = w_oihw.shape
    pad = (k - 1) // 2 if padding == "same" else int(padding)

    scale = gamma / jnp.sqrt(run_var + eps)                    # (Cout,)
    if conv_bias is None:
        conv_bias = jnp.zeros((cout,), jnp.float32)
    bias = beta + (conv_bias - run_mean) * scale               # (Cout,)

    w_hwio = jnp.transpose(w_oihw, (2, 3, 1, 0)) * scale[None, None, None, :]
    w_eff = _fold_stride_into_weights(w_hwio, stride)          # (k2, k2, cin2, cout)
    k2, _, cin2, _ = w_eff.shape

    cin2p = _ru(cin2, 16)                                      # bf16 sublane packing
    coutp = _ru(cout, 128)                                     # lane-dense stores
    w_eff = jnp.pad(w_eff, ((0, 0), (0, 0), (0, cin2p - cin2), (0, coutp - cout)))
    w_mat = w_eff.reshape(k2 * k2 * cin2p, coutp).astype(jnp.bfloat16)
    b = jnp.pad(bias, (0, coutp - cout)).reshape(1, coutp).astype(jnp.float32)

    return dict(w_mat=w_mat, bias=b, k=k, k2=k2, stride=stride, pad=pad,
                cin=cin, cin2=cin2, cin2p=cin2p, cout=cout, coutp=coutp,
                fold_taps=cin2p < 128)


# ---------------------------------------------------------------------------
# Tiling heuristic: largest output-row tile whose VMEM footprint fits the budget.
# ---------------------------------------------------------------------------
def _choose_tile_rows(k2, we_p, cinp, coutp, fold_taps, budget=20 * 1024 * 1024):
    max_off = (k2 - 1) * we_p + (k2 - 1)
    for tm in (4096, 2048, 1024, 512, 256, 128, 64, 32, 16):
        tm_in = _ru(tm + max_off, 16)
        need = (2 * tm_in * cinp * 2                       # double-buffered input tile
                + 2 * tm * coutp * 2                       # double-buffered bf16 output
                + tm * coutp * 4                           # f32 accumulator
                + (tm * k2 * k2 * cinp * 2 if fold_taps else 0)  # folded-LHS scratch
                + 2 * k2 * k2 * cinp * coutp * 2)          # resident weights
        if need <= budget:
            return tm
    return 16


def _space_to_depth(x, s):
    n, h, w, c = x.shape
    h2, w2 = -(-h // s), -(-w // s)
    x = jnp.pad(x, ((0, 0), (0, h2 * s - h), (0, w2 * s - w), (0, 0)))
    x = x.reshape(n, h2, s, w2, s, c)
    x = jnp.transpose(x, (0, 1, 3, 2, 4, 5))
    return x.reshape(n, h2, w2, s * s * c)


# ---------------------------------------------------------------------------
# NHWC forward pass (bf16 in/out end-to-end; this is the production entry point).
# ---------------------------------------------------------------------------
def conv_bn_relu_nhwc(x_nhwc, prep, *, relu=True, tile_rows=None):
    k, k2, s, pad = prep["k"], prep["k2"], prep["stride"], prep["pad"]
    cin, cin2, cin2p = prep["cin"], prep["cin2"], prep["cin2p"]
    cout, coutp, fold_taps = prep["cout"], prep["coutp"], prep["fold_taps"]

    n, h, w, c = x_nhwc.shape
    if c != cin:
        raise ValueError("channel mismatch")
    ho = (h + 2 * pad - k) // s + 1
    wo = (w + 2 * pad - k) // s + 1

    # Spatial padding, stride folding (space-to-depth), row-pitch & channel padding.
    xp = jnp.pad(x_nhwc, ((0, 0), (pad, pad), (pad, pad), (0, 0)))
    if s > 1:
        xp = _space_to_depth(xp, s)                   # stride-s conv -> stride-1 conv
    he, we = xp.shape[1], xp.shape[2]
    we_p = _ru(we, 8)                                 # sublane-aligned row pitch
    xp = jnp.pad(xp, ((0, 0), (0, 0), (0, we_p - we), (0, cin2p - cin2)))
    xp = xp.astype(jnp.bfloat16)

    # Flatten spatial dims; each tap (di, dj) becomes a static row offset di*we_p+dj.
    m_rows = ho * we_p                                # stride-1 output rows
    tm = tile_rows or _choose_tile_rows(k2, we_p, cin2p, coutp, fold_taps)
    tm = max(16, min(_ru(tm, 16), _ru(m_rows, 16)))
    n_t = pl.cdiv(m_rows, tm)
    max_off = (k2 - 1) * we_p + (k2 - 1)
    tm_in = _ru(tm + max_off, 16)
    rows_needed = (n_t - 1) * tm + tm_in

    x_flat = xp.reshape(n, he * we_p, cin2p)
    if rows_needed > he * we_p:
        x_flat = jnp.pad(x_flat, ((0, 0), (0, rows_needed - he * we_p), (0, 0)))
    # Halo-replicated row tiles (overlap = max_off rows per tile, a few % of a tile).
    # TODO(synk): replace with an in-kernel halo DMA (pl.ANY + make_async_copy).
    idx = jnp.arange(n_t)[:, None] * tm + jnp.arange(tm_in)[None, :]
    x_tiles = jnp.take(x_flat, idx, axis=1)           # (N, n_t, tm_in, cin2p)

    offsets = tuple(di * we_p + dj for di in range(k2) for dj in range(k2))
    kernel = functools.partial(_conv_bn_relu_kernel, offsets=offsets,
                               cinp=cin2p, relu=relu)
    scratch = [pltpu.VMEM((tm, k2 * k2 * cin2p), jnp.bfloat16)] if fold_taps else []

    flops = 2 * n * n_t * tm * k2 * k2 * cin2p * coutp
    bytes_accessed = (n * n_t * tm_in * cin2p * 2
                      + k2 * k2 * cin2p * coutp * 2
                      + coutp * 4
                      + n * n_t * tm * coutp * 2)

    out = pl.pallas_call(
        kernel,
        out_shape=jax.ShapeDtypeStruct((n, n_t * tm, coutp), jnp.bfloat16),
        grid=(n, n_t),
        in_specs=[
            pl.BlockSpec((None, None, tm_in, cin2p), lambda b, t: (b, t, 0, 0)),
            pl.BlockSpec(prep["w_mat"].shape, lambda b, t: (0, 0)),   # VMEM-resident
            pl.BlockSpec((1, coutp), lambda b, t: (0, 0)),            # VMEM-resident
        ],
        out_specs=pl.BlockSpec((None, tm, coutp), lambda b, t: (b, t, 0)),
        scratch_shapes=scratch,
        compiler_params=pltpu.CompilerParams(
            dimension_semantics=("parallel", "parallel"),
            vmem_limit_bytes=48 * 1024 * 1024),
        cost_estimate=pl.CostEstimate(flops=flops, transcendentals=0,
                                      bytes_accessed=bytes_accessed),
    )(x_tiles, prep["w_mat"], prep["bias"])

    # Strip garbage columns/rows and channel padding (a view for the consumer).
    y = out[:, :m_rows, :cout].reshape(n, ho, we_p, cout)[:, :, :wo, :]
    return y


# ---------------------------------------------------------------------------
# NCHW wrapper (PyTorch interface; only used for the demo / reference comparison).
# ---------------------------------------------------------------------------
def conv_bn_relu_nchw(x_nchw, prep, *, relu=True, tile_rows=None):
    y = conv_bn_relu_nhwc(jnp.transpose(x_nchw, (0, 2, 3, 1)), prep,
                          relu=relu, tile_rows=tile_rows)
    return jnp.transpose(y, (0, 3, 1, 2)).astype(jnp.float32)


# ---------------------------------------------------------------------------
# Pure-JAX reference (correctness check).
# ---------------------------------------------------------------------------
def reference_conv_bn_relu(x_nchw, w_oihw, gamma, beta, run_mean, run_var,
                           *, stride=1, padding="same", eps=1e-3):
    k = w_oihw.shape[-1]
    pad = (k - 1) // 2 if padding == "same" else int(padding)
    y = jax.lax.conv_general_dilated(
        x_nchw, w_oihw, window_strides=(stride, stride),
        padding=[(pad, pad), (pad, pad)],
        dimension_numbers=("NCHW", "OIHW", "NCHW"),
        precision=jax.lax.Precision.HIGHEST)
    scale = gamma / jnp.sqrt(run_var + eps)
    bias = beta - run_mean * scale
    y = y * scale[None, :, None, None] + bias[None, :, None, None]
    return jnp.maximum(y, 0.0)


# ---------------------------------------------------------------------------
# Demo
# ---------------------------------------------------------------------------
if __name__ == "__main__":
    keys = jax.random.split(jax.random.PRNGKey(0), 12)

    def make_params(kws, cin, cout, ksz, wscale):
        w = wscale * jax.random.normal(kws[0], (cout, cin, ksz, ksz), jnp.float32)
        gamma = 1.0 + 0.1 * jax.random.normal(kws[1], (cout,), jnp.float32)
        beta = 0.1 * jax.random.normal(kws[2], (cout,), jnp.float32)
        mean = 0.05 * jax.random.normal(kws[3], (cout,), jnp.float32)
        var = 1.0 + 0.1 * jax.random.uniform(kws[4], (cout,), jnp.float32)
        return w, gamma, beta, mean, var

    def check(x, params, stride):
        w, gamma, beta, mean, var = params
        prep = prepare_conv_bn_params(w, gamma, beta, mean, var,
                                      eps=1e-3, stride=stride, padding="same")
        out = conv_bn_relu_nchw(x, prep)
        jax.block_until_ready(out)
        ref = reference_conv_bn_relu(x, w, gamma, beta, mean, var,
                                     stride=stride, padding="same", eps=1e-3)
        assert out.shape == ref.shape, (out.shape, ref.shape)
        assert bool(jnp.all(jnp.isfinite(out)))
        assert bool(jnp.allclose(out, ref, atol=5e-2, rtol=5e-2)), \
            float(jnp.max(jnp.abs(out - ref)))

    # Stem-like layer (small Cin -> folded-tap MXU path), stride 1 and stride 2.
    x_small = jax.random.normal(keys[0], (2, 4, 16, 16), jnp.float32)
    p_small = make_params(keys[1:6], 4, 32, 3, 0.1)
    check(x_small, p_small, stride=1)
    check(x_small, p_small, stride=2)

    # Wider layer (Cin=128 -> per-tap accumulation path).
    x_wide = jax.random.normal(keys[6], (2, 128, 16, 16), jnp.float32)
    p_wide = make_params(keys[7:12], 128, 128, 3, 0.05)
    check(x_wide, p_wide, stride=1)

    print("KERNEL_OK")
</pallas_src>

<mosaic_0001>
module attributes {stable_mosaic.version = 11 : i64} {
  func.func @_conv_bn_relu_kernel(%arg0: i32, %arg1: i32, %arg2: memref<1x1x448x16xbf16, #tpu.memory_space<vmem>>, %arg3: memref<144x128xbf16, #tpu.memory_space<vmem>>, %arg4: memref<1x128xf32, #tpu.memory_space<vmem>>, %arg5: memref<1x384x128xbf16, #tpu.memory_space<vmem>>, %arg6: memref<384x144xbf16, #tpu.memory_space<vmem>>) attributes {dimension_semantics = [#tpu.dimension_semantics<parallel>, #tpu.dimension_semantics<parallel>], iteration_bounds = array<i64: 2, 1>, scalar_prefetch = 0 : i64, scratch_operands = 1 : i64, tpu.core_type = #tpu.core_type<tc>, window_params = [{transform_indices = @transform_0, window_bounds = array<i64: 1, 1, 448, 16>}, {pipeline_mode = #tpu.pipeline_mode<synchronous>, transform_indices = @transform_1, window_bounds = array<i64: 144, 128>}, {pipeline_mode = #tpu.pipeline_mode<synchronous>, transform_indices = @transform_2, window_bounds = array<i64: 1, 128>}, {transform_indices = @transform_3, window_bounds = array<i64: 1, 384, 128>}]} {
    %c0 = arith.constant 0 : index
    %c0_0 = arith.constant 0 : index
    %c0_1 = arith.constant 0 : index
    %c0_2 = arith.constant 0 : index
    %0 = vector.load %arg2[%c0, %c0_0, %c0_1, %c0_2] : memref<1x1x448x16xbf16, #tpu.memory_space<vmem>>, vector<1x1x384x16xbf16>
    %1 = vector.shape_cast %0 : vector<1x1x384x16xbf16> to vector<384x16xbf16>
    %c0_3 = arith.constant 0 : index
    %c0_4 = arith.constant 0 : index
    %2 = vector.load %arg6[%c0_3, %c0_4] : memref<384x144xbf16, #tpu.memory_space<vmem>>, vector<384x16xbf16>
    tpu.vector_store %arg6[%c0_3, %c0_4], %1 {strides = array<i32>} : memref<384x144xbf16, #tpu.memory_space<vmem>>, vector<384x16xbf16>,
    %c0_5 = arith.constant 0 : index
    %c0_6 = arith.constant 0 : index
    %c1 = arith.constant 1 : index
    %c0_7 = arith.constant 0 : index
    %3 = vector.load %arg2[%c0_5, %c0_6, %c1, %c0_7] : memref<1x1x448x16xbf16, #tpu.memory_space<vmem>>, vector<1x1x384x16xbf16>
    %4 = vector.shape_cast %3 : vector<1x1x384x16xbf16> to vector<384x16xbf16>
    %c0_8 = arith.constant 0 : index
    %c16 = arith.constant 16 : index
    %5 = vector.load %arg6[%c0_8, %c16] : memref<384x144xbf16, #tpu.memory_space<vmem>>, vector<384x16xbf16>
    tpu.vector_store %arg6[%c0_8, %c16], %4 {strides = array<i32>} : memref<384x144xbf16, #tpu.memory_space<vmem>>, vector<384x16xbf16>,
    %c0_9 = arith.constant 0 : index
    %c0_10 = arith.constant 0 : index
    %c2 = arith.constant 2 : index
    %c0_11 = arith.constant 0 : index
    %6 = vector.load %arg2[%c0_9, %c0_10, %c2, %c0_11] : memref<1x1x448x16xbf16, #tpu.memory_space<vmem>>, vector<1x1x384x16xbf16>
    %7 = vector.shape_cast %6 : vector<1x1x384x16xbf16> to vector<384x16xbf16>
    %c0_12 = arith.constant 0 : index
    %c32 = arith.constant 32 : index
    %8 = vector.load %arg6[%c0_12, %c32] : memref<384x144xbf16, #tpu.memory_space<vmem>>, vector<384x16xbf16>
    tpu.vector_store %arg6[%c0_12, %c32], %7 {strides = array<i32>} : memref<384x144xbf16, #tpu.memory_space<vmem>>, vector<384x16xbf16>,
    %c0_13 = arith.constant 0 : index
    %c0_14 = arith.constant 0 : index
    %c24 = arith.constant 24 : index
    %c0_15 = arith.constant 0 : index
    %9 = vector.load %arg2[%c0_13, %c0_14, %c24, %c0_15] : memref<1x1x448x16xbf16, #tpu.memory_space<vmem>>, vector<1x1x384x16xbf16>
    %10 = vector.shape_cast %9 : vector<1x1x384x16xbf16> to vector<384x16xbf16>
    %c0_16 = arith.constant 0 : index
    %c48 = arith.constant 48 : index
    %11 = vector.load %arg6[%c0_16, %c48] : memref<384x144xbf16, #tpu.memory_space<vmem>>, vector<384x16xbf16>
    tpu.vector_store %arg6[%c0_16, %c48], %10 {strides = array<i32>} : memref<384x144xbf16, #tpu.memory_space<vmem>>, vector<384x16xbf16>,
    %c0_17 = arith.constant 0 : index
    %c0_18 = arith.constant 0 : index
    %c25 = arith.constant 25 : index
    %c0_19 = arith.constant 0 : index
    %12 = vector.load %arg2[%c0_17, %c0_18, %c25, %c0_19] : memref<1x1x448x16xbf16, #tpu.memory_space<vmem>>, vector<1x1x384x16xbf16>
    %13 = vector.shape_cast %12 : vector<1x1x384x16xbf16> to vector<384x16xbf16>
    %c0_20 = arith.constant 0 : index
    %c64 = arith.constant 64 : index
    %14 = vector.load %arg6[%c0_20, %c64] : memref<384x144xbf16, #tpu.memory_space<vmem>>, vector<384x16xbf16>
    tpu.vector_store %arg6[%c0_20, %c64], %13 {strides = array<i32>} : memref<384x144xbf16, #tpu.memory_space<vmem>>, vector<384x16xbf16>,
    %c0_21 = arith.constant 0 : index
    %c0_22 = arith.constant 0 : index
    %c26 = arith.constant 26 : index
    %c0_23 = arith.constant 0 : index
    %15 = vector.load %arg2[%c0_21, %c0_22, %c26, %c0_23] : memref<1x1x448x16xbf16, #tpu.memory_space<vmem>>, vector<1x1x384x16xbf16>
    %16 = vector.shape_cast %15 : vector<1x1x384x16xbf16> to vector<384x16xbf16>
    %c0_24 = arith.constant 0 : index
    %c80 = arith.constant 80 : index
    %17 = vector.load %arg6[%c0_24, %c80] : memref<384x144xbf16, #tpu.memory_space<vmem>>, vector<384x16xbf16>
    tpu.vector_store %arg6[%c0_24, %c80], %16 {strides = array<i32>} : memref<384x144xbf16, #tpu.memory_space<vmem>>, vector<384x16xbf16>,
    %c0_25 = arith.constant 0 : index
    %c0_26 = arith.constant 0 : index
    %c48_27 = arith.constant 48 : index
    %c0_28 = arith.constant 0 : index
    %18 = vector.load %arg2[%c0_25, %c0_26, %c48_27, %c0_28] : memref<1x1x448x16xbf16, #tpu.memory_space<vmem>>, vector<1x1x384x16xbf16>
    %19 = vector.shape_cast %18 : vector<1x1x384x16xbf16> to vector<384x16xbf16>
    %c0_29 = arith.constant 0 : index
    %c96 = arith.constant 96 : index
    %20 = vector.load %arg6[%c0_29, %c96] : memref<384x144xbf16, #tpu.memory_space<vmem>>, vector<384x16xbf16>
    tpu.vector_store %arg6[%c0_29, %c96], %19 {strides = array<i32>} : memref<384x144xbf16, #tpu.memory_space<vmem>>, vector<384x16xbf16>,
    %c0_30 = arith.constant 0 : index
    %c0_31 = arith.constant 0 : index
    %c49 = arith.constant 49 : index
    %c0_32 = arith.constant 0 : index
    %21 = vector.load %arg2[%c0_30, %c0_31, %c49, %c0_32] : memref<1x1x448x16xbf16, #tpu.memory_space<vmem>>, vector<1x1x384x16xbf16>
    %22 = vector.shape_cast %21 : vector<1x1x384x16xbf16> to vector<384x16xbf16>
    %c0_33 = arith.constant 0 : index
    %c112 = arith.constant 112 : index
    %23 = vector.load %arg6[%c0_33, %c112] : memref<384x144xbf16, #tpu.memory_space<vmem>>, vector<384x16xbf16>
    tpu.vector_store %arg6[%c0_33, %c112], %22 {strides = array<i32>} : memref<384x144xbf16, #tpu.memory_space<vmem>>, vector<384x16xbf16>,
    %c0_34 = arith.constant 0 : index
    %c0_35 = arith.constant 0 : index
    %c50 = arith.constant 50 : index
    %c0_36 = arith.constant 0 : index
    %24 = vector.load %arg2[%c0_34, %c0_35, %c50, %c0_36] : memref<1x1x448x16xbf16, #tpu.memory_space<vmem>>, vector<1x1x384x16xbf16>
    %25 = vector.shape_cast %24 : vector<1x1x384x16xbf16> to vector<384x16xbf16>
    %c0_37 = arith.constant 0 : index
    %c128 = arith.constant 128 : index
    %26 = vector.load %arg6[%c0_37, %c128] : memref<384x144xbf16, #tpu.memory_space<vmem>>, vector<384x16xbf16>
    tpu.vector_store %arg6[%c0_37, %c128], %25 {strides = array<i32>} : memref<384x144xbf16, #tpu.memory_space<vmem>>, vector<384x16xbf16>,
    %c0_38 = arith.constant 0 : index
    %c0_39 = arith.constant 0 : index
    %27 = vector.load %arg6[%c0_38, %c0_39] : memref<384x144xbf16, #tpu.memory_space<vmem>>, vector<384x144xbf16>
    %c0_40 = arith.constant 0 : index
    %c0_41 = arith.constant 0 : index
    %28 = vector.load %arg3[%c0_40, %c0_41] : memref<144x128xbf16, #tpu.memory_space<vmem>>, vector<144x128xbf16>
    %cst = arith.constant dense<0.000000e+00> : vector<384x128xf32>
    %29 = tpu.matmul %27, %28, %cst {dimension_numbers = #tpu.dot_dimension_numbers<[1], [0], [0], [1], [0, 0, 1, 1], [], []>} : vector<384x144xbf16>, vector<144x128xbf16>, vector<384x128xf32> -> vector<384x128xf32>
    %c0_42 = arith.constant 0 : index
    %c0_43 = arith.constant 0 : index
    %30 = vector.load %arg4[%c0_42, %c0_43] : memref<1x128xf32, #tpu.memory_space<vmem>>, vector<1x128xf32>
    %31 = vector.broadcast %30 : vector<1x128xf32> to vector<384x128xf32>
    %32 = arith.addf %29, %31 : vector<384x128xf32>
    %cst_44 = arith.constant 0.000000e+00 : f32
    %33 = vector.broadcast %cst_44 : f32 to vector<384x128xf32>
    %34 = arith.maximumf %32, %33 : vector<384x128xf32>
    %35 = arith.truncf %34 : vector<384x128xf32> to vector<384x128xbf16>
    %c0_45 = arith.constant 0 : index
    %c0_46 = arith.constant 0 : index
    %c0_47 = arith.constant 0 : index
    %36 = vector.load %arg5[%c0_45, %c0_46, %c0_47] : memref<1x384x128xbf16, #tpu.memory_space<vmem>>, vector<1x384x128xbf16>
    %37 = vector.shape_cast %36 : vector<1x384x128xbf16> to vector<384x128xbf16>
    %38 = vector.shape_cast %35 : vector<384x128xbf16> to vector<1x384x128xbf16>
    tpu.vector_store %arg5[%c0_45, %c0_46, %c0_47], %38 {strides = array<i32>} : memref<1x384x128xbf16, #tpu.memory_space<vmem>>, vector<1x384x128xbf16>,
    return
  }
  func.func @transform_0(%arg0: i32, %arg1: i32) -> (i32, i32, i32, i32) {
    %c0_i32 = arith.constant 0 : i32
    %c0_i32_0 = arith.constant 0 : i32
    %c0_i32_1 = arith.constant 0 : i32
    return %arg0, %arg1, %c0_i32, %c0_i32_0 : i32, i32, i32, i32
  }
  func.func @transform_1(%arg0: i32, %arg1: i32) -> (i32, i32) {
    %c0_i32 = arith.constant 0 : i32
    %c0_i32_0 = arith.constant 0 : i32
    %c0_i32_1 = arith.constant 0 : i32
    return %c0_i32, %c0_i32_0 : i32, i32
  }
  func.func @transform_2(%arg0: i32, %arg1: i32) -> (i32, i32) {
    %c0_i32 = arith.constant 0 : i32
    %c0_i32_0 = arith.constant 0 : i32
    %c0_i32_1 = arith.constant 0 : i32
    return %c0_i32, %c0_i32_0 : i32, i32
  }
  func.func @transform_3(%arg0: i32, %arg1: i32) -> (i32, i32, i32) {
    %c0_i32 = arith.constant 0 : i32
    %c0_i32_0 = arith.constant 0 : i32
    return %arg0, %arg1, %c0_i32 : i32, i32, i32
  }
}

</mosaic_0001>

<llo_original>
// kernel: tpu_custom_call.1
$region0: #{tpu_custom_call.1}
  #allocation0 [shape = 'u32[]', space=smem, size = 0x4, offset = 0x4, fixed_abs, tag = 'smem constant byte address 0x4 - core index']
  #allocation1 [shape = 'u32[144,128]{1,0:T(1,128)}', space=vmem, size = 0x12000, scoped, tag = 'internal scratch']
  #allocation2 [shape = 'bf16[384,144]{1,0:T(8,128)(2,1)}', space=vmem, size = 0x30000, scoped, tag = 'scratch operand']
  %s0 = inlined_call_operand.vmem [shape: bf16[2,1,448,16], index: 0, kind: input, shape index: {}]
  %s1 = inlined_call_operand.vmem [shape: bf16[144,128], index: 1, kind: input, shape index: {}]
  %s2 = inlined_call_operand.vmem [shape: f32[1,128], index: 2, kind: input, shape index: {}]
  %s3 = inlined_call_operand.hbm [shape: bf16[2,384,128], index: 3, kind: output, shape index: {}]
  %s4 = sld [smem:[#allocation0]]
  $region45: #{tpu_custom_call.1} parent=0
    _
  %s6 = ssub.s32 1, %s4
  %s7 = scalar_select 0, %s6, %s4
  $region1: #{tpu_custom_call.1} parent=0
    #allocation3 [shape = 'u8[196608]{0}', space=vmem, size = 0x30000, scoped, tag = 'output window, operand 0']
    #allocation4 [shape = 's32[2]{0}', space=sflag, size = 0x8, scoped, tag = 'scoped memory for tpu_custom_call.1']
    %8 = vsyncpa [#allocation4], 0
    %s9 = scalar_lea.sflag [#allocation4], 1
    %10 = vsyncpa %s9, 0
    loop: start=0, step=1, limit=4
    $region2: #{tpu_custom_call.1} parent=1 // loop_pre_header
      _
    $region3: #{tpu_custom_call.1} parent=1 // loop_header
      %s12 = sphi 0, %s16
      %p13 = scmp.ge.s32.totalorder %s12, 4
      %s19 = sphi 0, %s31
      %s20 = sphi 0, %s27
      %s21 = sphi 0, %s19
      %s22 = sphi 0, %s20
      %s23 = sphi 0, %s21
      %s24 = sphi 0, %s22
      %s36 = sphi 0, %s38
      %s39 = sphi 0, %s36
      %s40 = sphi 0, %s39
      %s56 = sphi 0, %s40
      %s60 = sphi 0, %s60
      %s62 = sphi 0, %s60
      %s63 = sphi 0, %s62
      %s77 = sphi 0, %s63
      %s81 = sphi 0, %s81
      %s83 = sphi 0, %s81
      %s84 = sphi 0, %s83
      %s98 = sphi 0, %s84
      %s106 = sphi 0, %s108
      %s109 = sphi 0, %s106
      %s110 = sphi 0, %s109
      %s126 = sphi 0, %s110
    $region4: #{tpu_custom_call.1} parent=1 // loop_header_branch
      %15 = sbr.rel (%p13) target = $region8
    $region5: #{tpu_custom_call.1} parent=1 // loop_body
      %s17 = ssub.s32 %s12, 1
      %s18 = ssub.s32 %s12, 2
      %s25 = sadd.s32 1, %s20
      %p26 = scmp.ge.s32.totalorder %s25, 1
      %s27 = scalar_select %p26, 0, %s25
      %s28 = sadd.s32 1, %s19
      %s29 = scalar_select %p26, %s28, %s19
      %p30 = scmp.ge.s32.totalorder %s29, 2
      %s31 = scalar_select %p30, 0, %s29
      %s32 = ssub.s32 %s19, %s31
      %s33 = ssub.s32 %s20, %s27
      %s34 = sor.u32 %s32, %s33
      %p35 = scmp.eq.s32.totalorder %s34, 0
      %s37 = sadd.s32 %s36, 1
      %s38 = scalar_select %p35, %s36, %s37
      %p41 = pneg %p35
      %p42 = scmp.eq.s32.totalorder %s12, 1
      %p43 = por %p41, %p42
      %p44 = scmp.ne.s32.totalorder %s36, %s39
      %p45 = scmp.eq.s32.totalorder %s12, 0
      %p46 = por %p44, %p45
      %p47 = scmp.ne.s32.totalorder %s36, %s39
      %p48 = scmp.eq.s32.totalorder %s17, 1
      %p49 = por %p47, %p48
      %p50 = scmp.ne.s32.totalorder %s39, %s40
      %p51 = scmp.eq.s32.totalorder %s17, 0
      %p52 = por %p50, %p51
      %p53 = scmp.ne.s32.totalorder %s39, %s40
      %p54 = scmp.eq.s32.totalorder %s18, 1
      %p55 = por %p53, %p54
      %p57 = scmp.ne.s32.totalorder %s40, %s56
      %p58 = scmp.eq.s32.totalorder %s18, 0
      %p59 = por %p57, %p58
      %s61 = sadd.s32 %s60, 1
      %p64 = scmp.eq.s32.totalorder %s12, 1
      %p65 = scmp.ne.s32.totalorder %s60, %s62
      %p66 = scmp.eq.s32.totalorder %s12, 0
      %p67 = por %p65, %p66
      %p68 = scmp.ne.s32.totalorder %s60, %s62
      %p69 = scmp.eq.s32.totalorder %s17, 1
      %p70 = por %p68, %p69
      %p71 = scmp.ne.s32.totalorder %s62, %s63
      %p72 = scmp.eq.s32.totalorder %s17, 0
      %p73 = por %p71, %p72
      %p74 = scmp.ne.s32.totalorder %s62, %s63
      %p75 = scmp.eq.s32.totalorder %s18, 1
      %p76 = por %p74, %p75
      %p78 = scmp.ne.s32.totalorder %s63, %s77
      %p79 = scmp.eq.s32.totalorder %s18, 0
      %p80 = por %p78, %p79
      %s82 = sadd.s32 %s81, 1
      %p85 = scmp.eq.s32.totalorder %s12, 1
      %p86 = scmp.ne.s32.totalorder %s81, %s83
      %p87 = scmp.eq.s32.totalorder %s12, 0
      %p88 = por %p86, %p87
      %p89 = scmp.ne.s32.totalorder %s81, %s83
      %p90 = scmp.eq.s32.totalorder %s17, 1
      %p91 = por %p89, %p90
      %p92 = scmp.ne.s32.totalorder %s83, %s84
      %p93 = scmp.eq.s32.totalorder %s17, 0
      %p94 = por %p92, %p93
      %p95 = scmp.ne.s32.totalorder %s83, %s84
      %p96 = scmp.eq.s32.totalorder %s18, 1
      %p97 = por %p95, %p96
      %p99 = scmp.ne.s32.totalorder %s84, %s98
      %p100 = scmp.eq.s32.totalorder %s18, 0
      %p101 = por %p99, %p100
      %s102 = ssub.s32 %s19, %s31
      %s103 = ssub.s32 %s20, %s27
      %s104 = sor.u32 %s102, %s103
      %p105 = scmp.eq.s32.totalorder %s104, 0
      %s107 = sadd.s32 %s106, 1
      %s108 = scalar_select %p105, %s106, %s107
      %p111 = pneg %p105
      %p112 = scmp.eq.s32.totalorder %s12, 1
      %p113 = por %p111, %p112
      %p114 = scmp.ne.s32.totalorder %s106, %s109
      %p115 = scmp.eq.s32.totalorder %s12, 0
      %p116 = por %p114, %p115
      %p117 = scmp.ne.s32.totalorder %s106, %s109
      %p118 = scmp.eq.s32.totalorder %s17, 1
      %p119 = por %p117, %p118
      %p120 = scmp.ne.s32.totalorder %s109, %s110
      %p121 = scmp.eq.s32.totalorder %s17, 0
      %p122 = por %p120, %p121
      %p123 = scmp.ne.s32.totalorder %s109, %s110
      %p124 = scmp.eq.s32.totalorder %s18, 1
      %p125 = por %p123, %p124
      %p127 = scmp.ne.s32.totalorder %s110, %s126
      %p128 = scmp.eq.s32.totalorder %s18, 0
      %p129 = por %p127, %p128
      %p130 = scmp.le.s32.totalorder 1, %s12
      %p131 = scmp.lt.s32.totalorder %s12, 3
      %p132 = pnand %p130, %p131
      %p133 = pneg %p132
      // Predicated region
      $region9: #{tpu_custom_call.1} parent=5 // pred_check
        _
      $region10: #{tpu_custom_call.1} parent=5 // pred_check_branch
        %135 = sbr.rel (%p132) target = $region12
      $region11: #{tpu_custom_call.1} parent=5 // pred_region
        %s136 = ssub.s32 %s12, 1
        // Predicated region
        $region13: #{tpu_custom_call.1} parent=11 // pred_check
          %p137 = pneg %p73
        $region14: #{tpu_custom_call.1} parent=11 // pred_check_branch
          %139 = sbr.rel (%p137) target = $region16
        $region15: #{tpu_custom_call.1} parent=11 // pred_region
          _
        $region16: #{tpu_custom_call.1} parent=11 // pred_fallthru
          _
        // Predicated region
        $region17: #{tpu_custom_call.1} parent=11 // pred_check
          %p140 = pneg %p94
        $region18: #{tpu_custom_call.1} parent=11 // pred_check_branch
          %142 = sbr.rel (%p140) target = $region20
        $region19: #{tpu_custom_call.1} parent=11 // pred_region
          _
        $region20: #{tpu_custom_call.1} parent=11 // pred_fallthru
          _
      $region12: #{tpu_custom_call.1} parent=5 // pred_fallthru
        _
      %p143 = scmp.lt.s32.totalorder %s12, 2
      // Predicated region
      $region21: #{tpu_custom_call.1} parent=5 // pred_check
        %p144 = pneg %p143
      $region22: #{tpu_custom_call.1} parent=5 // pred_check_branch
        %146 = sbr.rel (%p144) target = $region24
      $region23: #{tpu_custom_call.1} parent=5 // pred_region
        // Predicated region
        $region25: #{tpu_custom_call.1} parent=23 // pred_check
          %p147 = pneg %p46
        $region26: #{tpu_custom_call.1} parent=23 // pred_check_branch
          %149 = sbr.rel (%p147) target = $region28
        $region27: #{tpu_custom_call.1} parent=23 // pred_region
          %p150 = scmp.lt.s32.totalorder %s19, 1
          %s151 = scalar_select %p150, %s19, 1
          %p152 = scmp.lt.s32.totalorder %s20, 0
          %s153 = scalar_select %p152, %s20, 0
          %s154 = smul.addr %s153, 56
          %s155 = smul.addr %s151, 56
          %s156 = sadd.s32 %s154, %s155
          %s157 = smul.addr %s156, 4
          %s158 = scalar_lea.vmem %s0, %s157
        $region28: #{tpu_custom_call.1} parent=23 // pred_fallthru
          _
      $region24: #{tpu_custom_call.1} parent=5 // pred_fallthru
        _
      %p159 = scmp.le.s32.totalorder 1, %s12
      %p160 = scmp.lt.s32.totalorder %s12, 3
      %p161 = pnand %p159, %p160
      %p162 = pneg %p161
      // Predicated region
      $region29: #{tpu_custom_call.1} parent=5 // pred_check
        _
      $region30: #{tpu_custom_call.1} parent=5 // pred_check_branch
        %164 = sbr.rel (%p161) target = $region32
      $region31: #{tpu_custom_call.1} parent=5 // pred_region
        %s165 = ssub.s32 %s12, 1
        %p166 = scmp.lt.s32.totalorder %s21, 1
        %s167 = scalar_select %p166, %s21, 1
        %p168 = scmp.lt.s32.totalorder %s22, 0
        %s169 = scalar_select %p168, %s22, 0
        %s170 = smul.addr %s169, 56
        %s171 = smul.addr %s167, 56
        %s172 = sadd.s32 %s170, %s171
        %s173 = smul.addr %s172, 4
        %s174 = scalar_lea.vmem %s0, %s173
        %p175 = pneg %p52
        %p176 = pneg %p49
        %p177 = pneg %p73
        %p178 = pneg %p70
        %p179 = pneg %p94
        %p180 = pneg %p91
        %p181 = pneg %p122
        %p182 = pneg %p119
        %s183 = sand.u32 %s109, 1
        %s184 = scalar_lea.sflag [#allocation4], %s183
        %s185 = sand.u32 %s109, 1
        %s186 = smul.addr %s185, 192
        %s187 = scalar_lea.vmem [#allocation3], %s186
        %p188 = scmp.lt.s32.totalorder %s21, 1
        %s189 = scalar_select %p188, %s21, 1
        %p190 = scmp.lt.s32.totalorder %s22, 0
        %s191 = scalar_select %p190, %s22, 0
        %s192 = smul.addr %s191, 56
        %s193 = smul.addr %s189, 56
        %s194 = sadd.s32 %s192, %s193
        %s195 = smul.addr %s194, 4
        %s196 = scalar_lea.vmem %s0, %s195
        %s197 = smul.u32 48, %s22
        %v199 = vld [vmem:[%s196] sm:$0xf]
        %v200 = vld [vmem:[%s196 + $0x4] sm:$0xf]
        %v201 = vld [vmem:[%s196 + $0x8] sm:$0xf]
        %v202 = vld [vmem:[%s196 + $0xc] sm:$0xf]
        %v203 = vld [vmem:[%s196 + $0x10] sm:$0xf]
        %v204 = vld [vmem:[%s196 + $0x14] sm:$0xf]
        %v205 = vld [vmem:[%s196 + $0x18] sm:$0xf]
        %v206 = vld [vmem:[%s196 + $0x1c] sm:$0xf]
        %v207 = vld [vmem:[%s196 + $0x20] sm:$0xf]
        %v208 = vld [vmem:[%s196 + $0x24] sm:$0xf]
        %v209 = vld [vmem:[%s196 + $0x28] sm:$0xf]
        %v210 = vld [vmem:[%s196 + $0x2c] sm:$0xf]
        %v211 = vld [vmem:[%s196 + $0x30] sm:$0xf]
        %v212 = vld [vmem:[%s196 + $0x34] sm:$0xf]
        %v213 = vld [vmem:[%s196 + $0x38] sm:$0xf]
        %v214 = vld [vmem:[%s196 + $0x3c] sm:$0xf]
        %v215 = vld [vmem:[%s196 + $0x40] sm:$0xf]
        %v216 = vld [vmem:[%s196 + $0x44] sm:$0xf]
        %v217 = vld [vmem:[%s196 + $0x48] sm:$0xf]
        %v218 = vld [vmem:[%s196 + $0x4c] sm:$0xf]
        %v219 = vld [vmem:[%s196 + $0x50] sm:$0xf]
        %v220 = vld [vmem:[%s196 + $0x54] sm:$0xf]
        %v221 = vld [vmem:[%s196 + $0x58] sm:$0xf]
        %v222 = vld [vmem:[%s196 + $0x5c] sm:$0xf]
        %v223 = vld [vmem:[%s196 + $0x60] sm:$0xf]
        %v224 = vld [vmem:[%s196 + $0x64] sm:$0xf]
        %v225 = vld [vmem:[%s196 + $0x68] sm:$0xf]
        %v226 = vld [vmem:[%s196 + $0x6c] sm:$0xf]
        %v227 = vld [vmem:[%s196 + $0x70] sm:$0xf]
        %v228 = vld [vmem:[%s196 + $0x74] sm:$0xf]
        %v229 = vld [vmem:[%s196 + $0x78] sm:$0xf]
        %v230 = vld [vmem:[%s196 + $0x7c] sm:$0xf]
        %v231 = vld [vmem:[%s196 + $0x80] sm:$0xf]
        %v232 = vld [vmem:[%s196 + $0x84] sm:$0xf]
        %v233 = vld [vmem:[%s196 + $0x88] sm:$0xf]
        %v234 = vld [vmem:[%s196 + $0x8c] sm:$0xf]
        %v235 = vld [vmem:[%s196 + $0x90] sm:$0xf]
        %v236 = vld [vmem:[%s196 + $0x94] sm:$0xf]
        %v237 = vld [vmem:[%s196 + $0x98] sm:$0xf]
        %v238 = vld [vmem:[%s196 + $0x9c] sm:$0xf]
        %v239 = vld [vmem:[%s196 + $0xa0] sm:$0xf]
        %v240 = vld [vmem:[%s196 + $0xa4] sm:$0xf]
        %v241 = vld [vmem:[%s196 + $0xa8] sm:$0xf]
        %v242 = vld [vmem:[%s196 + $0xac] sm:$0xf]
        %v243 = vld [vmem:[%s196 + $0xb0] sm:$0xf]
        %v244 = vld [vmem:[%s196 + $0xb4] sm:$0xf]
        %v245 = vld [vmem:[%s196 + $0xb8] sm:$0xf]
        %v246 = vld [vmem:[%s196 + $0xbc] sm:$0xf]
        %vm247 = vcmask 125952
        %248 = vst.msk [vmem:[#allocation2] sm:$0xf] %vm247, %v199
        %249 = vst.msk [vmem:[#allocation2 + $0x8] sm:$0xf] %vm247, %v200
        %250 = vst.msk [vmem:[#allocation2 + $0x10] sm:$0xf] %vm247, %v201
        %251 = vst.msk [vmem:[#allocation2 + $0x18] sm:$0xf] %vm247, %v202
        %252 = vst.msk [vmem:[#allocation2 + $0x20] sm:$0xf] %vm247, %v203
        %253 = vst.msk [vmem:[#allocation2 + $0x28] sm:$0xf] %vm247, %v204
        %254 = vst.msk [vmem:[#allocation2 + $0x30] sm:$0xf] %vm247, %v205
        %255 = vst.msk [vmem:[#allocation2 + $0x38] sm:$0xf] %vm247, %v206
        %256 = vst.msk [vmem:[#allocation2 + $0x40] sm:$0xf] %vm247, %v207
        %257 = vst.msk [vmem:[#allocation2 + $0x48] sm:$0xf] %vm247, %v208
        %258 = vst.msk [vmem:[#allocation2 + $0x50] sm:$0xf] %vm247, %v209
        %259 = vst.msk [vmem:[#allocation2 + $0x58] sm:$0xf] %vm247, %v210
        %260 = vst.msk [vmem:[#allocation2 + $0x60] sm:$0xf] %vm247, %v211
        %261 = vst.msk [vmem:[#allocation2 + $0x68] sm:$0xf] %vm247, %v212
        %262 = vst.msk [vmem:[#allocation2 + $0x70] sm:$0xf] %vm247, %v213
        %263 = vst.msk [vmem:[#allocation2 + $0x78] sm:$0xf] %vm247, %v214
        %264 = vst.msk [vmem:[#allocation2 + $0x80] sm:$0xf] %vm247, %v215
        %265 = vst.msk [vmem:[#allocation2 + $0x88] sm:$0xf] %vm247, %v216
        %266 = vst.msk [vmem:[#allocation2 + $0x90] sm:$0xf] %vm247, %v217
        %267 = vst.msk [vmem:[#allocation2 + $0x98] sm:$0xf] %vm247, %v218
        %268 = vst.msk [vmem:[#allocation2 + $0xa0] sm:$0xf] %vm247, %v219
        %269 = vst.msk [vmem:[#allocation2 + $0xa8] sm:$0xf] %vm247, %v220
        %270 = vst.msk [vmem:[#allocation2 + $0xb0] sm:$0xf] %vm247, %v221
        %271 = vst.msk [vmem:[#allocation2 + $0xb8] sm:$0xf] %vm247, %v222
        %272 = vst.msk [vmem:[#allocation2 + $0xc0] sm:$0xf] %vm247, %v223
        %273 = vst.msk [vmem:[#allocation2 + $0xc8] sm:$0xf] %vm247, %v224
        %274 = vst.msk [vmem:[#allocation2 + $0xd0] sm:$0xf] %vm247, %v225
        %275 = vst.msk [vmem:[#allocation2 + $0xd8] sm:$0xf] %vm247, %v226
        %276 = vst.msk [vmem:[#allocation2 + $0xe0] sm:$0xf] %vm247, %v227
        %277 = vst.msk [vmem:[#allocation2 + $0xe8] sm:$0xf] %vm247, %v228
        %278 = vst.msk [vmem:[#allocation2 + $0xf0] sm:$0xf] %vm247, %v229
        %279 = vst.msk [vmem:[#allocation2 + $0xf8] sm:$0xf] %vm247, %v230
        %280 = vst.msk [vmem:[#allocation2 + $0x100] sm:$0xf] %vm247, %v231
        %281 = vst.msk [vmem:[#allocation2 + $0x108] sm:$0xf] %vm247, %v232
        %282 = vst.msk [vmem:[#allocation2 + $0x110] sm:$0xf] %vm247, %v233
        %283 = vst.msk [vmem:[#allocation2 + $0x118] sm:$0xf] %vm247, %v234
        %284 = vst.msk [vmem:[#allocation2 + $0x120] sm:$0xf] %vm247, %v235
        %285 = vst.msk [vmem:[#allocation2 + $0x128] sm:$0xf] %vm247, %v236
        %286 = vst.msk [vmem:[#allocation2 + $0x130] sm:$0xf] %vm247, %v237
        %287 = vst.msk [vmem:[#allocation2 + $0x138] sm:$0xf] %vm247, %v238
        %288 = vst.msk [vmem:[#allocation2 + $0x140] sm:$0xf] %vm247, %v239
        %289 = vst.msk [vmem:[#allocation2 + $0x148] sm:$0xf] %vm247, %v240
        %290 = vst.msk [vmem:[#allocation2 + $0x150] sm:$0xf] %vm247, %v241
        %291 = vst.msk [vmem:[#allocation2 + $0x158] sm:$0xf] %vm247, %v242
        %292 = vst.msk [vmem:[#allocation2 + $0x160] sm:$0xf] %vm247, %v243
        %293 = vst.msk [vmem:[#allocation2 + $0x168] sm:$0xf] %vm247, %v244
        %294 = vst.msk [vmem:[#allocation2 + $0x170] sm:$0xf] %vm247, %v245
        %295 = vst.msk [vmem:[#allocation2 + $0x178] sm:$0xf] %vm247, %v246
        %v296 = vld [vmem:[%s196] sm:$0xf]
        %v297 = vld [vmem:[%s196 + $0x4] sm:$0xf]
        %v298 = vld [vmem:[%s196 + $0x8] sm:$0xf]
        %v299 = vld [vmem:[%s196 + $0xc] sm:$0xf]
        %v300 = vld [vmem:[%s196 + $0x10] sm:$0xf]
        %v301 = vld [vmem:[%s196 + $0x14] sm:$0xf]
        %v302 = vld [vmem:[%s196 + $0x18] sm:$0xf]
        %v303 = vld [vmem:[%s196 + $0x1c] sm:$0xf]
        %v304 = vld [vmem:[%s196 + $0x20] sm:$0xf]
        %v305 = vld [vmem:[%s196 + $0x24] sm:$0xf]
        %v306 = vld [vmem:[%s196 + $0x28] sm:$0xf]
        %v307 = vld [vmem:[%s196 + $0x2c] sm:$0xf]
        %v308 = vld [vmem:[%s196 + $0x30] sm:$0xf]
        %v309 = vld [vmem:[%s196 + $0x34] sm:$0xf]
        %v310 = vld [vmem:[%s196 + $0x38] sm:$0xf]
        %v311 = vld [vmem:[%s196 + $0x3c] sm:$0xf]
        %v312 = vld [vmem:[%s196 + $0x40] sm:$0xf]
        %v313 = vld [vmem:[%s196 + $0x44] sm:$0xf]
        %v314 = vld [vmem:[%s196 + $0x48] sm:$0xf]
        %v315 = vld [vmem:[%s196 + $0x4c] sm:$0xf]
        %v316 = vld [vmem:[%s196 + $0x50] sm:$0xf]
        %v317 = vld [vmem:[%s196 + $0x54] sm:$0xf]
        %v318 = vld [vmem:[%s196 + $0x58] sm:$0xf]
        %v319 = vld [vmem:[%s196 + $0x5c] sm:$0xf]
        %v320 = vld [vmem:[%s196 + $0x60] sm:$0xf]
        %v321 = vld [vmem:[%s196 + $0x64] sm:$0xf]
        %v322 = vld [vmem:[%s196 + $0x68] sm:$0xf]
        %v323 = vld [vmem:[%s196 + $0x6c] sm:$0xf]
        %v324 = vld [vmem:[%s196 + $0x70] sm:$0xf]
        %v325 = vld [vmem:[%s196 + $0x74] sm:$0xf]
        %v326 = vld [vmem:[%s196 + $0x78] sm:$0xf]
        %v327 = vld [vmem:[%s196 + $0x7c] sm:$0xf]
        %v328 = vld [vmem:[%s196 + $0x80] sm:$0xf]
        %v329 = vld [vmem:[%s196 + $0x84] sm:$0xf]
        %v330 = vld [vmem:[%s196 + $0x88] sm:$0xf]
        %v331 = vld [vmem:[%s196 + $0x8c] sm:$0xf]
        %v332 = vld [vmem:[%s196 + $0x90] sm:$0xf]
        %v333 = vld [vmem:[%s196 + $0x94] sm:$0xf]
        %v334 = vld [vmem:[%s196 + $0x98] sm:$0xf]
        %v335 = vld [vmem:[%s196 + $0x9c] sm:$0xf]
        %v336 = vld [vmem:[%s196 + $0xa0] sm:$0xf]
        %v337 = vld [vmem:[%s196 + $0xa4] sm:$0xf]
        %v338 = vld [vmem:[%s196 + $0xa8] sm:$0xf]
        %v339 = vld [vmem:[%s196 + $0xac] sm:$0xf]
        %v340 = vld [vmem:[%s196 + $0xb0] sm:$0xf]
        %v341 = vld [vmem:[%s196 + $0xb4] sm:$0xf]
        %v342 = vld [vmem:[%s196 + $0xb8] sm:$0xf]
        %v343 = vld [vmem:[%s196 + $0xbc] sm:$0xf]
        %v344 = vld [vmem:[%s196 + $0xc0] sm:$0x1]
        %vm345 = vsmask.f32 3328
        %vm346 = vsmask.f32 7440
        %vm347 = vmor %vm345, %vm346
        %v349 = vshrl.u32 %v296, 16
        %v351 = vrot.slane %v349, 4
        %v352 = vshll.u32 %v296, 16
        %v354 = vrot.slane %v352, 5
        %v355 = vor.u32 %v351, %v354
        %v356 = vrot.slane %v355, 4
        %v358 = vshll.u32 %v297, 16
        %v360 = vrot.slane %v358, 5
        %v361 = vsel %vm347, %v356, %v360
        %v362 = vshrl.u32 %v297, 16
        %v364 = vrot.slane %v362, 4
        %v365 = vor.u32 %v364, %v360
        %v366 = vrot.slane %v365, 4
        %v368 = vshll.u32 %v298, 16
        %v370 = vrot.slane %v368, 5
        %v371 = vsel %vm347, %v366, %v370
        %v372 = vshrl.u32 %v298, 16
        %v374 = vrot.slane %v372, 4
        %v375 = vor.u32 %v374, %v370
        %v376 = vrot.slane %v375, 4
        %v378 = vshll.u32 %v299, 16
        %v380 = vrot.slane %v378, 5
        %v381 = vsel %vm347, %v376, %v380
        %v382 = vshrl.u32 %v299, 16
        %v384 = vrot.slane %v382, 4
        %v385 = vor.u32 %v384, %v380
        %v386 = vrot.slane %v385, 4
        %v388 = vshll.u32 %v300, 16
        %v390 = vrot.slane %v388, 5
        %v391 = vsel %vm347, %v386, %v390
        %v392 = vshrl.u32 %v300, 16
        %v394 = vrot.slane %v392, 4
        %v395 = vor.u32 %v394, %v390
        %v396 = vrot.slane %v395, 4
        %v398 = vshll.u32 %v301, 16
        %v400 = vrot.slane %v398, 5
        %v401 = vsel %vm347, %v396, %v400
        %v402 = vshrl.u32 %v301, 16
        %v404 = vrot.slane %v402, 4
        %v405 = vor.u32 %v404, %v400
        %v406 = vrot.slane %v405, 4
        %v408 = vshll.u32 %v302, 16
        %v410 = vrot.slane %v408, 5
        %v411 = vsel %vm347, %v406, %v410
        %v412 = vshrl.u32 %v302, 16
        %v414 = vrot.slane %v412, 4
        %v415 = vor.u32 %v414, %v410
        %v416 = vrot.slane %v415, 4
        %v418 = vshll.u32 %v303, 16
        %v420 = vrot.slane %v418, 5
        %v421 = vsel %vm347, %v416, %v420
        %v422 = vshrl.u32 %v303, 16
        %v424 = vrot.slane %v422, 4
        %v425 = vor.u32 %v424, %v420
        %v426 = vrot.slane %v425, 4
        %v428 = vshll.u32 %v304, 16
        %v430 = vrot.slane %v428, 5
        %v431 = vsel %vm347, %v426, %v430
        %v432 = vshrl.u32 %v304, 16
        %v434 = vrot.slane %v432, 4
        %v435 = vor.u32 %v434, %v430
        %v436 = vrot.slane %v435, 4
        %v438 = vshll.u32 %v305, 16
        %v440 = vrot.slane %v438, 5
        %v441 = vsel %vm347, %v436, %v440
        %v442 = vshrl.u32 %v305, 16
        %v444 = vrot.slane %v442, 4
        %v445 = vor.u32 %v444, %v440
        %v446 = vrot.slane %v445, 4
        %v448 = vshll.u32 %v306, 16
        %v450 = vrot.slane %v448, 5
        %v451 = vsel %vm347, %v446, %v450
        %v452 = vshrl.u32 %v306, 16
        %v454 = vrot.slane %v452, 4
        %v455 = vor.u32 %v454, %v450
        %v456 = vrot.slane %v455, 4
        %v458 = vshll.u32 %v307, 16
        %v460 = vrot.slane %v458, 5
        %v461 = vsel %vm347, %v456, %v460
        %v462 = vshrl.u32 %v307, 16
        %v464 = vrot.slane %v462, 4
        %v465 = vor.u32 %v464, %v460
        %v466 = vrot.slane %v465, 4
        %v468 = vshll.u32 %v308, 16
        %v470 = vrot.slane %v468, 5
        %v471 = vsel %vm347, %v466, %v470
        %v472 = vshrl.u32 %v308, 16
        %v474 = vrot.slane %v472, 4
        %v475 = vor.u32 %v474, %v470
        %v476 = vrot.slane %v475, 4
        %v478 = vshll.u32 %v309, 16
        %v480 = vrot.slane %v478, 5
        %v481 = vsel %vm347, %v476, %v480
        %v482 = vshrl.u32 %v309, 16
        %v484 = vrot.slane %v482, 4
        %v485 = vor.u32 %v484, %v480
        %v486 = vrot.slane %v485, 4
        %v488 = vshll.u32 %v310, 16
        %v490 = vrot.slane %v488, 5
        %v491 = vsel %vm347, %v486, %v490
        %v492 = vshrl.u32 %v310, 16
        %v494 = vrot.slane %v492, 4
        %v495 = vor.u32 %v494, %v490
        %v496 = vrot.slane %v495, 4
        %v498 = vshll.u32 %v311, 16
        %v500 = vrot.slane %v498, 5
        %v501 = vsel %vm347, %v496, %v500
        %v502 = vshrl.u32 %v311, 16
        %v504 = vrot.slane %v502, 4
        %v505 = vor.u32 %v504, %v500
        %v506 = vrot.slane %v505, 4
        %v508 = vshll.u32 %v312, 16
        %v510 = vrot.slane %v508, 5
        %v511 = vsel %vm347, %v506, %v510
        %v512 = vshrl.u32 %v312, 16
        %v514 = vrot.slane %v512, 4
        %v515 = vor.u32 %v514, %v510
        %v516 = vrot.slane %v515, 4
        %v518 = vshll.u32 %v313, 16
        %v520 = vrot.slane %v518, 5
        %v521 = vsel %vm347, %v516, %v520
        %v522 = vshrl.u32 %v313, 16
        %v524 = vrot.slane %v522, 4
        %v525 = vor.u32 %v524, %v520
        %v526 = vrot.slane %v525, 4
        %v528 = vshll.u32 %v314, 16
        %v530 = vrot.slane %v528, 5
        %v531 = vsel %vm347, %v526, %v530
        %v532 = vshrl.u32 %v314, 16
        %v534 = vrot.slane %v532, 4
        %v535 = vor.u32 %v534, %v530
        %v536 = vrot.slane %v535, 4
        %v538 = vshll.u32 %v315, 16
        %v540 = vrot.slane %v538, 5
        %v541 = vsel %vm347, %v536, %v540
        %v542 = vshrl.u32 %v315, 16
        %v544 = vrot.slane %v542, 4
        %v545 = vor.u32 %v544, %v540
        %v546 = vrot.slane %v545, 4
        %v548 = vshll.u32 %v316, 16
        %v550 = vrot.slane %v548, 5
        %v551 = vsel %vm347, %v546, %v550
        %v552 = vshrl.u32 %v316, 16
        %v554 = vrot.slane %v552, 4
        %v555 = vor.u32 %v554, %v550
        %v556 = vrot.slane %v555, 4
        %v558 = vshll.u32 %v317, 16
        %v560 = vrot.slane %v558, 5
        %v561 = vsel %vm347, %v556, %v560
        %v562 = vshrl.u32 %v317, 16
        %v564 = vrot.slane %v562, 4
        %v565 = vor.u32 %v564, %v560
        %v566 = vrot.slane %v565, 4
        %v568 = vshll.u32 %v318, 16
        %v570 = vrot.slane %v568, 5
        %v571 = vsel %vm347, %v566, %v570
        %v572 = vshrl.u32 %v318, 16
        %v574 = vrot.slane %v572, 4
        %v575 = vor.u32 %v574, %v570
        %v576 = vrot.slane %v575, 4
        %v578 = vshll.u32 %v319, 16
        %v580 = vrot.slane %v578, 5
        %v581 = vsel %vm347, %v576, %v580
        %v582 = vshrl.u32 %v319, 16
        %v584 = vrot.slane %v582, 4
        %v585 = vor.u32 %v584, %v580
        %v586 = vrot.slane %v585, 4
        %v588 = vshll.u32 %v320, 16
        %v590 = vrot.slane %v588, 5
        %v591 = vsel %vm347, %v586, %v590
        %v592 = vshrl.u32 %v320, 16
        %v594 = vrot.slane %v592, 4
        %v595 = vor.u32 %v594, %v590
        %v596 = vrot.slane %v595, 4
        %v598 = vshll.u32 %v321, 16
        %v600 = vrot.slane %v598, 5
        %v601 = vsel %vm347, %v596, %v600
        %v602 = vshrl.u32 %v321, 16
        %v604 = vrot.slane %v602, 4
        %v605 = vor.u32 %v604, %v600
        %v606 = vrot.slane %v605, 4
        %v608 = vshll.u32 %v322, 16
        %v610 = vrot.slane %v608, 5
        %v611 = vsel %vm347, %v606, %v610
        %v612 = vshrl.u32 %v322, 16
        %v614 = vrot.slane %v612, 4
        %v615 = vor.u32 %v614, %v610
        %v616 = vrot.slane %v615, 4
        %v618 = vshll.u32 %v323, 16
        %v620 = vrot.slane %v618, 5
        %v621 = vsel %vm347, %v616, %v620
        %v622 = vshrl.u32 %v323, 16
        %v624 = vrot.slane %v622, 4
        %v625 = vor.u32 %v624, %v620
        %v626 = vrot.slane %v625, 4
        %v628 = vshll.u32 %v324, 16
        %v630 = vrot.slane %v628, 5
        %v631 = vsel %vm347, %v626, %v630
        %v632 = vshrl.u32 %v324, 16
        %v634 = vrot.slane %v632, 4
        %v635 = vor.u32 %v634, %v630
        %v636 = vrot.slane %v635, 4
        %v638 = vshll.u32 %v325, 16
        %v640 = vrot.slane %v638, 5
        %v641 = vsel %vm347, %v636, %v640
        %v642 = vshrl.u32 %v325, 16
        %v644 = vrot.slane %v642, 4
        %v645 = vor.u32 %v644, %v640
        %v646 = vrot.slane %v645, 4
        %v648 = vshll.u32 %v326, 16
        %v650 = vrot.slane %v648, 5
        %v651 = vsel %vm347, %v646, %v650
        %v652 = vshrl.u32 %v326, 16
        %v654 = vrot.slane %v652, 4
        %v655 = vor.u32 %v654, %v650
        %v656 = vrot.slane %v655, 4
        %v658 = vshll.u32 %v327, 16
        %v660 = vrot.slane %v658, 5
        %v661 = vsel %vm347, %v656, %v660
        %v662 = vshrl.u32 %v327, 16
        %v664 = vrot.slane %v662, 4
        %v665 = vor.u32 %v664, %v660
        %v666 = vrot.slane %v665, 4
        %v668 = vshll.u32 %v328, 16
        %v670 = vrot.slane %v668, 5
        %v671 = vsel %vm347, %v666, %v670
        %v672 = vshrl.u32 %v328, 16
        %v674 = vrot.slane %v672, 4
        %v675 = vor.u32 %v674, %v670
        %v676 = vrot.slane %v675, 4
        %v678 = vshll.u32 %v329, 16
        %v680 = vrot.slane %v678, 5
        %v681 = vsel %vm347, %v676, %v680
        %v682 = vshrl.u32 %v329, 16
        %v684 = vrot.slane %v682, 4
        %v685 = vor.u32 %v684, %v680
        %v686 = vrot.slane %v685, 4
        %v688 = vshll.u32 %v330, 16
        %v690 = vrot.slane %v688, 5
        %v691 = vsel %vm347, %v686, %v690
        %v692 = vshrl.u32 %v330, 16
        %v694 = vrot.slane %v692, 4
        %v695 = vor.u32 %v694, %v690
        %v696 = vrot.slane %v695, 4
        %v698 = vshll.u32 %v331, 16
        %v700 = vrot.slane %v698, 5
        %v701 = vsel %vm347, %v696, %v700
        %v702 = vshrl.u32 %v331, 16
        %v704 = vrot.slane %v702, 4
        %v705 = vor.u32 %v704, %v700
        %v706 = vrot.slane %v705, 4
        %v708 = vshll.u32 %v332, 16
        %v710 = vrot.slane %v708, 5
        %v711 = vsel %vm347, %v706, %v710
        %v712 = vshrl.u32 %v332, 16
        %v714 = vrot.slane %v712, 4
        %v715 = vor.u32 %v714, %v710
        %v716 = vrot.slane %v715, 4
        %v718 = vshll.u32 %v333, 16
        %v720 = vrot.slane %v718, 5
        %v721 = vsel %vm347, %v716, %v720
        %v722 = vshrl.u32 %v333, 16
        %v724 = vrot.slane %v722, 4
        %v725 = vor.u32 %v724, %v720
        %v726 = vrot.slane %v725, 4
        %v728 = vshll.u32 %v334, 16
        %v730 = vrot.slane %v728, 5
        %v731 = vsel %vm347, %v726, %v730
        %v732 = vshrl.u32 %v334, 16
        %v734 = vrot.slane %v732, 4
        %v735 = vor.u32 %v734, %v730
        %v736 = vrot.slane %v735, 4
        %v738 = vshll.u32 %v335, 16
        %v740 = vrot.slane %v738, 5
        %v741 = vsel %vm347, %v736, %v740
        %v742 = vshrl.u32 %v335, 16
        %v744 = vrot.slane %v742, 4
        %v745 = vor.u32 %v744, %v740
        %v746 = vrot.slane %v745, 4
        %v748 = vshll.u32 %v336, 16
        %v750 = vrot.slane %v748, 5
        %v751 = vsel %vm347, %v746, %v750
        %v752 = vshrl.u32 %v336, 16
        %v754 = vrot.slane %v752, 4
        %v755 = vor.u32 %v754, %v750
        %v756 = vrot.slane %v755, 4
        %v758 = vshll.u32 %v337, 16
        %v760 = vrot.slane %v758, 5
        %v761 = vsel %vm347, %v756, %v760
        %v762 = vshrl.u32 %v337, 16
        %v764 = vrot.slane %v762, 4
        %v765 = vor.u32 %v764, %v760
        %v766 = vrot.slane %v765, 4
        %v768 = vshll.u32 %v338, 16
        %v770 = vrot.slane %v768, 5
        %v771 = vsel %vm347, %v766, %v770
        %v772 = vshrl.u32 %v338, 16
        %v774 = vrot.slane %v772, 4
        %v775 = vor.u32 %v774, %v770
        %v776 = vrot.slane %v775, 4
        %v778 = vshll.u32 %v339, 16
        %v780 = vrot.slane %v778, 5
        %v781 = vsel %vm347, %v776, %v780
        %v782 = vshrl.u32 %v339, 16
        %v784 = vrot.slane %v782, 4
        %v785 = vor.u32 %v784, %v780
        %v786 = vrot.slane %v785, 4
        %v788 = vshll.u32 %v340, 16
        %v790 = vrot.slane %v788, 5
        %v791 = vsel %vm347, %v786, %v790
        %v792 = vshrl.u32 %v340, 16
        %v794 = vrot.slane %v792, 4
        %v795 = vor.u32 %v794, %v790
        %v796 = vrot.slane %v795, 4
        %v798 = vshll.u32 %v341, 16
        %v800 = vrot.slane %v798, 5
        %v801 = vsel %vm347, %v796, %v800
        %v802 = vshrl.u32 %v341, 16
        %v804 = vrot.slane %v802, 4
        %v805 = vor.u32 %v804, %v800
        %v806 = vrot.slane %v805, 4
        %v808 = vshll.u32 %v342, 16
        %v810 = vrot.slane %v808, 5
        %v811 = vsel %vm347, %v806, %v810
        %v812 = vshrl.u32 %v342, 16
        %v814 = vrot.slane %v812, 4
        %v815 = vor.u32 %v814, %v810
        %v816 = vrot.slane %v815, 4
        %v818 = vshll.u32 %v343, 16
        %v820 = vrot.slane %v818, 5
        %v821 = vsel %vm347, %v816, %v820
        %v822 = vshrl.u32 %v343, 16
        %v824 = vrot.slane %v822, 4
        %v825 = vor.u32 %v824, %v820
        %v826 = vrot.slane %v825, 4
        %v828 = vshll.u32 %v344, 16
        %v830 = vrot.slane %v828, 5
        %v831 = vsel %vm347, %v826, %v830
        %832 = vrot.lane.b32.xlu0 %v361, 16
        %v833 = vpop.permute.xlu0 %832
        %834 = vrot.lane.b32.xlu0 %v371, 16
        %v835 = vpop.permute.xlu0 %834
        %836 = vrot.lane.b32.xlu0 %v381, 16
        %v837 = vpop.permute.xlu0 %836
        %838 = vrot.lane.b32.xlu0 %v391, 16
        %v839 = vpop.permute.xlu0 %838
        %840 = vrot.lane.b32.xlu0 %v401, 16
        %v841 = vpop.permute.xlu0 %840
        %842 = vrot.lane.b32.xlu0 %v411, 16
        %v843 = vpop.permute.xlu0 %842
        %844 = vrot.lane.b32.xlu0 %v421, 16
        %v845 = vpop.permute.xlu0 %844
        %846 = vrot.lane.b32.xlu0 %v431, 16
        %v847 = vpop.permute.xlu0 %846
        %848 = vrot.lane.b32.xlu0 %v441, 16
        %v849 = vpop.permute.xlu0 %848
        %850 = vrot.lane.b32.xlu0 %v451, 16
        %v851 = vpop.permute.xlu0 %850
        %852 = vrot.lane.b32.xlu0 %v461, 16
        %v853 = vpop.permute.xlu0 %852
        %854 = vrot.lane.b32.xlu0 %v471, 16
        %v855 = vpop.permute.xlu0 %854
        %856 = vrot.lane.b32.xlu0 %v481, 16
        %v857 = vpop.permute.xlu0 %856
        %858 = vrot.lane.b32.xlu0 %v491, 16
        %v859 = vpop.permute.xlu0 %858
        %860 = vrot.lane.b32.xlu0 %v501, 16
        %v861 = vpop.permute.xlu0 %860
        %862 = vrot.lane.b32.xlu0 %v511, 16
        %v863 = vpop.permute.xlu0 %862
        %864 = vrot.lane.b32.xlu0 %v521, 16
        %v865 = vpop.permute.xlu0 %864
        %866 = vrot.lane.b32.xlu0 %v531, 16
        %v867 = vpop.permute.xlu0 %866
        %868 = vrot.lane.b32.xlu0 %v541, 16
        %v869 = vpop.permute.xlu0 %868
        %870 = vrot.lane.b32.xlu0 %v551, 16
        %v871 = vpop.permute.xlu0 %870
        %872 = vrot.lane.b32.xlu0 %v561, 16
        %v873 = vpop.permute.xlu0 %872
        %874 = vrot.lane.b32.xlu0 %v571, 16
        %v875 = vpop.permute.xlu0 %874
        %876 = vrot.lane.b32.xlu0 %v581, 16
        %v877 = vpop.permute.xlu0 %876
        %878 = vrot.lane.b32.xlu0 %v591, 16
        %v879 = vpop.permute.xlu0 %878
        %880 = vrot.lane.b32.xlu0 %v601, 16
        %v881 = vpop.permute.xlu0 %880
        %882 = vrot.lane.b32.xlu0 %v611, 16
        %v883 = vpop.permute.xlu0 %882
        %884 = vrot.lane.b32.xlu0 %v621, 16
        %v885 = vpop.permute.xlu0 %884
        %886 = vrot.lane.b32.xlu0 %v631, 16
        %v887 = vpop.permute.xlu0 %886
        %888 = vrot.lane.b32.xlu0 %v641, 16
        %v889 = vpop.permute.xlu0 %888
        %890 = vrot.lane.b32.xlu0 %v651, 16
        %v891 = vpop.permute.xlu0 %890
        %892 = vrot.lane.b32.xlu0 %v661, 16
        %v893 = vpop.permute.xlu0 %892
        %894 = vrot.lane.b32.xlu0 %v671, 16
        %v895 = vpop.permute.xlu0 %894
        %896 = vrot.lane.b32.xlu0 %v681, 16
        %v897 = vpop.permute.xlu0 %896
        %898 = vrot.lane.b32.xlu0 %v691, 16
        %v899 = vpop.permute.xlu0 %898
        %900 = vrot.lane.b32.xlu0 %v701, 16
        %v901 = vpop.permute.xlu0 %900
        %902 = vrot.lane.b32.xlu0 %v711, 16
        %v903 = vpop.permute.xlu0 %902
        %904 = vrot.lane.b32.xlu0 %v721, 16
        %v905 = vpop.permute.xlu0 %904
        %906 = vrot.lane.b32.xlu0 %v731, 16
        %v907 = vpop.permute.xlu0 %906
        %908 = vrot.lane.b32.xlu0 %v741, 16
        %v909 = vpop.permute.xlu0 %908
        %910 = vrot.lane.b32.xlu0 %v751, 16
        %v911 = vpop.permute.xlu0 %910
        %912 = vrot.lane.b32.xlu0 %v761, 16
        %v913 = vpop.permute.xlu0 %912
        %914 = vrot.lane.b32.xlu0 %v771, 16
        %v915 = vpop.permute.xlu0 %914
        %916 = vrot.lane.b32.xlu0 %v781, 16
        %v917 = vpop.permute.xlu0 %916
        %918 = vrot.lane.b32.xlu0 %v791, 16
        %v919 = vpop.permute.xlu0 %918
        %920 = vrot.lane.b32.xlu0 %v801, 16
        %v921 = vpop.permute.xlu0 %920
        %922 = vrot.lane.b32.xlu0 %v811, 16
        %v923 = vpop.permute.xlu0 %922
        %924 = vrot.lane.b32.xlu0 %v821, 16
        %v925 = vpop.permute.xlu0 %924
        %926 = vrot.lane.b32.xlu0 %v831, 16
        %v927 = vpop.permute.xlu0 %926
        %vm976 = vcmask 257152
        %977 = vst.msk [vmem:[#allocation2] sm:$0xf] %vm976, %v833
        %978 = vst.msk [vmem:[#allocation2 + $0x8] sm:$0xf] %vm976, %v835
        %979 = vst.msk [vmem:[#allocation2 + $0x10] sm:$0xf] %vm976, %v837
        %980 = vst.msk [vmem:[#allocation2 + $0x18] sm:$0xf] %vm976, %v839
        %981 = vst.msk [vmem:[#allocation2 + $0x20] sm:$0xf] %vm976, %v841
        %982 = vst.msk [vmem:[#allocation2 + $0x28] sm:$0xf] %vm976, %v843
        %983 = vst.msk [vmem:[#allocation2 + $0x30] sm:$0xf] %vm976, %v845
        %984 = vst.msk [vmem:[#allocation2 + $0x38] sm:$0xf] %vm976, %v847
        %985 = vst.msk [vmem:[#allocation2 + $0x40] sm:$0xf] %vm976, %v849
        %986 = vst.msk [vmem:[#allocation2 + $0x48] sm:$0xf] %vm976, %v851
        %987 = vst.msk [vmem:[#allocation2 + $0x50] sm:$0xf] %vm976, %v853
        %988 = vst.msk [vmem:[#allocation2 + $0x58] sm:$0xf] %vm976, %v855
        %989 = vst.msk [vmem:[#allocation2 + $0x60] sm:$0xf] %vm976, %v857
        %990 = vst.msk [vmem:[#allocation2 + $0x68] sm:$0xf] %vm976, %v859
        %991 = vst.msk [vmem:[#allocation2 + $0x70] sm:$0xf] %vm976, %v861
        %992 = vst.msk [vmem:[#allocation2 + $0x78] sm:$0xf] %vm976, %v863
        %993 = vst.msk [vmem:[#allocation2 + $0x80] sm:$0xf] %vm976, %v865
        %994 = vst.msk [vmem:[#allocation2 + $0x88] sm:$0xf] %vm976, %v867
        %995 = vst.msk [vmem:[#allocation2 + $0x90] sm:$0xf] %vm976, %v869
        %996 = vst.msk [vmem:[#allocation2 + $0x98] sm:$0xf] %vm976, %v871
        %997 = vst.msk [vmem:[#allocation2 + $0xa0] sm:$0xf] %vm976, %v873
        %998 = vst.msk [vmem:[#allocation2 + $0xa8] sm:$0xf] %vm976, %v875
        %999 = vst.msk [vmem:[#allocation2 + $0xb0] sm:$0xf] %vm976, %v877
        %1000 = vst.msk [vmem:[#allocation2 + $0xb8] sm:$0xf] %vm976, %v879
        %1001 = vst.msk [vmem:[#allocation2 + $0xc0] sm:$0xf] %vm976, %v881
        %1002 = vst.msk [vmem:[#allocation2 + $0xc8] sm:$0xf] %vm976, %v883
        %1003 = vst.msk [vmem:[#allocation2 + $0xd0] sm:$0xf] %vm976, %v885
        %1004 = vst.msk [vmem:[#allocation2 + $0xd8] sm:$0xf] %vm976, %v887
        %1005 = vst.msk [vmem:[#allocation2 + $0xe0] sm:$0xf] %vm976, %v889
        %1006 = vst.msk [vmem:[#allocation2 + $0xe8] sm:$0xf] %vm976, %v891
        %1007 = vst.msk [vmem:[#allocation2 + $0xf0] sm:$0xf] %vm976, %v893
        %1008 = vst.msk [vmem:[#allocation2 + $0xf8] sm:$0xf] %vm976, %v895
        %1009 = vst.msk [vmem:[#allocation2 + $0x100] sm:$0xf] %vm976, %v897
        %1010 = vst.msk [vmem:[#allocation2 + $0x108] sm:$0xf] %vm976, %v899
        %1011 = vst.msk [vmem:[#allocation2 + $0x110] sm:$0xf] %vm976, %v901
        %1012 = vst.msk [vmem:[#allocation2 + $0x118] sm:$0xf] %vm976, %v903
        %1013 = vst.msk [vmem:[#allocation2 + $0x120] sm:$0xf] %vm976, %v905
        %1014 = vst.msk [vmem:[#allocation2 + $0x128] sm:$0xf] %vm976, %v907
        %1015 = vst.msk [vmem:[#allocation2 + $0x130] sm:$0xf] %vm976, %v909
        %1016 = vst.msk [vmem:[#allocation2 + $0x138] sm:$0xf] %vm976, %v911
        %1017 = vst.msk [vmem:[#allocation2 + $0x140] sm:$0xf] %vm976, %v913
        %1018 = vst.msk [vmem:[#allocation2 + $0x148] sm:$0xf] %vm976, %v915
        %1019 = vst.msk [vmem:[#allocation2 + $0x150] sm:$0xf] %vm976, %v917
        %1020 = vst.msk [vmem:[#allocation2 + $0x158] sm:$0xf] %vm976, %v919
        %1021 = vst.msk [vmem:[#allocation2 + $0x160] sm:$0xf] %vm976, %v921
        %1022 = vst.msk [vmem:[#allocation2 + $0x168] sm:$0xf] %vm976, %v923
        %1023 = vst.msk [vmem:[#allocation2 + $0x170] sm:$0xf] %vm976, %v925
        %1024 = vst.msk [vmem:[#allocation2 + $0x178] sm:$0xf] %vm976, %v927
        %v1025 = vld [vmem:[%s196] sm:$0xe]
        %v1026 = vld [vmem:[%s196 + $0x4] sm:$0xf]
        %v1027 = vld [vmem:[%s196 + $0x8] sm:$0xf]
        %v1028 = vld [vmem:[%s196 + $0xc] sm:$0xf]
        %v1029 = vld [vmem:[%s196 + $0x10] sm:$0xf]
        %v1030 = vld [vmem:[%s196 + $0x14] sm:$0xf]
        %v1031 = vld [vmem:[%s196 + $0x18] sm:$0xf]
        %v1032 = vld [vmem:[%s196 + $0x1c] sm:$0xf]
        %v1033 = vld [vmem:[%s196 + $0x20] sm:$0xf]
        %v1034 = vld [vmem:[%s196 + $0x24] sm:$0xf]
        %v1035 = vld [vmem:[%s196 + $0x28] sm:$0xf]
        %v1036 = vld [vmem:[%s196 + $0x2c] sm:$0xf]
        %v1037 = vld [vmem:[%s196 + $0x30] sm:$0xf]
        %v1038 = vld [vmem:[%s196 + $0x34] sm:$0xf]
        %v1039 = vld [vmem:[%s196 + $0x38] sm:$0xf]
        %v1040 = vld [vmem:[%s196 + $0x3c] sm:$0xf]
        %v1041 = vld [vmem:[%s196 + $0x40] sm:$0xf]
        %v1042 = vld [vmem:[%s196 + $0x44] sm:$0xf]
        %v1043 = vld [vmem:[%s196 + $0x48] sm:$0xf]
        %v1044 = vld [vmem:[%s196 + $0x4c] sm:$0xf]
        %v1045 = vld [vmem:[%s196 + $0x50] sm:$0xf]
        %v1046 = vld [vmem:[%s196 + $0x54] sm:$0xf]
        %v1047 = vld [vmem:[%s196 + $0x58] sm:$0xf]
        %v1048 = vld [vmem:[%s196 + $0x5c] sm:$0xf]
        %v1049 = vld [vmem:[%s196 + $0x60] sm:$0xf]
        %v1050 = vld [vmem:[%s196 + $0x64] sm:$0xf]
        %v1051 = vld [vmem:[%s196 + $0x68] sm:$0xf]
        %v1052 = vld [vmem:[%s196 + $0x6c] sm:$0xf]
        %v1053 = vld [vmem:[%s196 + $0x70] sm:$0xf]
        %v1054 = vld [vmem:[%s196 + $0x74] sm:$0xf]
        %v1055 = vld [vmem:[%s196 + $0x78] sm:$0xf]
        %v1056 = vld [vmem:[%s196 + $0x7c] sm:$0xf]
        %v1057 = vld [vmem:[%s196 + $0x80] sm:$0xf]
        %v1058 = vld [vmem:[%s196 + $0x84] sm:$0xf]
        %v1059 = vld [vmem:[%s196 + $0x88] sm:$0xf]
        %v1060 = vld [vmem:[%s196 + $0x8c] sm:$0xf]
        %v1061 = vld [vmem:[%s196 + $0x90] sm:$0xf]
        %v1062 = vld [vmem:[%s196 + $0x94] sm:$0xf]
        %v1063 = vld [vmem:[%s196 + $0x98] sm:$0xf]
        %v1064 = vld [vmem:[%s196 + $0x9c] sm:$0xf]
        %v1065 = vld [vmem:[%s196 + $0xa0] sm:$0xf]
        %v1066 = vld [vmem:[%s196 + $0xa4] sm:$0xf]
        %v1067 = vld [vmem:[%s196 + $0xa8] sm:$0xf]
        %v1068 = vld [vmem:[%s196 + $0xac] sm:$0xf]
        %v1069 = vld [vmem:[%s196 + $0xb0] sm:$0xf]
        %v1070 = vld [vmem:[%s196 + $0xb4] sm:$0xf]
        %v1071 = vld [vmem:[%s196 + $0xb8] sm:$0xf]
        %v1072 = vld [vmem:[%s196 + $0xbc] sm:$0xf]
        %v1073 = vld [vmem:[%s196 + $0xc0] sm:$0x1]
        %vm1123 = vcmask 1042432
        %vm1124 = vcmask 1046532
        %vm1125 = vmor %vm1123, %vm1124
        %v1126 = vrot.slane %v1025, 5
        %v1127 = vrot.slane %v1126, 4
        %v1128 = vrot.slane %v1026, 5
        %v1129 = vsel %vm1125, %v1127, %v1128
        %v1130 = vrot.slane %v1128, 4
        %v1131 = vrot.slane %v1027, 5
        %v1132 = vsel %vm1125, %v1130, %v1131
        %v1133 = vrot.slane %v1131, 4
        %v1134 = vrot.slane %v1028, 5
        %v1135 = vsel %vm1125, %v1133, %v1134
        %v1136 = vrot.slane %v1134, 4
        %v1137 = vrot.slane %v1029, 5
        %v1138 = vsel %vm1125, %v1136, %v1137
        %v1139 = vrot.slane %v1137, 4
        %v1140 = vrot.slane %v1030, 5
        %v1141 = vsel %vm1125, %v1139, %v1140
        %v1142 = vrot.slane %v1140, 4
        %v1143 = vrot.slane %v1031, 5
        %v1144 = vsel %vm1125, %v1142, %v1143
        %v1145 = vrot.slane %v1143, 4
        %v1146 = vrot.slane %v1032, 5
        %v1147 = vsel %vm1125, %v1145, %v1146
        %v1148 = vrot.slane %v1146, 4
        %v1149 = vrot.slane %v1033, 5
        %v1150 = vsel %vm1125, %v1148, %v1149
        %v1151 = vrot.slane %v1149, 4
        %v1152 = vrot.slane %v1034, 5
        %v1153 = vsel %vm1125, %v1151, %v1152
        %v1154 = vrot.slane %v1152, 4
        %v1155 = vrot.slane %v1035, 5
        %v1156 = vsel %vm1125, %v1154, %v1155
        %v1157 = vrot.slane %v1155, 4
        %v1158 = vrot.slane %v1036, 5
        %v1159 = vsel %vm1125, %v1157, %v1158
        %v1160 = vrot.slane %v1158, 4
        %v1161 = vrot.slane %v1037, 5
        %v1162 = vsel %vm1125, %v1160, %v1161
        %v1163 = vrot.slane %v1161, 4
        %v1164 = vrot.slane %v1038, 5
        %v1165 = vsel %vm1125, %v1163, %v1164
        %v1166 = vrot.slane %v1164, 4
        %v1167 = vrot.slane %v1039, 5
        %v1168 = vsel %vm1125, %v1166, %v1167
        %v1169 = vrot.slane %v1167, 4
        %v1170 = vrot.slane %v1040, 5
        %v1171 = vsel %vm1125, %v1169, %v1170
        %v1172 = vrot.slane %v1170, 4
        %v1173 = vrot.slane %v1041, 5
        %v1174 = vsel %vm1125, %v1172, %v1173
        %v1175 = vrot.slane %v1173, 4
        %v1176 = vrot.slane %v1042, 5
        %v1177 = vsel %vm1125, %v1175, %v1176
        %v1178 = vrot.slane %v1176, 4
        %v1179 = vrot.slane %v1043, 5
        %v1180 = vsel %vm1125, %v1178, %v1179
        %v1181 = vrot.slane %v1179, 4
        %v1182 = vrot.slane %v1044, 5
        %v1183 = vsel %vm1125, %v1181, %v1182
        %v1184 = vrot.slane %v1182, 4
        %v1185 = vrot.slane %v1045, 5
        %v1186 = vsel %vm1125, %v1184, %v1185
        %v1187 = vrot.slane %v1185, 4
        %v1188 = vrot.slane %v1046, 5
        %v1189 = vsel %vm1125, %v1187, %v1188
        %v1190 = vrot.slane %v1188, 4
        %v1191 = vrot.slane %v1047, 5
        %v1192 = vsel %vm1125, %v1190, %v1191
        %v1193 = vrot.slane %v1191, 4
        %v1194 = vrot.slane %v1048, 5
        %v1195 = vsel %vm1125, %v1193, %v1194
        %v1196 = vrot.slane %v1194, 4
        %v1197 = vrot.slane %v1049, 5
        %v1198 = vsel %vm1125, %v1196, %v1197
        %v1199 = vrot.slane %v1197, 4
        %v1200 = vrot.slane %v1050, 5
        %v1201 = vsel %vm1125, %v1199, %v1200
        %v1202 = vrot.slane %v1200, 4
        %v1203 = vrot.slane %v1051, 5
        %v1204 = vsel %vm1125, %v1202, %v1203
        %v1205 = vrot.slane %v1203, 4
        %v1206 = vrot.slane %v1052, 5
        %v1207 = vsel %vm1125, %v1205, %v1206
        %v1208 = vrot.slane %v1206, 4
        %v1209 = vrot.slane %v1053, 5
        %v1210 = vsel %vm1125, %v1208, %v1209
        %v1211 = vrot.slane %v1209, 4
        %v1212 = vrot.slane %v1054, 5
        %v1213 = vsel %vm1125, %v1211, %v1212
        %v1214 = vrot.slane %v1212, 4
        %v1215 = vrot.slane %v1055, 5
        %v1216 = vsel %vm1125, %v1214, %v1215
        %v1217 = vrot.slane %v1215, 4
        %v1218 = vrot.slane %v1056, 5
        %v1219 = vsel %vm1125, %v1217, %v1218
        %v1220 = vrot.slane %v1218, 4
        %v1221 = vrot.slane %v1057, 5
        %v1222 = vsel %vm1125, %v1220, %v1221
        %v1223 = vrot.slane %v1221, 4
        %v1224 = vrot.slane %v1058, 5
        %v1225 = vsel %vm1125, %v1223, %v1224
        %v1226 = vrot.slane %v1224, 4
        %v1227 = vrot.slane %v1059, 5
        %v1228 = vsel %vm1125, %v1226, %v1227
        %v1229 = vrot.slane %v1227, 4
        %v1230 = vrot.slane %v1060, 5
        %v1231 = vsel %vm1125, %v1229, %v1230
        %v1232 = vrot.slane %v1230, 4
        %v1233 = vrot.slane %v1061, 5
        %v1234 = vsel %vm1125, %v1232, %v1233
        %v1235 = vrot.slane %v1233, 4
        %v1236 = vrot.slane %v1062, 5
        %v1237 = vsel %vm1125, %v1235, %v1236
        %v1238 = vrot.slane %v1236, 4
        %v1239 = vrot.slane %v1063, 5
        %v1240 = vsel %vm1125, %v1238, %v1239
        %v1241 = vrot.slane %v1239, 4
        %v1242 = vrot.slane %v1064, 5
        %v1243 = vsel %vm1125, %v1241, %v1242
        %v1244 = vrot.slane %v1242, 4
        %v1245 = vrot.slane %v1065, 5
        %v1246 = vsel %vm1125, %v1244, %v1245
        %v1247 = vrot.slane %v1245, 4
        %v1248 = vrot.slane %v1066, 5
        %v1249 = vsel %vm1125, %v1247, %v1248
        %v1250 = vrot.slane %v1248, 4
        %v1251 = vrot.slane %v1067, 5
        %v1252 = vsel %vm1125, %v1250, %v1251
        %v1253 = vrot.slane %v1251, 4
        %v1254 = vrot.slane %v1068, 5
        %v1255 = vsel %vm1125, %v1253, %v1254
        %v1256 = vrot.slane %v1254, 4
        %v1257 = vrot.slane %v1069, 5
        %v1258 = vsel %vm1125, %v1256, %v1257
        %v1259 = vrot.slane %v1257, 4
        %v1260 = vrot.slane %v1070, 5
        %v1261 = vsel %vm1125, %v1259, %v1260
        %v1262 = vrot.slane %v1260, 4
        %v1263 = vrot.slane %v1071, 5
        %v1264 = vsel %vm1125, %v1262, %v1263
        %v1265 = vrot.slane %v1263, 4
        %v1266 = vrot.slane %v1072, 5
        %v1267 = vsel %vm1125, %v1265, %v1266
        %v1268 = vrot.slane %v1266, 4
        %v1269 = vrot.slane %v1073, 5
        %v1270 = vsel %vm1125, %v1268, %v1269
        %1271 = vrot.lane.b32.xlu0 %v1129, 32
        %v1272 = vpop.permute.xlu0 %1271
        %1273 = vrot.lane.b32.xlu0 %v1132, 32
        %v1274 = vpop.permute.xlu0 %1273
        %1275 = vrot.lane.b32.xlu0 %v1135, 32
        %v1276 = vpop.permute.xlu0 %1275
        %1277 = vrot.lane.b32.xlu0 %v1138, 32
        %v1278 = vpop.permute.xlu0 %1277
        %1279 = vrot.lane.b32.xlu0 %v1141, 32
        %v1280 = vpop.permute.xlu0 %1279
        %1281 = vrot.lane.b32.xlu0 %v1144, 32
        %v1282 = vpop.permute.xlu0 %1281
        %1283 = vrot.lane.b32.xlu0 %v1147, 32
        %v1284 = vpop.permute.xlu0 %1283
        %1285 = vrot.lane.b32.xlu0 %v1150, 32
        %v1286 = vpop.permute.xlu0 %1285
        %1287 = vrot.lane.b32.xlu0 %v1153, 32
        %v1288 = vpop.permute.xlu0 %1287
        %1289 = vrot.lane.b32.xlu0 %v1156, 32
        %v1290 = vpop.permute.xlu0 %1289
        %1291 = vrot.lane.b32.xlu0 %v1159, 32
        %v1292 = vpop.permute.xlu0 %1291
        %1293 = vrot.lane.b32.xlu0 %v1162, 32
        %v1294 = vpop.permute.xlu0 %1293
        %1295 = vrot.lane.b32.xlu0 %v1165, 32
        %v1296 = vpop.permute.xlu0 %1295
        %1297 = vrot.lane.b32.xlu0 %v1168, 32
        %v1298 = vpop.permute.xlu0 %1297
        %1299 = vrot.lane.b32.xlu0 %v1171, 32
        %v1300 = vpop.permute.xlu0 %1299
        %1301 = vrot.lane.b32.xlu0 %v1174, 32
        %v1302 = vpop.permute.xlu0 %1301
        %1303 = vrot.lane.b32.xlu0 %v1177, 32
        %v1304 = vpop.permute.xlu0 %1303
        %1305 = vrot.lane.b32.xlu0 %v1180, 32
        %v1306 = vpop.permute.xlu0 %1305
        %1307 = vrot.lane.b32.xlu0 %v1183, 32
        %v1308 = vpop.permute.xlu0 %1307
        %1309 = vrot.lane.b32.xlu0 %v1186, 32
        %v1310 = vpop.permute.xlu0 %1309
        %1311 = vrot.lane.b32.xlu0 %v1189, 32
        %v1312 = vpop.permute.xlu0 %1311
        %1313 = vrot.lane.b32.xlu0 %v1192, 32
        %v1314 = vpop.permute.xlu0 %1313
        %1315 = vrot.lane.b32.xlu0 %v1195, 32
        %v1316 = vpop.permute.xlu0 %1315
        %1317 = vrot.lane.b32.xlu0 %v1198, 32
        %v1318 = vpop.permute.xlu0 %1317
        %1319 = vrot.lane.b32.xlu0 %v1201, 32
        %v1320 = vpop.permute.xlu0 %1319
        %1321 = vrot.lane.b32.xlu0 %v1204, 32
        %v1322 = vpop.permute.xlu0 %1321
        %1323 = vrot.lane.b32.xlu0 %v1207, 32
        %v1324 = vpop.permute.xlu0 %1323
        %1325 = vrot.lane.b32.xlu0 %v1210, 32
        %v1326 = vpop.permute.xlu0 %1325
        %1327 = vrot.lane.b32.xlu0 %v1213, 32
        %v1328 = vpop.permute.xlu0 %1327
        %1329 = vrot.lane.b32.xlu0 %v1216, 32
        %v1330 = vpop.permute.xlu0 %1329
        %1331 = vrot.lane.b32.xlu0 %v1219, 32
        %v1332 = vpop.permute.xlu0 %1331
        %1333 = vrot.lane.b32.xlu0 %v1222, 32
        %v1334 = vpop.permute.xlu0 %1333
        %1335 = vrot.lane.b32.xlu0 %v1225, 32
        %v1336 = vpop.permute.xlu0 %1335
        %1337 = vrot.lane.b32.xlu0 %v1228, 32
        %v1338 = vpop.permute.xlu0 %1337
        %1339 = vrot.lane.b32.xlu0 %v1231, 32
        %v1340 = vpop.permute.xlu0 %1339
        %1341 = vrot.lane.b32.xlu0 %v1234, 32
        %v1342 = vpop.permute.xlu0 %1341
        %1343 = vrot.lane.b32.xlu0 %v1237, 32
        %v1344 = vpop.permute.xlu0 %1343
        %1345 = vrot.lane.b32.xlu0 %v1240, 32
        %v1346 = vpop.permute.xlu0 %1345
        %1347 = vrot.lane.b32.xlu0 %v1243, 32
        %v1348 = vpop.permute.xlu0 %1347
        %1349 = vrot.lane.b32.xlu0 %v1246, 32
        %v1350 = vpop.permute.xlu0 %1349
        %1351 = vrot.lane.b32.xlu0 %v1249, 32
        %v1352 = vpop.permute.xlu0 %1351
        %1353 = vrot.lane.b32.xlu0 %v1252, 32
        %v1354 = vpop.permute.xlu0 %1353
        %1355 = vrot.lane.b32.xlu0 %v1255, 32
        %v1356 = vpop.permute.xlu0 %1355
        %1357 = vrot.lane.b32.xlu0 %v1258, 32
        %v1358 = vpop.permute.xlu0 %1357
        %1359 = vrot.lane.b32.xlu0 %v1261, 32
        %v1360 = vpop.permute.xlu0 %1359
        %1361 = vrot.lane.b32.xlu0 %v1264, 32
        %v1362 = vpop.permute.xlu0 %1361
        %1363 = vrot.lane.b32.xlu0 %v1267, 32
        %v1364 = vpop.permute.xlu0 %1363
        %1365 = vrot.lane.b32.xlu0 %v1270, 32
        %v1366 = vpop.permute.xlu0 %1365
        %vm1415 = vcmask 388352
        %1416 = vst.msk [vmem:[#allocation2] sm:$0xf] %vm1415, %v1272
        %1417 = vst.msk [vmem:[#allocation2 + $0x8] sm:$0xf] %vm1415, %v1274
        %1418 = vst.msk [vmem:[#allocation2 + $0x10] sm:$0xf] %vm1415, %v1276
        %1419 = vst.msk [vmem:[#allocation2 + $0x18] sm:$0xf] %vm1415, %v1278
        %1420 = vst.msk [vmem:[#allocation2 + $0x20] sm:$0xf] %vm1415, %v1280
        %1421 = vst.msk [vmem:[#allocation2 + $0x28] sm:$0xf] %vm1415, %v1282
        %1422 = vst.msk [vmem:[#allocation2 + $0x30] sm:$0xf] %vm1415, %v1284
        %1423 = vst.msk [vmem:[#allocation2 + $0x38] sm:$0xf] %vm1415, %v1286
        %1424 = vst.msk [vmem:[#allocation2 + $0x40] sm:$0xf] %vm1415, %v1288
        %1425 = vst.msk [vmem:[#allocation2 + $0x48] sm:$0xf] %vm1415, %v1290
        %1426 = vst.msk [vmem:[#allocation2 + $0x50] sm:$0xf] %vm1415, %v1292
        %1427 = vst.msk [vmem:[#allocation2 + $0x58] sm:$0xf] %vm1415, %v1294
        %1428 = vst.msk [vmem:[#allocation2 + $0x60] sm:$0xf] %vm1415, %v1296
        %1429 = vst.msk [vmem:[#allocation2 + $0x68] sm:$0xf] %vm1415, %v1298
        %1430 = vst.msk [vmem:[#allocation2 + $0x70] sm:$0xf] %vm1415, %v1300
        %1431 = vst.msk [vmem:[#allocation2 + $0x78] sm:$0xf] %vm1415, %v1302
        %1432 = vst.msk [vmem:[#allocation2 + $0x80] sm:$0xf] %vm1415, %v1304
        %1433 = vst.msk [vmem:[#allocation2 + $0x88] sm:$0xf] %vm1415, %v1306
        %1434 = vst.msk [vmem:[#allocation2 + $0x90] sm:$0xf] %vm1415, %v1308
        %1435 = vst.msk [vmem:[#allocation2 + $0x98] sm:$0xf] %vm1415, %v1310
        %1436 = vst.msk [vmem:[#allocation2 + $0xa0] sm:$0xf] %vm1415, %v1312
        %1437 = vst.msk [vmem:[#allocation2 + $0xa8] sm:$0xf] %vm1415, %v1314
        %1438 = vst.msk [vmem:[#allocation2 + $0xb0] sm:$0xf] %vm1415, %v1316
        %1439 = vst.msk [vmem:[#allocation2 + $0xb8] sm:$0xf] %vm1415, %v1318
        %1440 = vst.msk [vmem:[#allocation2 + $0xc0] sm:$0xf] %vm1415, %v1320
        %1441 = vst.msk [vmem:[#allocation2 + $0xc8] sm:$0xf] %vm1415, %v1322
        %1442 = vst.msk [vmem:[#allocation2 + $0xd0] sm:$0xf] %vm1415, %v1324
        %1443 = vst.msk [vmem:[#allocation2 + $0xd8] sm:$0xf] %vm1415, %v1326
        %1444 = vst.msk [vmem:[#allocation2 + $0xe0] sm:$0xf] %vm1415, %v1328
        %1445 = vst.msk [vmem:[#allocation2 + $0xe8] sm:$0xf] %vm1415, %v1330
        %1446 = vst.msk [vmem:[#allocation2 + $0xf0] sm:$0xf] %vm1415, %v1332
        %1447 = vst.msk [vmem:[#allocation2 + $0xf8] sm:$0xf] %vm1415, %v1334
        %1448 = vst.msk [vmem:[#allocation2 + $0x100] sm:$0xf] %vm1415, %v1336
        %1449 = vst.msk [vmem:[#allocation2 + $0x108] sm:$0xf] %vm1415, %v1338
        %1450 = vst.msk [vmem:[#allocation2 + $0x110] sm:$0xf] %vm1415, %v1340
        %1451 = vst.msk [vmem:[#allocation2 + $0x118] sm:$0xf] %vm1415, %v1342
        %1452 = vst.msk [vmem:[#allocation2 + $0x120] sm:$0xf] %vm1415, %v1344
        %1453 = vst.msk [vmem:[#allocation2 + $0x128] sm:$0xf] %vm1415, %v1346
        %1454 = vst.msk [vmem:[#allocation2 + $0x130] sm:$0xf] %vm1415, %v1348
        %1455 = vst.msk [vmem:[#allocation2 + $0x138] sm:$0xf] %vm1415, %v1350
        %1456 = vst.msk [vmem:[#allocation2 + $0x140] sm:$0xf] %vm1415, %v1352
        %1457 = vst.msk [vmem:[#allocation2 + $0x148] sm:$0xf] %vm1415, %v1354
        %1458 = vst.msk [vmem:[#allocation2 + $0x150] sm:$0xf] %vm1415, %v1356
        %1459 = vst.msk [vmem:[#allocation2 + $0x158] sm:$0xf] %vm1415, %v1358
        %1460 = vst.msk [vmem:[#allocation2 + $0x160] sm:$0xf] %vm1415, %v1360
        %1461 = vst.msk [vmem:[#allocation2 + $0x168] sm:$0xf] %vm1415, %v1362
        %1462 = vst.msk [vmem:[#allocation2 + $0x170] sm:$0xf] %vm1415, %v1364
        %1463 = vst.msk [vmem:[#allocation2 + $0x178] sm:$0xf] %vm1415, %v1366
        %v1464 = vld [vmem:[%s196 + $0xc] sm:$0xf]
        %v1465 = vld [vmem:[%s196 + $0x10] sm:$0xf]
        %v1466 = vld [vmem:[%s196 + $0x14] sm:$0xf]
        %v1467 = vld [vmem:[%s196 + $0x18] sm:$0xf]
        %v1468 = vld [vmem:[%s196 + $0x1c] sm:$0xf]
        %v1469 = vld [vmem:[%s196 + $0x20] sm:$0xf]
        %v1470 = vld [vmem:[%s196 + $0x24] sm:$0xf]
        %v1471 = vld [vmem:[%s196 + $0x28] sm:$0xf]
        %v1472 = vld [vmem:[%s196 + $0x2c] sm:$0xf]
        %v1473 = vld [vmem:[%s196 + $0x30] sm:$0xf]
        %v1474 = vld [vmem:[%s196 + $0x34] sm:$0xf]
        %v1475 = vld [vmem:[%s196 + $0x38] sm:$0xf]
        %v1476 = vld [vmem:[%s196 + $0x3c] sm:$0xf]
        %v1477 = vld [vmem:[%s196 + $0x40] sm:$0xf]
        %v1478 = vld [vmem:[%s196 + $0x44] sm:$0xf]
        %v1479 = vld [vmem:[%s196 + $0x48] sm:$0xf]
        %v1480 = vld [vmem:[%s196 + $0x4c] sm:$0xf]
        %v1481 = vld [vmem:[%s196 + $0x50] sm:$0xf]
        %v1482 = vld [vmem:[%s196 + $0x54] sm:$0xf]
        %v1483 = vld [vmem:[%s196 + $0x58] sm:$0xf]
        %v1484 = vld [vmem:[%s196 + $0x5c] sm:$0xf]
        %v1485 = vld [vmem:[%s196 + $0x60] sm:$0xf]
        %v1486 = vld [vmem:[%s196 + $0x64] sm:$0xf]
        %v1487 = vld [vmem:[%s196 + $0x68] sm:$0xf]
        %v1488 = vld [vmem:[%s196 + $0x6c] sm:$0xf]
        %v1489 = vld [vmem:[%s196 + $0x70] sm:$0xf]
        %v1490 = vld [vmem:[%s196 + $0x74] sm:$0xf]
        %v1491 = vld [vmem:[%s196 + $0x78] sm:$0xf]
        %v1492 = vld [vmem:[%s196 + $0x7c] sm:$0xf]
        %v1493 = vld [vmem:[%s196 + $0x80] sm:$0xf]
        %v1494 = vld [vmem:[%s196 + $0x84] sm:$0xf]
        %v1495 = vld [vmem:[%s196 + $0x88] sm:$0xf]
        %v1496 = vld [vmem:[%s196 + $0x8c] sm:$0xf]
        %v1497 = vld [vmem:[%s196 + $0x90] sm:$0xf]
        %v1498 = vld [vmem:[%s196 + $0x94] sm:$0xf]
        %v1499 = vld [vmem:[%s196 + $0x98] sm:$0xf]
        %v1500 = vld [vmem:[%s196 + $0x9c] sm:$0xf]
        %v1501 = vld [vmem:[%s196 + $0xa0] sm:$0xf]
        %v1502 = vld [vmem:[%s196 + $0xa4] sm:$0xf]
        %v1503 = vld [vmem:[%s196 + $0xa8] sm:$0xf]
        %v1504 = vld [vmem:[%s196 + $0xac] sm:$0xf]
        %v1505 = vld [vmem:[%s196 + $0xb0] sm:$0xf]
        %v1506 = vld [vmem:[%s196 + $0xb4] sm:$0xf]
        %v1507 = vld [vmem:[%s196 + $0xb8] sm:$0xf]
        %v1508 = vld [vmem:[%s196 + $0xbc] sm:$0xf]
        %v1509 = vld [vmem:[%s196 + $0xc0] sm:$0xf]
        %v1510 = vld [vmem:[%s196 + $0xc4] sm:$0xf]
        %v1511 = vld [vmem:[%s196 + $0xc8] sm:$0xf]
        %1560 = vrot.lane.b32.xlu0 %v1464, 48
        %v1561 = vpop.permute.xlu0 %1560
        %1562 = vrot.lane.b32.xlu0 %v1465, 48
        %v1563 = vpop.permute.xlu0 %1562
        %1564 = vrot.lane.b32.xlu0 %v1466, 48
        %v1565 = vpop.permute.xlu0 %1564
        %1566 = vrot.lane.b32.xlu0 %v1467, 48
        %v1567 = vpop.permute.xlu0 %1566
        %1568 = vrot.lane.b32.xlu0 %v1468, 48
        %v1569 = vpop.permute.xlu0 %1568
        %1570 = vrot.lane.b32.xlu0 %v1469, 48
        %v1571 = vpop.permute.xlu0 %1570
        %1572 = vrot.lane.b32.xlu0 %v1470, 48
        %v1573 = vpop.permute.xlu0 %1572
        %1574 = vrot.lane.b32.xlu0 %v1471, 48
        %v1575 = vpop.permute.xlu0 %1574
        %1576 = vrot.lane.b32.xlu0 %v1472, 48
        %v1577 = vpop.permute.xlu0 %1576
        %1578 = vrot.lane.b32.xlu0 %v1473, 48
        %v1579 = vpop.permute.xlu0 %1578
        %1580 = vrot.lane.b32.xlu0 %v1474, 48
        %v1581 = vpop.permute.xlu0 %1580
        %1582 = vrot.lane.b32.xlu0 %v1475, 48
        %v1583 = vpop.permute.xlu0 %1582
        %1584 = vrot.lane.b32.xlu0 %v1476, 48
        %v1585 = vpop.permute.xlu0 %1584
        %1586 = vrot.lane.b32.xlu0 %v1477, 48
        %v1587 = vpop.permute.xlu0 %1586
        %1588 = vrot.lane.b32.xlu0 %v1478, 48
        %v1589 = vpop.permute.xlu0 %1588
        %1590 = vrot.lane.b32.xlu0 %v1479, 48
        %v1591 = vpop.permute.xlu0 %1590
        %1592 = vrot.lane.b32.xlu0 %v1480, 48
        %v1593 = vpop.permute.xlu0 %1592
        %1594 = vrot.lane.b32.xlu0 %v1481, 48
        %v1595 = vpop.permute.xlu0 %1594
        %1596 = vrot.lane.b32.xlu0 %v1482, 48
        %v1597 = vpop.permute.xlu0 %1596
        %1598 = vrot.lane.b32.xlu0 %v1483, 48
        %v1599 = vpop.permute.xlu0 %1598
        %1600 = vrot.lane.b32.xlu0 %v1484, 48
        %v1601 = vpop.permute.xlu0 %1600
        %1602 = vrot.lane.b32.xlu0 %v1485, 48
        %v1603 = vpop.permute.xlu0 %1602
        %1604 = vrot.lane.b32.xlu0 %v1486, 48
        %v1605 = vpop.permute.xlu0 %1604
        %1606 = vrot.lane.b32.xlu0 %v1487, 48
        %v1607 = vpop.permute.xlu0 %1606
        %1608 = vrot.lane.b32.xlu0 %v1488, 48
        %v1609 = vpop.permute.xlu0 %1608
        %1610 = vrot.lane.b32.xlu0 %v1489, 48
        %v1611 = vpop.permute.xlu0 %1610
        %1612 = vrot.lane.b32.xlu0 %v1490, 48
        %v1613 = vpop.permute.xlu0 %1612
        %1614 = vrot.lane.b32.xlu0 %v1491, 48
        %v1615 = vpop.permute.xlu0 %1614
        %1616 = vrot.lane.b32.xlu0 %v1492, 48
        %v1617 = vpop.permute.xlu0 %1616
        %1618 = vrot.lane.b32.xlu0 %v1493, 48
        %v1619 = vpop.permute.xlu0 %1618
        %1620 = vrot.lane.b32.xlu0 %v1494, 48
        %v1621 = vpop.permute.xlu0 %1620
        %1622 = vrot.lane.b32.xlu0 %v1495, 48
        %v1623 = vpop.permute.xlu0 %1622
        %1624 = vrot.lane.b32.xlu0 %v1496, 48
        %v1625 = vpop.permute.xlu0 %1624
        %1626 = vrot.lane.b32.xlu0 %v1497, 48
        %v1627 = vpop.permute.xlu0 %1626
        %1628 = vrot.lane.b32.xlu0 %v1498, 48
        %v1629 = vpop.permute.xlu0 %1628
        %1630 = vrot.lane.b32.xlu0 %v1499, 48
        %v1631 = vpop.permute.xlu0 %1630
        %1632 = vrot.lane.b32.xlu0 %v1500, 48
        %v1633 = vpop.permute.xlu0 %1632
        %1634 = vrot.lane.b32.xlu0 %v1501, 48
        %v1635 = vpop.permute.xlu0 %1634
        %1636 = vrot.lane.b32.xlu0 %v1502, 48
        %v1637 = vpop.permute.xlu0 %1636
        %1638 = vrot.lane.b32.xlu0 %v1503, 48
        %v1639 = vpop.permute.xlu0 %1638
        %1640 = vrot.lane.b32.xlu0 %v1504, 48
        %v1641 = vpop.permute.xlu0 %1640
        %1642 = vrot.lane.b32.xlu0 %v1505, 48
        %v1643 = vpop.permute.xlu0 %1642
        %1644 = vrot.lane.b32.xlu0 %v1506, 48
        %v1645 = vpop.permute.xlu0 %1644
        %1646 = vrot.lane.b32.xlu0 %v1507, 48
        %v1647 = vpop.permute.xlu0 %1646
        %1648 = vrot.lane.b32.xlu0 %v1508, 48
        %v1649 = vpop.permute.xlu0 %1648
        %1650 = vrot.lane.b32.xlu0 %v1509, 48
        %v1651 = vpop.permute.xlu0 %1650
        %1652 = vrot.lane.b32.xlu0 %v1510, 48
        %v1653 = vpop.permute.xlu0 %1652
        %1654 = vrot.lane.b32.xlu0 %v1511, 48
        %v1655 = vpop.permute.xlu0 %1654
        %vm1704 = vcmask 519552
        %1705 = vst.msk [vmem:[#allocation2] sm:$0xf] %vm1704, %v1561
        %1706 = vst.msk [vmem:[#allocation2 + $0x8] sm:$0xf] %vm1704, %v1563
        %1707 = vst.msk [vmem:[#allocation2 + $0x10] sm:$0xf] %vm1704, %v1565
        %1708 = vst.msk [vmem:[#allocation2 + $0x18] sm:$0xf] %vm1704, %v1567
        %1709 = vst.msk [vmem:[#allocation2 + $0x20] sm:$0xf] %vm1704, %v1569
        %1710 = vst.msk [vmem:[#allocation2 + $0x28] sm:$0xf] %vm1704, %v1571
        %1711 = vst.msk [vmem:[#allocation2 + $0x30] sm:$0xf] %vm1704, %v1573
        %1712 = vst.msk [vmem:[#allocation2 + $0x38] sm:$0xf] %vm1704, %v1575
        %1713 = vst.msk [vmem:[#allocation2 + $0x40] sm:$0xf] %vm1704, %v1577
        %1714 = vst.msk [vmem:[#allocation2 + $0x48] sm:$0xf] %vm1704, %v1579
        %1715 = vst.msk [vmem:[#allocation2 + $0x50] sm:$0xf] %vm1704, %v1581
        %1716 = vst.msk [vmem:[#allocation2 + $0x58] sm:$0xf] %vm1704, %v1583
        %1717 = vst.msk [vmem:[#allocation2 + $0x60] sm:$0xf] %vm1704, %v1585
        %1718 = vst.msk [vmem:[#allocation2 + $0x68] sm:$0xf] %vm1704, %v1587
        %1719 = vst.msk [vmem:[#allocation2 + $0x70] sm:$0xf] %vm1704, %v1589
        %1720 = vst.msk [vmem:[#allocation2 + $0x78] sm:$0xf] %vm1704, %v1591
        %1721 = vst.msk [vmem:[#allocation2 + $0x80] sm:$0xf] %vm1704, %v1593
        %1722 = vst.msk [vmem:[#allocation2 + $0x88] sm:$0xf] %vm1704, %v1595
        %1723 = vst.msk [vmem:[#allocation2 + $0x90] sm:$0xf] %vm1704, %v1597
        %1724 = vst.msk [vmem:[#allocation2 + $0x98] sm:$0xf] %vm1704, %v1599
        %1725 = vst.msk [vmem:[#allocation2 + $0xa0] sm:$0xf] %vm1704, %v1601
        %1726 = vst.msk [vmem:[#allocation2 + $0xa8] sm:$0xf] %vm1704, %v1603
        %1727 = vst.msk [vmem:[#allocation2 + $0xb0] sm:$0xf] %vm1704, %v1605
        %1728 = vst.msk [vmem:[#allocation2 + $0xb8] sm:$0xf] %vm1704, %v1607
        %1729 = vst.msk [vmem:[#allocation2 + $0xc0] sm:$0xf] %vm1704, %v1609
        %1730 = vst.msk [vmem:[#allocation2 + $0xc8] sm:$0xf] %vm1704, %v1611
        %1731 = vst.msk [vmem:[#allocation2 + $0xd0] sm:$0xf] %vm1704, %v1613
        %1732 = vst.msk [vmem:[#allocation2 + $0xd8] sm:$0xf] %vm1704, %v1615
        %1733 = vst.msk [vmem:[#allocation2 + $0xe0] sm:$0xf] %vm1704, %v1617
        %1734 = vst.msk [vmem:[#allocation2 + $0xe8] sm:$0xf] %vm1704, %v1619
        %1735 = vst.msk [vmem:[#allocation2 + $0xf0] sm:$0xf] %vm1704, %v1621
        %1736 = vst.msk [vmem:[#allocation2 + $0xf8] sm:$0xf] %vm1704, %v1623
        %1737 = vst.msk [vmem:[#allocation2 + $0x100] sm:$0xf] %vm1704, %v1625
        %1738 = vst.msk [vmem:[#allocation2 + $0x108] sm:$0xf] %vm1704, %v1627
        %1739 = vst.msk [vmem:[#allocation2 + $0x110] sm:$0xf] %vm1704, %v1629
        %1740 = vst.msk [vmem:[#allocation2 + $0x118] sm:$0xf] %vm1704, %v1631
        %1741 = vst.msk [vmem:[#allocation2 + $0x120] sm:$0xf] %vm1704, %v1633
        %1742 = vst.msk [vmem:[#allocation2 + $0x128] sm:$0xf] %vm1704, %v1635
        %1743 = vst.msk [vmem:[#allocation2 + $0x130] sm:$0xf] %vm1704, %v1637
        %1744 = vst.msk [vmem:[#allocation2 + $0x138] sm:$0xf] %vm1704, %v1639
        %1745 = vst.msk [vmem:[#allocation2 + $0x140] sm:$0xf] %vm1704, %v1641
        %1746 = vst.msk [vmem:[#allocation2 + $0x148] sm:$0xf] %vm1704, %v1643
        %1747 = vst.msk [vmem:[#allocation2 + $0x150] sm:$0xf] %vm1704, %v1645
        %1748 = vst.msk [vmem:[#allocation2 + $0x158] sm:$0xf] %vm1704, %v1647
        %1749 = vst.msk [vmem:[#allocation2 + $0x160] sm:$0xf] %vm1704, %v1649
        %1750 = vst.msk [vmem:[#allocation2 + $0x168] sm:$0xf] %vm1704, %v1651
        %1751 = vst.msk [vmem:[#allocation2 + $0x170] sm:$0xf] %vm1704, %v1653
        %1752 = vst.msk [vmem:[#allocation2 + $0x178] sm:$0xf] %vm1704, %v1655
        %v1753 = vld [vmem:[%s196 + $0xc] sm:$0xf]
        %v1754 = vld [vmem:[%s196 + $0x10] sm:$0xf]
        %v1755 = vld [vmem:[%s196 + $0x14] sm:$0xf]
        %v1756 = vld [vmem:[%s196 + $0x18] sm:$0xf]
        %v1757 = vld [vmem:[%s196 + $0x1c] sm:$0xf]
        %v1758 = vld [vmem:[%s196 + $0x20] sm:$0xf]
        %v1759 = vld [vmem:[%s196 + $0x24] sm:$0xf]
        %v1760 = vld [vmem:[%s196 + $0x28] sm:$0xf]
        %v1761 = vld [vmem:[%s196 + $0x2c] sm:$0xf]
        %v1762 = vld [vmem:[%s196 + $0x30] sm:$0xf]
        %v1763 = vld [vmem:[%s196 + $0x34] sm:$0xf]
        %v1764 = vld [vmem:[%s196 + $0x38] sm:$0xf]
        %v1765 = vld [vmem:[%s196 + $0x3c] sm:$0xf]
        %v1766 = vld [vmem:[%s196 + $0x40] sm:$0xf]
        %v1767 = vld [vmem:[%s196 + $0x44] sm:$0xf]
        %v1768 = vld [vmem:[%s196 + $0x48] sm:$0xf]
        %v1769 = vld [vmem:[%s196 + $0x4c] sm:$0xf]
        %v1770 = vld [vmem:[%s196 + $0x50] sm:$0xf]
        %v1771 = vld [vmem:[%s196 + $0x54] sm:$0xf]
        %v1772 = vld [vmem:[%s196 + $0x58] sm:$0xf]
        %v1773 = vld [vmem:[%s196 + $0x5c] sm:$0xf]
        %v1774 = vld [vmem:[%s196 + $0x60] sm:$0xf]
        %v1775 = vld [vmem:[%s196 + $0x64] sm:$0xf]
        %v1776 = vld [vmem:[%s196 + $0x68] sm:$0xf]
        %v1777 = vld [vmem:[%s196 + $0x6c] sm:$0xf]
        %v1778 = vld [vmem:[%s196 + $0x70] sm:$0xf]
        %v1779 = vld [vmem:[%s196 + $0x74] sm:$0xf]
        %v1780 = vld [vmem:[%s196 + $0x78] sm:$0xf]
        %v1781 = vld [vmem:[%s196 + $0x7c] sm:$0xf]
        %v1782 = vld [vmem:[%s196 + $0x80] sm:$0xf]
        %v1783 = vld [vmem:[%s196 + $0x84] sm:$0xf]
        %v1784 = vld [vmem:[%s196 + $0x88] sm:$0xf]
        %v1785 = vld [vmem:[%s196 + $0x8c] sm:$0xf]
        %v1786 = vld [vmem:[%s196 + $0x90] sm:$0xf]
        %v1787 = vld [vmem:[%s196 + $0x94] sm:$0xf]
        %v1788 = vld [vmem:[%s196 + $0x98] sm:$0xf]
        %v1789 = vld [vmem:[%s196 + $0x9c] sm:$0xf]
        %v1790 = vld [vmem:[%s196 + $0xa0] sm:$0xf]
        %v1791 = vld [vmem:[%s196 + $0xa4] sm:$0xf]
        %v1792 = vld [vmem:[%s196 + $0xa8] sm:$0xf]
        %v1793 = vld [vmem:[%s196 + $0xac] sm:$0xf]
        %v1794 = vld [vmem:[%s196 + $0xb0] sm:$0xf]
        %v1795 = vld [vmem:[%s196 + $0xb4] sm:$0xf]
        %v1796 = vld [vmem:[%s196 + $0xb8] sm:$0xf]
        %v1797 = vld [vmem:[%s196 + $0xbc] sm:$0xf]
        %v1798 = vld [vmem:[%s196 + $0xc0] sm:$0xf]
        %v1799 = vld [vmem:[%s196 + $0xc4] sm:$0xf]
        %v1800 = vld [vmem:[%s196 + $0xc8] sm:$0xf]
        %v1801 = vld [vmem:[%s196 + $0xcc] sm:$0x1]
        %v1803 = vshrl.u32 %v1753, 16
        %v1805 = vrot.slane %v1803, 4
        %v1806 = vshll.u32 %v1753, 16
        %v1808 = vrot.slane %v1806, 5
        %v1809 = vor.u32 %v1805, %v1808
        %v1810 = vrot.slane %v1809, 4
        %v1812 = vshll.u32 %v1754, 16
        %v1814 = vrot.slane %v1812, 5
        %v1815 = vsel %vm347, %v1810, %v1814
        %v1816 = vshrl.u32 %v1754, 16
        %v1818 = vrot.slane %v1816, 4
        %v1819 = vor.u32 %v1818, %v1814
        %v1820 = vrot.slane %v1819, 4
        %v1822 = vshll.u32 %v1755, 16
        %v1824 = vrot.slane %v1822, 5
        %v1825 = vsel %vm347, %v1820, %v1824
        %v1826 = vshrl.u32 %v1755, 16
        %v1828 = vrot.slane %v1826, 4
        %v1829 = vor.u32 %v1828, %v1824
        %v1830 = vrot.slane %v1829, 4
        %v1832 = vshll.u32 %v1756, 16
        %v1834 = vrot.slane %v1832, 5
        %v1835 = vsel %vm347, %v1830, %v1834
        %v1836 = vshrl.u32 %v1756, 16
        %v1838 = vrot.slane %v1836, 4
        %v1839 = vor.u32 %v1838, %v1834
        %v1840 = vrot.slane %v1839, 4
        %v1842 = vshll.u32 %v1757, 16
        %v1844 = vrot.slane %v1842, 5
        %v1845 = vsel %vm347, %v1840, %v1844
        %v1846 = vshrl.u32 %v1757, 16
        %v1848 = vrot.slane %v1846, 4
        %v1849 = vor.u32 %v1848, %v1844
        %v1850 = vrot.slane %v1849, 4
        %v1852 = vshll.u32 %v1758, 16
        %v1854 = vrot.slane %v1852, 5
        %v1855 = vsel %vm347, %v1850, %v1854
        %v1856 = vshrl.u32 %v1758, 16
        %v1858 = vrot.slane %v1856, 4
        %v1859 = vor.u32 %v1858, %v1854
        %v1860 = vrot.slane %v1859, 4
        %v1862 = vshll.u32 %v1759, 16
        %v1864 = vrot.slane %v1862, 5
        %v1865 = vsel %vm347, %v1860, %v1864
        %v1866 = vshrl.u32 %v1759, 16
        %v1868 = vrot.slane %v1866, 4
        %v1869 = vor.u32 %v1868, %v1864
        %v1870 = vrot.slane %v1869, 4
        %v1872 = vshll.u32 %v1760, 16
        %v1874 = vrot.slane %v1872, 5
        %v1875 = vsel %vm347, %v1870, %v1874
        %v1876 = vshrl.u32 %v1760, 16
        %v1878 = vrot.slane %v1876, 4
        %v1879 = vor.u32 %v1878, %v1874
        %v1880 = vrot.slane %v1879, 4
        %v1882 = vshll.u32 %v1761, 16
        %v1884 = vrot.slane %v1882, 5
        %v1885 = vsel %vm347, %v1880, %v1884
        %v1886 = vshrl.u32 %v1761, 16
        %v1888 = vrot.slane %v1886, 4
        %v1889 = vor.u32 %v1888, %v1884
        %v1890 = vrot.slane %v1889, 4
        %v1892 = vshll.u32 %v1762, 16
        %v1894 = vrot.slane %v1892, 5
        %v1895 = vsel %vm347, %v1890, %v1894
        %v1896 = vshrl.u32 %v1762, 16
        %v1898 = vrot.slane %v1896, 4
        %v1899 = vor.u32 %v1898, %v1894
        %v1900 = vrot.slane %v1899, 4
        %v1902 = vshll.u32 %v1763, 16
        %v1904 = vrot.slane %v1902, 5
        %v1905 = vsel %vm347, %v1900, %v1904
        %v1906 = vshrl.u32 %v1763, 16
        %v1908 = vrot.slane %v1906, 4
        %v1909 = vor.u32 %v1908, %v1904
        %v1910 = vrot.slane %v1909, 4
        %v1912 = vshll.u32 %v1764, 16
        %v1914 = vrot.slane %v1912, 5
        %v1915 = vsel %vm347, %v1910, %v1914
        %v1916 = vshrl.u32 %v1764, 16
        %v1918 = vrot.slane %v1916, 4
        %v1919 = vor.u32 %v1918, %v1914
        %v1920 = vrot.slane %v1919, 4
        %v1922 = vshll.u32 %v1765, 16
        %v1924 = vrot.slane %v1922, 5
        %v1925 = vsel %vm347, %v1920, %v1924
        %v1926 = vshrl.u32 %v1765, 16
        %v1928 = vrot.slane %v1926, 4
        %v1929 = vor.u32 %v1928, %v1924
        %v1930 = vrot.slane %v1929, 4
        %v1932 = vshll.u32 %v1766, 16
        %v1934 = vrot.slane %v1932, 5
        %v1935 = vsel %vm347, %v1930, %v1934
        %v1936 = vshrl.u32 %v1766, 16
        %v1938 = vrot.slane %v1936, 4
        %v1939 = vor.u32 %v1938, %v1934
        %v1940 = vrot.slane %v1939, 4
        %v1942 = vshll.u32 %v1767, 16
        %v1944 = vrot.slane %v1942, 5
        %v1945 = vsel %vm347, %v1940, %v1944
        %v1946 = vshrl.u32 %v1767, 16
        %v1948 = vrot.slane %v1946, 4
        %v1949 = vor.u32 %v1948, %v1944
        %v1950 = vrot.slane %v1949, 4
        %v1952 = vshll.u32 %v1768, 16
        %v1954 = vrot.slane %v1952, 5
        %v1955 = vsel %vm347, %v1950, %v1954
        %v1956 = vshrl.u32 %v1768, 16
        %v1958 = vrot.slane %v1956, 4
        %v1959 = vor.u32 %v1958, %v1954
        %v1960 = vrot.slane %v1959, 4
        %v1962 = vshll.u32 %v1769, 16
        %v1964 = vrot.slane %v1962, 5
        %v1965 = vsel %vm347, %v1960, %v1964
        %v1966 = vshrl.u32 %v1769, 16
        %v1968 = vrot.slane %v1966, 4
        %v1969 = vor.u32 %v1968, %v1964
        %v1970 = vrot.slane %v1969, 4
        %v1972 = vshll.u32 %v1770, 16
        %v1974 = vrot.slane %v1972, 5
        %v1975 = vsel %vm347, %v1970, %v1974
        %v1976 = vshrl.u32 %v1770, 16
        %v1978 = vrot.slane %v1976, 4
        %v1979 = vor.u32 %v1978, %v1974
        %v1980 = vrot.slane %v1979, 4
        %v1982 = vshll.u32 %v1771, 16
        %v1984 = vrot.slane %v1982, 5
        %v1985 = vsel %vm347, %v1980, %v1984
        %v1986 = vshrl.u32 %v1771, 16
        %v1988 = vrot.slane %v1986, 4
        %v1989 = vor.u32 %v1988, %v1984
        %v1990 = vrot.slane %v1989, 4
        %v1992 = vshll.u32 %v1772, 16
        %v1994 = vrot.slane %v1992, 5
        %v1995 = vsel %vm347, %v1990, %v1994
        %v1996 = vshrl.u32 %v1772, 16
        %v1998 = vrot.slane %v1996, 4
        %v1999 = vor.u32 %v1998, %v1994
        %v2000 = vrot.slane %v1999, 4
        %v2002 = vshll.u32 %v1773, 16
        %v2004 = vrot.slane %v2002, 5
        %v2005 = vsel %vm347, %v2000, %v2004
        %v2006 = vshrl.u32 %v1773, 16
        %v2008 = vrot.slane %v2006, 4
        %v2009 = vor.u32 %v2008, %v2004
        %v2010 = vrot.slane %v2009, 4
        %v2012 = vshll.u32 %v1774, 16
        %v2014 = vrot.slane %v2012, 5
        %v2015 = vsel %vm347, %v2010, %v2014
        %v2016 = vshrl.u32 %v1774, 16
        %v2018 = vrot.slane %v2016, 4
        %v2019 = vor.u32 %v2018, %v2014
        %v2020 = vrot.slane %v2019, 4
        %v2022 = vshll.u32 %v1775, 16
        %v2024 = vrot.slane %v2022, 5
        %v2025 = vsel %vm347, %v2020, %v2024
        %v2026 = vshrl.u32 %v1775, 16
        %v2028 = vrot.slane %v2026, 4
        %v2029 = vor.u32 %v2028, %v2024
        %v2030 = vrot.slane %v2029, 4
        %v2032 = vshll.u32 %v1776, 16
        %v2034 = vrot.slane %v2032, 5
        %v2035 = vsel %vm347, %v2030, %v2034
        %v2036 = vshrl.u32 %v1776, 16
        %v2038 = vrot.slane %v2036, 4
        %v2039 = vor.u32 %v2038, %v2034
        %v2040 = vrot.slane %v2039, 4
        %v2042 = vshll.u32 %v1777, 16
        %v2044 = vrot.slane %v2042, 5
        %v2045 = vsel %vm347, %v2040, %v2044
        %v2046 = vshrl.u32 %v1777, 16
        %v2048 = vrot.slane %v2046, 4
        %v2049 = vor.u32 %v2048, %v2044
        %v2050 = vrot.slane %v2049, 4
        %v2052 = vshll.u32 %v1778, 16
        %v2054 = vrot.slane %v2052, 5
        %v2055 = vsel %vm347, %v2050, %v2054
        %v2056 = vshrl.u32 %v1778, 16
        %v2058 = vrot.slane %v2056, 4
        %v2059 = vor.u32 %v2058, %v2054
        %v2060 = vrot.slane %v2059, 4
        %v2062 = vshll.u32 %v1779, 16
        %v2064 = vrot.slane %v2062, 5
        %v2065 = vsel %vm347, %v2060, %v2064
        %v2066 = vshrl.u32 %v1779, 16
        %v2068 = vrot.slane %v2066, 4
        %v2069 = vor.u32 %v2068, %v2064
        %v2070 = vrot.slane %v2069, 4
        %v2072 = vshll.u32 %v1780, 16
        %v2074 = vrot.slane %v2072, 5
        %v2075 = vsel %vm347, %v2070, %v2074
        %v2076 = vshrl.u32 %v1780, 16
        %v2078 = vrot.slane %v2076, 4
        %v2079 = vor.u32 %v2078, %v2074
        %v2080 = vrot.slane %v2079, 4
        %v2082 = vshll.u32 %v1781, 16
        %v2084 = vrot.slane %v2082, 5
        %v2085 = vsel %vm347, %v2080, %v2084
        %v2086 = vshrl.u32 %v1781, 16
        %v2088 = vrot.slane %v2086, 4
        %v2089 = vor.u32 %v2088, %v2084
        %v2090 = vrot.slane %v2089, 4
        %v2092 = vshll.u32 %v1782, 16
        %v2094 = vrot.slane %v2092, 5
        %v2095 = vsel %vm347, %v2090, %v2094
        %v2096 = vshrl.u32 %v1782, 16
        %v2098 = vrot.slane %v2096, 4
        %v2099 = vor.u32 %v2098, %v2094
        %v2100 = vrot.slane %v2099, 4
        %v2102 = vshll.u32 %v1783, 16
        %v2104 = vrot.slane %v2102, 5
        %v2105 = vsel %vm347, %v2100, %v2104
        %v2106 = vshrl.u32 %v1783, 16
        %v2108 = vrot.slane %v2106, 4
        %v2109 = vor.u32 %v2108, %v2104
        %v2110 = vrot.slane %v2109, 4
        %v2112 = vshll.u32 %v1784, 16
        %v2114 = vrot.slane %v2112, 5
        %v2115 = vsel %vm347, %v2110, %v2114
        %v2116 = vshrl.u32 %v1784, 16
        %v2118 = vrot.slane %v2116, 4
        %v2119 = vor.u32 %v2118, %v2114
        %v2120 = vrot.slane %v2119, 4
        %v2122 = vshll.u32 %v1785, 16
        %v2124 = vrot.slane %v2122, 5
        %v2125 = vsel %vm347, %v2120, %v2124
        %v2126 = vshrl.u32 %v1785, 16
        %v2128 = vrot.slane %v2126, 4
        %v2129 = vor.u32 %v2128, %v2124
        %v2130 = vrot.slane %v2129, 4
        %v2132 = vshll.u32 %v1786, 16
        %v2134 = vrot.slane %v2132, 5
        %v2135 = vsel %vm347, %v2130, %v2134
        %v2136 = vshrl.u32 %v1786, 16
        %v2138 = vrot.slane %v2136, 4
        %v2139 = vor.u32 %v2138, %v2134
        %v2140 = vrot.slane %v2139, 4
        %v2142 = vshll.u32 %v1787, 16
        %v2144 = vrot.slane %v2142, 5
        %v2145 = vsel %vm347, %v2140, %v2144
        %v2146 = vshrl.u32 %v1787, 16
        %v2148 = vrot.slane %v2146, 4
        %v2149 = vor.u32 %v2148, %v2144
        %v2150 = vrot.slane %v2149, 4
        %v2152 = vshll.u32 %v1788, 16
        %v2154 = vrot.slane %v2152, 5
        %v2155 = vsel %vm347, %v2150, %v2154
        %v2156 = vshrl.u32 %v1788, 16
        %v2158 = vrot.slane %v2156, 4
        %v2159 = vor.u32 %v2158, %v2154
        %v2160 = vrot.slane %v2159, 4
        %v2162 = vshll.u32 %v1789, 16
        %v2164 = vrot.slane %v2162, 5
        %v2165 = vsel %vm347, %v2160, %v2164
        %v2166 = vshrl.u32 %v1789, 16
        %v2168 = vrot.slane %v2166, 4
        %v2169 = vor.u32 %v2168, %v2164
        %v2170 = vrot.slane %v2169, 4
        %v2172 = vshll.u32 %v1790, 16
        %v2174 = vrot.slane %v2172, 5
        %v2175 = vsel %vm347, %v2170, %v2174
        %v2176 = vshrl.u32 %v1790, 16
        %v2178 = vrot.slane %v2176, 4
        %v2179 = vor.u32 %v2178, %v2174
        %v2180 = vrot.slane %v2179, 4
        %v2182 = vshll.u32 %v1791, 16
        %v2184 = vrot.slane %v2182, 5
        %v2185 = vsel %vm347, %v2180, %v2184
        %v2186 = vshrl.u32 %v1791, 16
        %v2188 = vrot.slane %v2186, 4
        %v2189 = vor.u32 %v2188, %v2184
        %v2190 = vrot.slane %v2189, 4
        %v2192 = vshll.u32 %v1792, 16
        %v2194 = vrot.slane %v2192, 5
        %v2195 = vsel %vm347, %v2190, %v2194
        %v2196 = vshrl.u32 %v1792, 16
        %v2198 = vrot.slane %v2196, 4
        %v2199 = vor.u32 %v2198, %v2194
        %v2200 = vrot.slane %v2199, 4
        %v2202 = vshll.u32 %v1793, 16
        %v2204 = vrot.slane %v2202, 5
        %v2205 = vsel %vm347, %v2200, %v2204
        %v2206 = vshrl.u32 %v1793, 16
        %v2208 = vrot.slane %v2206, 4
        %v2209 = vor.u32 %v2208, %v2204
        %v2210 = vrot.slane %v2209, 4
        %v2212 = vshll.u32 %v1794, 16
        %v2214 = vrot.slane %v2212, 5
        %v2215 = vsel %vm347, %v2210, %v2214
        %v2216 = vshrl.u32 %v1794, 16
        %v2218 = vrot.slane %v2216, 4
        %v2219 = vor.u32 %v2218, %v2214
        %v2220 = vrot.slane %v2219, 4
        %v2222 = vshll.u32 %v1795, 16
        %v2224 = vrot.slane %v2222, 5
        %v2225 = vsel %vm347, %v2220, %v2224
        %v2226 = vshrl.u32 %v1795, 16
        %v2228 = vrot.slane %v2226, 4
        %v2229 = vor.u32 %v2228, %v2224
        %v2230 = vrot.slane %v2229, 4
        %v2232 = vshll.u32 %v1796, 16
        %v2234 = vrot.slane %v2232, 5
        %v2235 = vsel %vm347, %v2230, %v2234
        %v2236 = vshrl.u32 %v1796, 16
        %v2238 = vrot.slane %v2236, 4
        %v2239 = vor.u32 %v2238, %v2234
        %v2240 = vrot.slane %v2239, 4
        %v2242 = vshll.u32 %v1797, 16
        %v2244 = vrot.slane %v2242, 5
        %v2245 = vsel %vm347, %v2240, %v2244
        %v2246 = vshrl.u32 %v1797, 16
        %v2248 = vrot.slane %v2246, 4
        %v2249 = vor.u32 %v2248, %v2244
        %v2250 = vrot.slane %v2249, 4
        %v2252 = vshll.u32 %v1798, 16
        %v2254 = vrot.slane %v2252, 5
        %v2255 = vsel %vm347, %v2250, %v2254
        %v2256 = vshrl.u32 %v1798, 16
        %v2258 = vrot.slane %v2256, 4
        %v2259 = vor.u32 %v2258, %v2254
        %v2260 = vrot.slane %v2259, 4
        %v2262 = vshll.u32 %v1799, 16
        %v2264 = vrot.slane %v2262, 5
        %v2265 = vsel %vm347, %v2260, %v2264
        %v2266 = vshrl.u32 %v1799, 16
        %v2268 = vrot.slane %v2266, 4
        %v2269 = vor.u32 %v2268, %v2264
        %v2270 = vrot.slane %v2269, 4
        %v2272 = vshll.u32 %v1800, 16
        %v2274 = vrot.slane %v2272, 5
        %v2275 = vsel %vm347, %v2270, %v2274
        %v2276 = vshrl.u32 %v1800, 16
        %v2278 = vrot.slane %v2276, 4
        %v2279 = vor.u32 %v2278, %v2274
        %v2280 = vrot.slane %v2279, 4
        %v2282 = vshll.u32 %v1801, 16
        %v2284 = vrot.slane %v2282, 5
        %v2285 = vsel %vm347, %v2280, %v2284
        %2286 = vrot.lane.b32.xlu0 %v1815, 64
        %v2287 = vpop.permute.xlu0 %2286
        %2288 = vrot.lane.b32.xlu0 %v1825, 64
        %v2289 = vpop.permute.xlu0 %2288
        %2290 = vrot.lane.b32.xlu0 %v1835, 64
        %v2291 = vpop.permute.xlu0 %2290
        %2292 = vrot.lane.b32.xlu0 %v1845, 64
        %v2293 = vpop.permute.xlu0 %2292
        %2294 = vrot.lane.b32.xlu0 %v1855, 64
        %v2295 = vpop.permute.xlu0 %2294
        %2296 = vrot.lane.b32.xlu0 %v1865, 64
        %v2297 = vpop.permute.xlu0 %2296
        %2298 = vrot.lane.b32.xlu0 %v1875, 64
        %v2299 = vpop.permute.xlu0 %2298
        %2300 = vrot.lane.b32.xlu0 %v1885, 64
        %v2301 = vpop.permute.xlu0 %2300
        %2302 = vrot.lane.b32.xlu0 %v1895, 64
        %v2303 = vpop.permute.xlu0 %2302
        %2304 = vrot.lane.b32.xlu0 %v1905, 64
        %v2305 = vpop.permute.xlu0 %2304
        %2306 = vrot.lane.b32.xlu0 %v1915, 64
        %v2307 = vpop.permute.xlu0 %2306
        %2308 = vrot.lane.b32.xlu0 %v1925, 64
        %v2309 = vpop.permute.xlu0 %2308
        %2310 = vrot.lane.b32.xlu0 %v1935, 64
        %v2311 = vpop.permute.xlu0 %2310
        %2312 = vrot.lane.b32.xlu0 %v1945, 64
        %v2313 = vpop.permute.xlu0 %2312
        %2314 = vrot.lane.b32.xlu0 %v1955, 64
        %v2315 = vpop.permute.xlu0 %2314
        %2316 = vrot.lane.b32.xlu0 %v1965, 64
        %v2317 = vpop.permute.xlu0 %2316
        %2318 = vrot.lane.b32.xlu0 %v1975, 64
        %v2319 = vpop.permute.xlu0 %2318
        %2320 = vrot.lane.b32.xlu0 %v1985, 64
        %v2321 = vpop.permute.xlu0 %2320
        %2322 = vrot.lane.b32.xlu0 %v1995, 64
        %v2323 = vpop.permute.xlu0 %2322
        %2324 = vrot.lane.b32.xlu0 %v2005, 64
        %v2325 = vpop.permute.xlu0 %2324
        %2326 = vrot.lane.b32.xlu0 %v2015, 64
        %v2327 = vpop.permute.xlu0 %2326
        %2328 = vrot.lane.b32.xlu0 %v2025, 64
        %v2329 = vpop.permute.xlu0 %2328
        %2330 = vrot.lane.b32.xlu0 %v2035, 64
        %v2331 = vpop.permute.xlu0 %2330
        %2332 = vrot.lane.b32.xlu0 %v2045, 64
        %v2333 = vpop.permute.xlu0 %2332
        %2334 = vrot.lane.b32.xlu0 %v2055, 64
        %v2335 = vpop.permute.xlu0 %2334
        %2336 = vrot.lane.b32.xlu0 %v2065, 64
        %v2337 = vpop.permute.xlu0 %2336
        %2338 = vrot.lane.b32.xlu0 %v2075, 64
        %v2339 = vpop.permute.xlu0 %2338
        %2340 = vrot.lane.b32.xlu0 %v2085, 64
        %v2341 = vpop.permute.xlu0 %2340
        %2342 = vrot.lane.b32.xlu0 %v2095, 64
        %v2343 = vpop.permute.xlu0 %2342
        %2344 = vrot.lane.b32.xlu0 %v2105, 64
        %v2345 = vpop.permute.xlu0 %2344
        %2346 = vrot.lane.b32.xlu0 %v2115, 64
        %v2347 = vpop.permute.xlu0 %2346
        %2348 = vrot.lane.b32.xlu0 %v2125, 64
        %v2349 = vpop.permute.xlu0 %2348
        %2350 = vrot.lane.b32.xlu0 %v2135, 64
        %v2351 = vpop.permute.xlu0 %2350
        %2352 = vrot.lane.b32.xlu0 %v2145, 64
        %v2353 = vpop.permute.xlu0 %2352
        %2354 = vrot.lane.b32.xlu0 %v2155, 64
        %v2355 = vpop.permute.xlu0 %2354
        %2356 = vrot.lane.b32.xlu0 %v2165, 64
        %v2357 = vpop.permute.xlu0 %2356
        %2358 = vrot.lane.b32.xlu0 %v2175, 64
        %v2359 = vpop.permute.xlu0 %2358
        %2360 = vrot.lane.b32.xlu0 %v2185, 64
        %v2361 = vpop.permute.xlu0 %2360
        %2362 = vrot.lane.b32.xlu0 %v2195, 64
        %v2363 = vpop.permute.xlu0 %2362
        %2364 = vrot.lane.b32.xlu0 %v2205, 64
        %v2365 = vpop.permute.xlu0 %2364
        %2366 = vrot.lane.b32.xlu0 %v2215, 64
        %v2367 = vpop.permute.xlu0 %2366
        %2368 = vrot.lane.b32.xlu0 %v2225, 64
        %v2369 = vpop.permute.xlu0 %2368
        %2370 = vrot.lane.b32.xlu0 %v2235, 64
        %v2371 = vpop.permute.xlu0 %2370
        %2372 = vrot.lane.b32.xlu0 %v2245, 64
        %v2373 = vpop.permute.xlu0 %2372
        %2374 = vrot.lane.b32.xlu0 %v2255, 64
        %v2375 = vpop.permute.xlu0 %2374
        %2376 = vrot.lane.b32.xlu0 %v2265, 64
        %v2377 = vpop.permute.xlu0 %2376
        %2378 = vrot.lane.b32.xlu0 %v2275, 64
        %v2379 = vpop.permute.xlu0 %2378
        %2380 = vrot.lane.b32.xlu0 %v2285, 64
        %v2381 = vpop.permute.xlu0 %2380
        %vm2430 = vcmask 650752
        %2431 = vst.msk [vmem:[#allocation2] sm:$0xf] %vm2430, %v2287
        %2432 = vst.msk [vmem:[#allocation2 + $0x8] sm:$0xf] %vm2430, %v2289
        %2433 = vst.msk [vmem:[#allocation2 + $0x10] sm:$0xf] %vm2430, %v2291
        %2434 = vst.msk [vmem:[#allocation2 + $0x18] sm:$0xf] %vm2430, %v2293
        %2435 = vst.msk [vmem:[#allocation2 + $0x20] sm:$0xf] %vm2430, %v2295
        %2436 = vst.msk [vmem:[#allocation2 + $0x28] sm:$0xf] %vm2430, %v2297
        %2437 = vst.msk [vmem:[#allocation2 + $0x30] sm:$0xf] %vm2430, %v2299
        %2438 = vst.msk [vmem:[#allocation2 + $0x38] sm:$0xf] %vm2430, %v2301
        %2439 = vst.msk [vmem:[#allocation2 + $0x40] sm:$0xf] %vm2430, %v2303
        %2440 = vst.msk [vmem:[#allocation2 + $0x48] sm:$0xf] %vm2430, %v2305
        %2441 = vst.msk [vmem:[#allocation2 + $0x50] sm:$0xf] %vm2430, %v2307
        %2442 = vst.msk [vmem:[#allocation2 + $0x58] sm:$0xf] %vm2430, %v2309
        %2443 = vst.msk [vmem:[#allocation2 + $0x60] sm:$0xf] %vm2430, %v2311
        %2444 = vst.msk [vmem:[#allocation2 + $0x68] sm:$0xf] %vm2430, %v2313
        %2445 = vst.msk [vmem:[#allocation2 + $0x70] sm:$0xf] %vm2430, %v2315
        %2446 = vst.msk [vmem:[#allocation2 + $0x78] sm:$0xf] %vm2430, %v2317
        %2447 = vst.msk [vmem:[#allocation2 + $0x80] sm:$0xf] %vm2430, %v2319
        %2448 = vst.msk [vmem:[#allocation2 + $0x88] sm:$0xf] %vm2430, %v2321
        %2449 = vst.msk [vmem:[#allocation2 + $0x90] sm:$0xf] %vm2430, %v2323
        %2450 = vst.msk [vmem:[#allocation2 + $0x98] sm:$0xf] %vm2430, %v2325
        %2451 = vst.msk [vmem:[#allocation2 + $0xa0] sm:$0xf] %vm2430, %v2327
        %2452 = vst.msk [vmem:[#allocation2 + $0xa8] sm:$0xf] %vm2430, %v2329
        %2453 = vst.msk [vmem:[#allocation2 + $0xb0] sm:$0xf] %vm2430, %v2331
        %2454 = vst.msk [vmem:[#allocation2 + $0xb8] sm:$0xf] %vm2430, %v2333
        %2455 = vst.msk [vmem:[#allocation2 + $0xc0] sm:$0xf] %vm2430, %v2335
        %2456 = vst.msk [vmem:[#allocation2 + $0xc8] sm:$0xf] %vm2430, %v2337
        %2457 = vst.msk [vmem:[#allocation2 + $0xd0] sm:$0xf] %vm2430, %v2339
        %2458 = vst.msk [vmem:[#allocation2 + $0xd8] sm:$0xf] %vm2430, %v2341
        %2459 = vst.msk [vmem:[#allocation2 + $0xe0] sm:$0xf] %vm2430, %v2343
        %2460 = vst.msk [vmem:[#allocation2 + $0xe8] sm:$0xf] %vm2430, %v2345
        %2461 = vst.msk [vmem:[#allocation2 + $0xf0] sm:$0xf] %vm2430, %v2347
        %2462 = vst.msk [vmem:[#allocation2 + $0xf8] sm:$0xf] %vm2430, %v2349
        %2463 = vst.msk [vmem:[#allocation2 + $0x100] sm:$0xf] %vm2430, %v2351
        %2464 = vst.msk [vmem:[#allocation2 + $0x108] sm:$0xf] %vm2430, %v2353
        %2465 = vst.msk [vmem:[#allocation2 + $0x110] sm:$0xf] %vm2430, %v2355
        %2466 = vst.msk [vmem:[#allocation2 + $0x118] sm:$0xf] %vm2430, %v2357
        %2467 = vst.msk [vmem:[#allocation2 + $0x120] sm:$0xf] %vm2430, %v2359
        %2468 = vst.msk [vmem:[#allocation2 + $0x128] sm:$0xf] %vm2430, %v2361
        %2469 = vst.msk [vmem:[#allocation2 + $0x130] sm:$0xf] %vm2430, %v2363
        %2470 = vst.msk [vmem:[#allocation2 + $0x138] sm:$0xf] %vm2430, %v2365
        %2471 = vst.msk [vmem:[#allocation2 + $0x140] sm:$0xf] %vm2430, %v2367
        %2472 = vst.msk [vmem:[#allocation2 + $0x148] sm:$0xf] %vm2430, %v2369
        %2473 = vst.msk [vmem:[#allocation2 + $0x150] sm:$0xf] %vm2430, %v2371
        %2474 = vst.msk [vmem:[#allocation2 + $0x158] sm:$0xf] %vm2430, %v2373
        %2475 = vst.msk [vmem:[#allocation2 + $0x160] sm:$0xf] %vm2430, %v2375
        %2476 = vst.msk [vmem:[#allocation2 + $0x168] sm:$0xf] %vm2430, %v2377
        %2477 = vst.msk [vmem:[#allocation2 + $0x170] sm:$0xf] %vm2430, %v2379
        %2478 = vst.msk [vmem:[#allocation2 + $0x178] sm:$0xf] %vm2430, %v2381
        %v2479 = vld [vmem:[%s196 + $0xc] sm:$0xe]
        %v2480 = vld [vmem:[%s196 + $0x10] sm:$0xf]
        %v2481 = vld [vmem:[%s196 + $0x14] sm:$0xf]
        %v2482 = vld [vmem:[%s196 + $0x18] sm:$0xf]
        %v2483 = vld [vmem:[%s196 + $0x1c] sm:$0xf]
        %v2484 = vld [vmem:[%s196 + $0x20] sm:$0xf]
        %v2485 = vld [vmem:[%s196 + $0x24] sm:$0xf]
        %v2486 = vld [vmem:[%s196 + $0x28] sm:$0xf]
        %v2487 = vld [vmem:[%s196 + $0x2c] sm:$0xf]
        %v2488 = vld [vmem:[%s196 + $0x30] sm:$0xf]
        %v2489 = vld [vmem:[%s196 + $0x34] sm:$0xf]
        %v2490 = vld [vmem:[%s196 + $0x38] sm:$0xf]
        %v2491 = vld [vmem:[%s196 + $0x3c] sm:$0xf]
        %v2492 = vld [vmem:[%s196 + $0x40] sm:$0xf]
        %v2493 = vld [vmem:[%s196 + $0x44] sm:$0xf]
        %v2494 = vld [vmem:[%s196 + $0x48] sm:$0xf]
        %v2495 = vld [vmem:[%s196 + $0x4c] sm:$0xf]
        %v2496 = vld [vmem:[%s196 + $0x50] sm:$0xf]
        %v2497 = vld [vmem:[%s196 + $0x54] sm:$0xf]
        %v2498 = vld [vmem:[%s196 + $0x58] sm:$0xf]
        %v2499 = vld [vmem:[%s196 + $0x5c] sm:$0xf]
        %v2500 = vld [vmem:[%s196 + $0x60] sm:$0xf]
        %v2501 = vld [vmem:[%s196 + $0x64] sm:$0xf]
        %v2502 = vld [vmem:[%s196 + $0x68] sm:$0xf]
        %v2503 = vld [vmem:[%s196 + $0x6c] sm:$0xf]
        %v2504 = vld [vmem:[%s196 + $0x70] sm:$0xf]
        %v2505 = vld [vmem:[%s196 + $0x74] sm:$0xf]
        %v2506 = vld [vmem:[%s196 + $0x78] sm:$0xf]
        %v2507 = vld [vmem:[%s196 + $0x7c] sm:$0xf]
        %v2508 = vld [vmem:[%s196 + $0x80] sm:$0xf]
        %v2509 = vld [vmem:[%s196 + $0x84] sm:$0xf]
        %v2510 = vld [vmem:[%s196 + $0x88] sm:$0xf]
        %v2511 = vld [vmem:[%s196 + $0x8c] sm:$0xf]
        %v2512 = vld [vmem:[%s196 + $0x90] sm:$0xf]
        %v2513 = vld [vmem:[%s196 + $0x94] sm:$0xf]
        %v2514 = vld [vmem:[%s196 + $0x98] sm:$0xf]
        %v2515 = vld [vmem:[%s196 + $0x9c] sm:$0xf]
        %v2516 = vld [vmem:[%s196 + $0xa0] sm:$0xf]
        %v2517 = vld [vmem:[%s196 + $0xa4] sm:$0xf]
        %v2518 = vld [vmem:[%s196 + $0xa8] sm:$0xf]
        %v2519 = vld [vmem:[%s196 + $0xac] sm:$0xf]
        %v2520 = vld [vmem:[%s196 + $0xb0] sm:$0xf]
        %v2521 = vld [vmem:[%s196 + $0xb4] sm:$0xf]
        %v2522 = vld [vmem:[%s196 + $0xb8] sm:$0xf]
        %v2523 = vld [vmem:[%s196 + $0xbc] sm:$0xf]
        %v2524 = vld [vmem:[%s196 + $0xc0] sm:$0xf]
        %v2525 = vld [vmem:[%s196 + $0xc4] sm:$0xf]
        %v2526 = vld [vmem:[%s196 + $0xc8] sm:$0xf]
        %v2527 = vld [vmem:[%s196 + $0xcc] sm:$0x1]
        %v2577 = vrot.slane %v2479, 5
        %v2578 = vrot.slane %v2577, 4
        %v2579 = vrot.slane %v2480, 5
        %v2580 = vsel %vm1125, %v2578, %v2579
        %v2581 = vrot.slane %v2579, 4
        %v2582 = vrot.slane %v2481, 5
        %v2583 = vsel %vm1125, %v2581, %v2582
        %v2584 = vrot.slane %v2582, 4
        %v2585 = vrot.slane %v2482, 5
        %v2586 = vsel %vm1125, %v2584, %v2585
        %v2587 = vrot.slane %v2585, 4
        %v2588 = vrot.slane %v2483, 5
        %v2589 = vsel %vm1125, %v2587, %v2588
        %v2590 = vrot.slane %v2588, 4
        %v2591 = vrot.slane %v2484, 5
        %v2592 = vsel %vm1125, %v2590, %v2591
        %v2593 = vrot.slane %v2591, 4
        %v2594 = vrot.slane %v2485, 5
        %v2595 = vsel %vm1125, %v2593, %v2594
        %v2596 = vrot.slane %v2594, 4
        %v2597 = vrot.slane %v2486, 5
        %v2598 = vsel %vm1125, %v2596, %v2597
        %v2599 = vrot.slane %v2597, 4
        %v2600 = vrot.slane %v2487, 5
        %v2601 = vsel %vm1125, %v2599, %v2600
        %v2602 = vrot.slane %v2600, 4
        %v2603 = vrot.slane %v2488, 5
        %v2604 = vsel %vm1125, %v2602, %v2603
        %v2605 = vrot.slane %v2603, 4
        %v2606 = vrot.slane %v2489, 5
        %v2607 = vsel %vm1125, %v2605, %v2606
        %v2608 = vrot.slane %v2606, 4
        %v2609 = vrot.slane %v2490, 5
        %v2610 = vsel %vm1125, %v2608, %v2609
        %v2611 = vrot.slane %v2609, 4
        %v2612 = vrot.slane %v2491, 5
        %v2613 = vsel %vm1125, %v2611, %v2612
        %v2614 = vrot.slane %v2612, 4
        %v2615 = vrot.slane %v2492, 5
        %v2616 = vsel %vm1125, %v2614, %v2615
        %v2617 = vrot.slane %v2615, 4
        %v2618 = vrot.slane %v2493, 5
        %v2619 = vsel %vm1125, %v2617, %v2618
        %v2620 = vrot.slane %v2618, 4
        %v2621 = vrot.slane %v2494, 5
        %v2622 = vsel %vm1125, %v2620, %v2621
        %v2623 = vrot.slane %v2621, 4
        %v2624 = vrot.slane %v2495, 5
        %v2625 = vsel %vm1125, %v2623, %v2624
        %v2626 = vrot.slane %v2624, 4
        %v2627 = vrot.slane %v2496, 5
        %v2628 = vsel %vm1125, %v2626, %v2627
        %v2629 = vrot.slane %v2627, 4
        %v2630 = vrot.slane %v2497, 5
        %v2631 = vsel %vm1125, %v2629, %v2630
        %v2632 = vrot.slane %v2630, 4
        %v2633 = vrot.slane %v2498, 5
        %v2634 = vsel %vm1125, %v2632, %v2633
        %v2635 = vrot.slane %v2633, 4
        %v2636 = vrot.slane %v2499, 5
        %v2637 = vsel %vm1125, %v2635, %v2636
        %v2638 = vrot.slane %v2636, 4
        %v2639 = vrot.slane %v2500, 5
        %v2640 = vsel %vm1125, %v2638, %v2639
        %v2641 = vrot.slane %v2639, 4
        %v2642 = vrot.slane %v2501, 5
        %v2643 = vsel %vm1125, %v2641, %v2642
        %v2644 = vrot.slane %v2642, 4
        %v2645 = vrot.slane %v2502, 5
        %v2646 = vsel %vm1125, %v2644, %v2645
        %v2647 = vrot.slane %v2645, 4
        %v2648 = vrot.slane %v2503, 5
        %v2649 = vsel %vm1125, %v2647, %v2648
        %v2650 = vrot.slane %v2648, 4
        %v2651 = vrot.slane %v2504, 5
        %v2652 = vsel %vm1125, %v2650, %v2651
        %v2653 = vrot.slane %v2651, 4
        %v2654 = vrot.slane %v2505, 5
        %v2655 = vsel %vm1125, %v2653, %v2654
        %v2656 = vrot.slane %v2654, 4
        %v2657 = vrot.slane %v2506, 5
        %v2658 = vsel %vm1125, %v2656, %v2657
        %v2659 = vrot.slane %v2657, 4
        %v2660 = vrot.slane %v2507, 5
        %v2661 = vsel %vm1125, %v2659, %v2660
        %v2662 = vrot.slane %v2660, 4
        %v2663 = vrot.slane %v2508, 5
        %v2664 = vsel %vm1125, %v2662, %v2663
        %v2665 = vrot.slane %v2663, 4
        %v2666 = vrot.slane %v2509, 5
        %v2667 = vsel %vm1125, %v2665, %v2666
        %v2668 = vrot.slane %v2666, 4
        %v2669 = vrot.slane %v2510, 5
        %v2670 = vsel %vm1125, %v2668, %v2669
        %v2671 = vrot.slane %v2669, 4
        %v2672 = vrot.slane %v2511, 5
        %v2673 = vsel %vm1125, %v2671, %v2672
        %v2674 = vrot.slane %v2672, 4
        %v2675 = vrot.slane %v2512, 5
        %v2676 = vsel %vm1125, %v2674, %v2675
        %v2677 = vrot.slane %v2675, 4
        %v2678 = vrot.slane %v2513, 5
        %v2679 = vsel %vm1125, %v2677, %v2678
        %v2680 = vrot.slane %v2678, 4
        %v2681 = vrot.slane %v2514, 5
        %v2682 = vsel %vm1125, %v2680, %v2681
        %v2683 = vrot.slane %v2681, 4
        %v2684 = vrot.slane %v2515, 5
        %v2685 = vsel %vm1125, %v2683, %v2684
        %v2686 = vrot.slane %v2684, 4
        %v2687 = vrot.slane %v2516, 5
        %v2688 = vsel %vm1125, %v2686, %v2687
        %v2689 = vrot.slane %v2687, 4
        %v2690 = vrot.slane %v2517, 5
        %v2691 = vsel %vm1125, %v2689, %v2690
        %v2692 = vrot.slane %v2690, 4
        %v2693 = vrot.slane %v2518, 5
        %v2694 = vsel %vm1125, %v2692, %v2693
        %v2695 = vrot.slane %v2693, 4
        %v2696 = vrot.slane %v2519, 5
        %v2697 = vsel %vm1125, %v2695, %v2696
        %v2698 = vrot.slane %v2696, 4
        %v2699 = vrot.slane %v2520, 5
        %v2700 = vsel %vm1125, %v2698, %v2699
        %v2701 = vrot.slane %v2699, 4
        %v2702 = vrot.slane %v2521, 5
        %v2703 = vsel %vm1125, %v2701, %v2702
        %v2704 = vrot.slane %v2702, 4
        %v2705 = vrot.slane %v2522, 5
        %v2706 = vsel %vm1125, %v2704, %v2705
        %v2707 = vrot.slane %v2705, 4
        %v2708 = vrot.slane %v2523, 5
        %v2709 = vsel %vm1125, %v2707, %v2708
        %v2710 = vrot.slane %v2708, 4
        %v2711 = vrot.slane %v2524, 5
        %v2712 = vsel %vm1125, %v2710, %v2711
        %v2713 = vrot.slane %v2711, 4
        %v2714 = vrot.slane %v2525, 5
        %v2715 = vsel %vm1125, %v2713, %v2714
        %v2716 = vrot.slane %v2714, 4
        %v2717 = vrot.slane %v2526, 5
        %v2718 = vsel %vm1125, %v2716, %v2717
        %v2719 = vrot.slane %v2717, 4
        %v2720 = vrot.slane %v2527, 5
        %v2721 = vsel %vm1125, %v2719, %v2720
        %2722 = vrot.lane.b32.xlu0 %v2580, 80
        %v2723 = vpop.permute.xlu0 %2722
        %2724 = vrot.lane.b32.xlu0 %v2583, 80
        %v2725 = vpop.permute.xlu0 %2724
        %2726 = vrot.lane.b32.xlu0 %v2586, 80
        %v2727 = vpop.permute.xlu0 %2726
        %2728 = vrot.lane.b32.xlu0 %v2589, 80
        %v2729 = vpop.permute.xlu0 %2728
        %2730 = vrot.lane.b32.xlu0 %v2592, 80
        %v2731 = vpop.permute.xlu0 %2730
        %2732 = vrot.lane.b32.xlu0 %v2595, 80
        %v2733 = vpop.permute.xlu0 %2732
        %2734 = vrot.lane.b32.xlu0 %v2598, 80
        %v2735 = vpop.permute.xlu0 %2734
        %2736 = vrot.lane.b32.xlu0 %v2601, 80
        %v2737 = vpop.permute.xlu0 %2736
        %2738 = vrot.lane.b32.xlu0 %v2604, 80
        %v2739 = vpop.permute.xlu0 %2738
        %2740 = vrot.lane.b32.xlu0 %v2607, 80
        %v2741 = vpop.permute.xlu0 %2740
        %2742 = vrot.lane.b32.xlu0 %v2610, 80
        %v2743 = vpop.permute.xlu0 %2742
        %2744 = vrot.lane.b32.xlu0 %v2613, 80
        %v2745 = vpop.permute.xlu0 %2744
        %2746 = vrot.lane.b32.xlu0 %v2616, 80
        %v2747 = vpop.permute.xlu0 %2746
        %2748 = vrot.lane.b32.xlu0 %v2619, 80
        %v2749 = vpop.permute.xlu0 %2748
        %2750 = vrot.lane.b32.xlu0 %v2622, 80
        %v2751 = vpop.permute.xlu0 %2750
        %2752 = vrot.lane.b32.xlu0 %v2625, 80
        %v2753 = vpop.permute.xlu0 %2752
        %2754 = vrot.lane.b32.xlu0 %v2628, 80
        %v2755 = vpop.permute.xlu0 %2754
        %2756 = vrot.lane.b32.xlu0 %v2631, 80
        %v2757 = vpop.permute.xlu0 %2756
        %2758 = vrot.lane.b32.xlu0 %v2634, 80
        %v2759 = vpop.permute.xlu0 %2758
        %2760 = vrot.lane.b32.xlu0 %v2637, 80
        %v2761 = vpop.permute.xlu0 %2760
        %2762 = vrot.lane.b32.xlu0 %v2640, 80
        %v2763 = vpop.permute.xlu0 %2762
        %2764 = vrot.lane.b32.xlu0 %v2643, 80
        %v2765 = vpop.permute.xlu0 %2764
        %2766 = vrot.lane.b32.xlu0 %v2646, 80
        %v2767 = vpop.permute.xlu0 %2766
        %2768 = vrot.lane.b32.xlu0 %v2649, 80
        %v2769 = vpop.permute.xlu0 %2768
        %2770 = vrot.lane.b32.xlu0 %v2652, 80
        %v2771 = vpop.permute.xlu0 %2770
        %2772 = vrot.lane.b32.xlu0 %v2655, 80
        %v2773 = vpop.permute.xlu0 %2772
        %2774 = vrot.lane.b32.xlu0 %v2658, 80
        %v2775 = vpop.permute.xlu0 %2774
        %2776 = vrot.lane.b32.xlu0 %v2661, 80
        %v2777 = vpop.permute.xlu0 %2776
        %2778 = vrot.lane.b32.xlu0 %v2664, 80
        %v2779 = vpop.permute.xlu0 %2778
        %2780 = vrot.lane.b32.xlu0 %v2667, 80
        %v2781 = vpop.permute.xlu0 %2780
        %2782 = vrot.lane.b32.xlu0 %v2670, 80
        %v2783 = vpop.permute.xlu0 %2782
        %2784 = vrot.lane.b32.xlu0 %v2673, 80
        %v2785 = vpop.permute.xlu0 %2784
        %2786 = vrot.lane.b32.xlu0 %v2676, 80
        %v2787 = vpop.permute.xlu0 %2786
        %2788 = vrot.lane.b32.xlu0 %v2679, 80
        %v2789 = vpop.permute.xlu0 %2788
        %2790 = vrot.lane.b32.xlu0 %v2682, 80
        %v2791 = vpop.permute.xlu0 %2790
        %2792 = vrot.lane.b32.xlu0 %v2685, 80
        %v2793 = vpop.permute.xlu0 %2792
        %2794 = vrot.lane.b32.xlu0 %v2688, 80
        %v2795 = vpop.permute.xlu0 %2794
        %2796 = vrot.lane.b32.xlu0 %v2691, 80
        %v2797 = vpop.permute.xlu0 %2796
        %2798 = vrot.lane.b32.xlu0 %v2694, 80
        %v2799 = vpop.permute.xlu0 %2798
        %2800 = vrot.lane.b32.xlu0 %v2697, 80
        %v2801 = vpop.permute.xlu0 %2800
        %2802 = vrot.lane.b32.xlu0 %v2700, 80
        %v2803 = vpop.permute.xlu0 %2802
        %2804 = vrot.lane.b32.xlu0 %v2703, 80
        %v2805 = vpop.permute.xlu0 %2804
        %2806 = vrot.lane.b32.xlu0 %v2706, 80
        %v2807 = vpop.permute.xlu0 %2806
        %2808 = vrot.lane.b32.xlu0 %v2709, 80
        %v2809 = vpop.permute.xlu0 %2808
        %2810 = vrot.lane.b32.xlu0 %v2712, 80
        %v2811 = vpop.permute.xlu0 %2810
        %2812 = vrot.lane.b32.xlu0 %v2715, 80
        %v2813 = vpop.permute.xlu0 %2812
        %2814 = vrot.lane.b32.xlu0 %v2718, 80
        %v2815 = vpop.permute.xlu0 %2814
        %2816 = vrot.lane.b32.xlu0 %v2721, 80
        %v2817 = vpop.permute.xlu0 %2816
        %vm2866 = vcmask 781952
        %2867 = vst.msk [vmem:[#allocation2] sm:$0xf] %vm2866, %v2723
        %2868 = vst.msk [vmem:[#allocation2 + $0x8] sm:$0xf] %vm2866, %v2725
        %2869 = vst.msk [vmem:[#allocation2 + $0x10] sm:$0xf] %vm2866, %v2727
        %2870 = vst.msk [vmem:[#allocation2 + $0x18] sm:$0xf] %vm2866, %v2729
        %2871 = vst.msk [vmem:[#allocation2 + $0x20] sm:$0xf] %vm2866, %v2731
        %2872 = vst.msk [vmem:[#allocation2 + $0x28] sm:$0xf] %vm2866, %v2733
        %2873 = vst.msk [vmem:[#allocation2 + $0x30] sm:$0xf] %vm2866, %v2735
        %2874 = vst.msk [vmem:[#allocation2 + $0x38] sm:$0xf] %vm2866, %v2737
        %2875 = vst.msk [vmem:[#allocation2 + $0x40] sm:$0xf] %vm2866, %v2739
        %2876 = vst.msk [vmem:[#allocation2 + $0x48] sm:$0xf] %vm2866, %v2741
        %2877 = vst.msk [vmem:[#allocation2 + $0x50] sm:$0xf] %vm2866, %v2743
        %2878 = vst.msk [vmem:[#allocation2 + $0x58] sm:$0xf] %vm2866, %v2745
        %2879 = vst.msk [vmem:[#allocation2 + $0x60] sm:$0xf] %vm2866, %v2747
        %2880 = vst.msk [vmem:[#allocation2 + $0x68] sm:$0xf] %vm2866, %v2749
        %2881 = vst.msk [vmem:[#allocation2 + $0x70] sm:$0xf] %vm2866, %v2751
        %2882 = vst.msk [vmem:[#allocation2 + $0x78] sm:$0xf] %vm2866, %v2753
        %2883 = vst.msk [vmem:[#allocation2 + $0x80] sm:$0xf] %vm2866, %v2755
        %2884 = vst.msk [vmem:[#allocation2 + $0x88] sm:$0xf] %vm2866, %v2757
        %2885 = vst.msk [vmem:[#allocation2 + $0x90] sm:$0xf] %vm2866, %v2759
        %2886 = vst.msk [vmem:[#allocation2 + $0x98] sm:$0xf] %vm2866, %v2761
        %2887 = vst.msk [vmem:[#allocation2 + $0xa0] sm:$0xf] %vm2866, %v2763
        %2888 = vst.msk [vmem:[#allocation2 + $0xa8] sm:$0xf] %vm2866, %v2765
        %2889 = vst.msk [vmem:[#allocation2 + $0xb0] sm:$0xf] %vm2866, %v2767
        %2890 = vst.msk [vmem:[#allocation2 + $0xb8] sm:$0xf] %vm2866, %v2769
        %2891 = vst.msk [vmem:[#allocation2 + $0xc0] sm:$0xf] %vm2866, %v2771
        %2892 = vst.msk [vmem:[#allocation2 + $0xc8] sm:$0xf] %vm2866, %v2773
        %2893 = vst.msk [vmem:[#allocation2 + $0xd0] sm:$0xf] %vm2866, %v2775
        %2894 = vst.msk [vmem:[#allocation2 + $0xd8] sm:$0xf] %vm2866, %v2777
        %2895 = vst.msk [vmem:[#allocation2 + $0xe0] sm:$0xf] %vm2866, %v2779
        %2896 = vst.msk [vmem:[#allocation2 + $0xe8] sm:$0xf] %vm2866, %v2781
        %2897 = vst.msk [vmem:[#allocation2 + $0xf0] sm:$0xf] %vm2866, %v2783
        %2898 = vst.msk [vmem:[#allocation2 + $0xf8] sm:$0xf] %vm2866, %v2785
        %2899 = vst.msk [vmem:[#allocation2 + $0x100] sm:$0xf] %vm2866, %v2787
        %2900 = vst.msk [vmem:[#allocation2 + $0x108] sm:$0xf] %vm2866, %v2789
        %2901 = vst.msk [vmem:[#allocation2 + $0x110] sm:$0xf] %vm2866, %v2791
        %2902 = vst.msk [vmem:[#allocation2 + $0x118] sm:$0xf] %vm2866, %v2793
        %2903 = vst.msk [vmem:[#allocation2 + $0x120] sm:$0xf] %vm2866, %v2795
        %2904 = vst.msk [vmem:[#allocation2 + $0x128] sm:$0xf] %vm2866, %v2797
        %2905 = vst.msk [vmem:[#allocation2 + $0x130] sm:$0xf] %vm2866, %v2799
        %2906 = vst.msk [vmem:[#allocation2 + $0x138] sm:$0xf] %vm2866, %v2801
        %2907 = vst.msk [vmem:[#allocation2 + $0x140] sm:$0xf] %vm2866, %v2803
        %2908 = vst.msk [vmem:[#allocation2 + $0x148] sm:$0xf] %vm2866, %v2805
        %2909 = vst.msk [vmem:[#allocation2 + $0x150] sm:$0xf] %vm2866, %v2807
        %2910 = vst.msk [vmem:[#allocation2 + $0x158] sm:$0xf] %vm2866, %v2809
        %2911 = vst.msk [vmem:[#allocation2 + $0x160] sm:$0xf] %vm2866, %v2811
        %2912 = vst.msk [vmem:[#allocation2 + $0x168] sm:$0xf] %vm2866, %v2813
        %2913 = vst.msk [vmem:[#allocation2 + $0x170] sm:$0xf] %vm2866, %v2815
        %2914 = vst.msk [vmem:[#allocation2 + $0x178] sm:$0xf] %vm2866, %v2817
        %v2915 = vld [vmem:[%s196 + $0x18] sm:$0xf]
        %v2916 = vld [vmem:[%s196 + $0x1c] sm:$0xf]
        %v2917 = vld [vmem:[%s196 + $0x20] sm:$0xf]
        %v2918 = vld [vmem:[%s196 + $0x24] sm:$0xf]
        %v2919 = vld [vmem:[%s196 + $0x28] sm:$0xf]
        %v2920 = vld [vmem:[%s196 + $0x2c] sm:$0xf]
        %v2921 = vld [vmem:[%s196 + $0x30] sm:$0xf]
        %v2922 = vld [vmem:[%s196 + $0x34] sm:$0xf]
        %v2923 = vld [vmem:[%s196 + $0x38] sm:$0xf]
        %v2924 = vld [vmem:[%s196 + $0x3c] sm:$0xf]
        %v2925 = vld [vmem:[%s196 + $0x40] sm:$0xf]
        %v2926 = vld [vmem:[%s196 + $0x44] sm:$0xf]
        %v2927 = vld [vmem:[%s196 + $0x48] sm:$0xf]
        %v2928 = vld [vmem:[%s196 + $0x4c] sm:$0xf]
        %v2929 = vld [vmem:[%s196 + $0x50] sm:$0xf]
        %v2930 = vld [vmem:[%s196 + $0x54] sm:$0xf]
        %v2931 = vld [vmem:[%s196 + $0x58] sm:$0xf]
        %v2932 = vld [vmem:[%s196 + $0x5c] sm:$0xf]
        %v2933 = vld [vmem:[%s196 + $0x60] sm:$0xf]
        %v2934 = vld [vmem:[%s196 + $0x64] sm:$0xf]
        %v2935 = vld [vmem:[%s196 + $0x68] sm:$0xf]
        %v2936 = vld [vmem:[%s196 + $0x6c] sm:$0xf]
        %v2937 = vld [vmem:[%s196 + $0x70] sm:$0xf]
        %v2938 = vld [vmem:[%s196 + $0x74] sm:$0xf]
        %v2939 = vld [vmem:[%s196 + $0x78] sm:$0xf]
        %v2940 = vld [vmem:[%s196 + $0x7c] sm:$0xf]
        %v2941 = vld [vmem:[%s196 + $0x80] sm:$0xf]
        %v2942 = vld [vmem:[%s196 + $0x84] sm:$0xf]
        %v2943 = vld [vmem:[%s196 + $0x88] sm:$0xf]
        %v2944 = vld [vmem:[%s196 + $0x8c] sm:$0xf]
        %v2945 = vld [vmem:[%s196 + $0x90] sm:$0xf]
        %v2946 = vld [vmem:[%s196 + $0x94] sm:$0xf]
        %v2947 = vld [vmem:[%s196 + $0x98] sm:$0xf]
        %v2948 = vld [vmem:[%s196 + $0x9c] sm:$0xf]
        %v2949 = vld [vmem:[%s196 + $0xa0] sm:$0xf]
        %v2950 = vld [vmem:[%s196 + $0xa4] sm:$0xf]
        %v2951 = vld [vmem:[%s196 + $0xa8] sm:$0xf]
        %v2952 = vld [vmem:[%s196 + $0xac] sm:$0xf]
        %v2953 = vld [vmem:[%s196 + $0xb0] sm:$0xf]
        %v2954 = vld [vmem:[%s196 + $0xb4] sm:$0xf]
        %v2955 = vld [vmem:[%s196 + $0xb8] sm:$0xf]
        %v2956 = vld [vmem:[%s196 + $0xbc] sm:$0xf]
        %v2957 = vld [vmem:[%s196 + $0xc0] sm:$0xf]
        %v2958 = vld [vmem:[%s196 + $0xc4] sm:$0xf]
        %v2959 = vld [vmem:[%s196 + $0xc8] sm:$0xf]
        %v2960 = vld [vmem:[%s196 + $0xcc] sm:$0xf]
        %v2961 = vld [vmem:[%s196 + $0xd0] sm:$0xf]
        %v2962 = vld [vmem:[%s196 + $0xd4] sm:$0xf]
        %3011 = vrot.lane.b32.xlu0 %v2915, 96
        %v3012 = vpop.permute.xlu0 %3011
        %3013 = vrot.lane.b32.xlu0 %v2916, 96
        %v3014 = vpop.permute.xlu0 %3013
        %3015 = vrot.lane.b32.xlu0 %v2917, 96
        %v3016 = vpop.permute.xlu0 %3015
        %3017 = vrot.lane.b32.xlu0 %v2918, 96
        %v3018 = vpop.permute.xlu0 %3017
        %3019 = vrot.lane.b32.xlu0 %v2919, 96
        %v3020 = vpop.permute.xlu0 %3019
        %3021 = vrot.lane.b32.xlu0 %v2920, 96
        %v3022 = vpop.permute.xlu0 %3021
        %3023 = vrot.lane.b32.xlu0 %v2921, 96
        %v3024 = vpop.permute.xlu0 %3023
        %3025 = vrot.lane.b32.xlu0 %v2922, 96
        %v3026 = vpop.permute.xlu0 %3025
        %3027 = vrot.lane.b32.xlu0 %v2923, 96
        %v3028 = vpop.permute.xlu0 %3027
        %3029 = vrot.lane.b32.xlu0 %v2924, 96
        %v3030 = vpop.permute.xlu0 %3029
        %3031 = vrot.lane.b32.xlu0 %v2925, 96
        %v3032 = vpop.permute.xlu0 %3031
        %3033 = vrot.lane.b32.xlu0 %v2926, 96
        %v3034 = vpop.permute.xlu0 %3033
        %3035 = vrot.lane.b32.xlu0 %v2927, 96
        %v3036 = vpop.permute.xlu0 %3035
        %3037 = vrot.lane.b32.xlu0 %v2928, 96
        %v3038 = vpop.permute.xlu0 %3037
        %3039 = vrot.lane.b32.xlu0 %v2929, 96
        %v3040 = vpop.permute.xlu0 %3039
        %3041 = vrot.lane.b32.xlu0 %v2930, 96
        %v3042 = vpop.permute.xlu0 %3041
        %3043 = vrot.lane.b32.xlu0 %v2931, 96
        %v3044 = vpop.permute.xlu0 %3043
        %3045 = vrot.lane.b32.xlu0 %v2932, 96
        %v3046 = vpop.permute.xlu0 %3045
        %3047 = vrot.lane.b32.xlu0 %v2933, 96
        %v3048 = vpop.permute.xlu0 %3047
        %3049 = vrot.lane.b32.xlu0 %v2934, 96
        %v3050 = vpop.permute.xlu0 %3049
        %3051 = vrot.lane.b32.xlu0 %v2935, 96
        %v3052 = vpop.permute.xlu0 %3051
        %3053 = vrot.lane.b32.xlu0 %v2936, 96
        %v3054 = vpop.permute.xlu0 %3053
        %3055 = vrot.lane.b32.xlu0 %v2937, 96
        %v3056 = vpop.permute.xlu0 %3055
        %3057 = vrot.lane.b32.xlu0 %v2938, 96
        %v3058 = vpop.permute.xlu0 %3057
        %3059 = vrot.lane.b32.xlu0 %v2939, 96
        %v3060 = vpop.permute.xlu0 %3059
        %3061 = vrot.lane.b32.xlu0 %v2940, 96
        %v3062 = vpop.permute.xlu0 %3061
        %3063 = vrot.lane.b32.xlu0 %v2941, 96
        %v3064 = vpop.permute.xlu0 %3063
        %3065 = vrot.lane.b32.xlu0 %v2942, 96
        %v3066 = vpop.permute.xlu0 %3065
        %3067 = vrot.lane.b32.xlu0 %v2943, 96
        %v3068 = vpop.permute.xlu0 %3067
        %3069 = vrot.lane.b32.xlu0 %v2944, 96
        %v3070 = vpop.permute.xlu0 %3069
        %3071 = vrot.lane.b32.xlu0 %v2945, 96
        %v3072 = vpop.permute.xlu0 %3071
        %3073 = vrot.lane.b32.xlu0 %v2946, 96
        %v3074 = vpop.permute.xlu0 %3073
        %3075 = vrot.lane.b32.xlu0 %v2947, 96
        %v3076 = vpop.permute.xlu0 %3075
        %3077 = vrot.lane.b32.xlu0 %v2948, 96
        %v3078 = vpop.permute.xlu0 %3077
        %3079 = vrot.lane.b32.xlu0 %v2949, 96
        %v3080 = vpop.permute.xlu0 %3079
        %3081 = vrot.lane.b32.xlu0 %v2950, 96
        %v3082 = vpop.permute.xlu0 %3081
        %3083 = vrot.lane.b32.xlu0 %v2951, 96
        %v3084 = vpop.permute.xlu0 %3083
        %3085 = vrot.lane.b32.xlu0 %v2952, 96
        %v3086 = vpop.permute.xlu0 %3085
        %3087 = vrot.lane.b32.xlu0 %v2953, 96
        %v3088 = vpop.permute.xlu0 %3087
        %3089 = vrot.lane.b32.xlu0 %v2954, 96
        %v3090 = vpop.permute.xlu0 %3089
        %3091 = vrot.lane.b32.xlu0 %v2955, 96
        %v3092 = vpop.permute.xlu0 %3091
        %3093 = vrot.lane.b32.xlu0 %v2956, 96
        %v3094 = vpop.permute.xlu0 %3093
        %3095 = vrot.lane.b32.xlu0 %v2957, 96
        %v3096 = vpop.permute.xlu0 %3095
        %3097 = vrot.lane.b32.xlu0 %v2958, 96
        %v3098 = vpop.permute.xlu0 %3097
        %3099 = vrot.lane.b32.xlu0 %v2959, 96
        %v3100 = vpop.permute.xlu0 %3099
        %3101 = vrot.lane.b32.xlu0 %v2960, 96
        %v3102 = vpop.permute.xlu0 %3101
        %3103 = vrot.lane.b32.xlu0 %v2961, 96
        %v3104 = vpop.permute.xlu0 %3103
        %3105 = vrot.lane.b32.xlu0 %v2962, 96
        %v3106 = vpop.permute.xlu0 %3105
        %vm3155 = vcmask 913152
        %3156 = vst.msk [vmem:[#allocation2] sm:$0xf] %vm3155, %v3012
        %3157 = vst.msk [vmem:[#allocation2 + $0x8] sm:$0xf] %vm3155, %v3014
        %3158 = vst.msk [vmem:[#allocation2 + $0x10] sm:$0xf] %vm3155, %v3016
        %3159 = vst.msk [vmem:[#allocation2 + $0x18] sm:$0xf] %vm3155, %v3018
        %3160 = vst.msk [vmem:[#allocation2 + $0x20] sm:$0xf] %vm3155, %v3020
        %3161 = vst.msk [vmem:[#allocation2 + $0x28] sm:$0xf] %vm3155, %v3022
        %3162 = vst.msk [vmem:[#allocation2 + $0x30] sm:$0xf] %vm3155, %v3024
        %3163 = vst.msk [vmem:[#allocation2 + $0x38] sm:$0xf] %vm3155, %v3026
        %3164 = vst.msk [vmem:[#allocation2 + $0x40] sm:$0xf] %vm3155, %v3028
        %3165 = vst.msk [vmem:[#allocation2 + $0x48] sm:$0xf] %vm3155, %v3030
        %3166 = vst.msk [vmem:[#allocation2 + $0x50] sm:$0xf] %vm3155, %v3032
        %3167 = vst.msk [vmem:[#allocation2 + $0x58] sm:$0xf] %vm3155, %v3034
        %3168 = vst.msk [vmem:[#allocation2 + $0x60] sm:$0xf] %vm3155, %v3036
        %3169 = vst.msk [vmem:[#allocation2 + $0x68] sm:$0xf] %vm3155, %v3038
        %3170 = vst.msk [vmem:[#allocation2 + $0x70] sm:$0xf] %vm3155, %v3040
        %3171 = vst.msk [vmem:[#allocation2 + $0x78] sm:$0xf] %vm3155, %v3042
        %3172 = vst.msk [vmem:[#allocation2 + $0x80] sm:$0xf] %vm3155, %v3044
        %3173 = vst.msk [vmem:[#allocation2 + $0x88] sm:$0xf] %vm3155, %v3046
        %3174 = vst.msk [vmem:[#allocation2 + $0x90] sm:$0xf] %vm3155, %v3048
        %3175 = vst.msk [vmem:[#allocation2 + $0x98] sm:$0xf] %vm3155, %v3050
        %3176 = vst.msk [vmem:[#allocation2 + $0xa0] sm:$0xf] %vm3155, %v3052
        %3177 = vst.msk [vmem:[#allocation2 + $0xa8] sm:$0xf] %vm3155, %v3054
        %3178 = vst.msk [vmem:[#allocation2 + $0xb0] sm:$0xf] %vm3155, %v3056
        %3179 = vst.msk [vmem:[#allocation2 + $0xb8] sm:$0xf] %vm3155, %v3058
        %3180 = vst.msk [vmem:[#allocation2 + $0xc0] sm:$0xf] %vm3155, %v3060
        %3181 = vst.msk [vmem:[#allocation2 + $0xc8] sm:$0xf] %vm3155, %v3062
        %3182 = vst.msk [vmem:[#allocation2 + $0xd0] sm:$0xf] %vm3155, %v3064
        %3183 = vst.msk [vmem:[#allocation2 + $0xd8] sm:$0xf] %vm3155, %v3066
        %3184 = vst.msk [vmem:[#allocation2 + $0xe0] sm:$0xf] %vm3155, %v3068
        %3185 = vst.msk [vmem:[#allocation2 + $0xe8] sm:$0xf] %vm3155, %v3070
        %3186 = vst.msk [vmem:[#allocation2 + $0xf0] sm:$0xf] %vm3155, %v3072
        %3187 = vst.msk [vmem:[#allocation2 + $0xf8] sm:$0xf] %vm3155, %v3074
        %3188 = vst.msk [vmem:[#allocation2 + $0x100] sm:$0xf] %vm3155, %v3076
        %3189 = vst.msk [vmem:[#allocation2 + $0x108] sm:$0xf] %vm3155, %v3078
        %3190 = vst.msk [vmem:[#allocation2 + $0x110] sm:$0xf] %vm3155, %v3080
        %3191 = vst.msk [vmem:[#allocation2 + $0x118] sm:$0xf] %vm3155, %v3082
        %3192 = vst.msk [vmem:[#allocation2 + $0x120] sm:$0xf] %vm3155, %v3084
        %3193 = vst.msk [vmem:[#allocation2 + $0x128] sm:$0xf] %vm3155, %v3086
        %3194 = vst.msk [vmem:[#allocation2 + $0x130] sm:$0xf] %vm3155, %v3088
        %3195 = vst.msk [vmem:[#allocation2 + $0x138] sm:$0xf] %vm3155, %v3090
        %3196 = vst.msk [vmem:[#allocation2 + $0x140] sm:$0xf] %vm3155, %v3092
        %3197 = vst.msk [vmem:[#allocation2 + $0x148] sm:$0xf] %vm3155, %v3094
        %3198 = vst.msk [vmem:[#allocation2 + $0x150] sm:$0xf] %vm3155, %v3096
        %3199 = vst.msk [vmem:[#allocation2 + $0x158] sm:$0xf] %vm3155, %v3098
        %3200 = vst.msk [vmem:[#allocation2 + $0x160] sm:$0xf] %vm3155, %v3100
        %3201 = vst.msk [vmem:[#allocation2 + $0x168] sm:$0xf] %vm3155, %v3102
        %3202 = vst.msk [vmem:[#allocation2 + $0x170] sm:$0xf] %vm3155, %v3104
        %3203 = vst.msk [vmem:[#allocation2 + $0x178] sm:$0xf] %vm3155, %v3106
        %v3204 = vld [vmem:[%s196 + $0x18] sm:$0xf]
        %v3205 = vld [vmem:[%s196 + $0x1c] sm:$0xf]
        %v3206 = vld [vmem:[%s196 + $0x20] sm:$0xf]
        %v3207 = vld [vmem:[%s196 + $0x24] sm:$0xf]
        %v3208 = vld [vmem:[%s196 + $0x28] sm:$0xf]
        %v3209 = vld [vmem:[%s196 + $0x2c] sm:$0xf]
        %v3210 = vld [vmem:[%s196 + $0x30] sm:$0xf]
        %v3211 = vld [vmem:[%s196 + $0x34] sm:$0xf]
        %v3212 = vld [vmem:[%s196 + $0x38] sm:$0xf]
        %v3213 = vld [vmem:[%s196 + $0x3c] sm:$0xf]
        %v3214 = vld [vmem:[%s196 + $0x40] sm:$0xf]
        %v3215 = vld [vmem:[%s196 + $0x44] sm:$0xf]
        %v3216 = vld [vmem:[%s196 + $0x48] sm:$0xf]
        %v3217 = vld [vmem:[%s196 + $0x4c] sm:$0xf]
        %v3218 = vld [vmem:[%s196 + $0x50] sm:$0xf]
        %v3219 = vld [vmem:[%s196 + $0x54] sm:$0xf]
        %v3220 = vld [vmem:[%s196 + $0x58] sm:$0xf]
        %v3221 = vld [vmem:[%s196 + $0x5c] sm:$0xf]
        %v3222 = vld [vmem:[%s196 + $0x60] sm:$0xf]
        %v3223 = vld [vmem:[%s196 + $0x64] sm:$0xf]
        %v3224 = vld [vmem:[%s196 + $0x68] sm:$0xf]
        %v3225 = vld [vmem:[%s196 + $0x6c] sm:$0xf]
        %v3226 = vld [vmem:[%s196 + $0x70] sm:$0xf]
        %v3227 = vld [vmem:[%s196 + $0x74] sm:$0xf]
        %v3228 = vld [vmem:[%s196 + $0x78] sm:$0xf]
        %v3229 = vld [vmem:[%s196 + $0x7c] sm:$0xf]
        %v3230 = vld [vmem:[%s196 + $0x80] sm:$0xf]
        %v3231 = vld [vmem:[%s196 + $0x84] sm:$0xf]
        %v3232 = vld [vmem:[%s196 + $0x88] sm:$0xf]
        %v3233 = vld [vmem:[%s196 + $0x8c] sm:$0xf]
        %v3234 = vld [vmem:[%s196 + $0x90] sm:$0xf]
        %v3235 = vld [vmem:[%s196 + $0x94] sm:$0xf]
        %v3236 = vld [vmem:[%s196 + $0x98] sm:$0xf]
        %v3237 = vld [vmem:[%s196 + $0x9c] sm:$0xf]
        %v3238 = vld [vmem:[%s196 + $0xa0] sm:$0xf]
        %v3239 = vld [vmem:[%s196 + $0xa4] sm:$0xf]
        %v3240 = vld [vmem:[%s196 + $0xa8] sm:$0xf]
        %v3241 = vld [vmem:[%s196 + $0xac] sm:$0xf]
        %v3242 = vld [vmem:[%s196 + $0xb0] sm:$0xf]
        %v3243 = vld [vmem:[%s196 + $0xb4] sm:$0xf]
        %v3244 = vld [vmem:[%s196 + $0xb8] sm:$0xf]
        %v3245 = vld [vmem:[%s196 + $0xbc] sm:$0xf]
        %v3246 = vld [vmem:[%s196 + $0xc0] sm:$0xf]
        %v3247 = vld [vmem:[%s196 + $0xc4] sm:$0xf]
        %v3248 = vld [vmem:[%s196 + $0xc8] sm:$0xf]
        %v3249 = vld [vmem:[%s196 + $0xcc] sm:$0xf]
        %v3250 = vld [vmem:[%s196 + $0xd0] sm:$0xf]
        %v3251 = vld [vmem:[%s196 + $0xd4] sm:$0xf]
        %v3252 = vld [vmem:[%s196 + $0xd8] sm:$0x1]
        %v3254 = vshrl.u32 %v3204, 16
        %v3256 = vrot.slane %v3254, 4
        %v3257 = vshll.u32 %v3204, 16
        %v3259 = vrot.slane %v3257, 5
        %v3260 = vor.u32 %v3256, %v3259
        %v3261 = vrot.slane %v3260, 4
        %v3263 = vshll.u32 %v3205, 16
        %v3265 = vrot.slane %v3263, 5
        %v3266 = vsel %vm347, %v3261, %v3265
        %v3267 = vshrl.u32 %v3205, 16
        %v3269 = vrot.slane %v3267, 4
        %v3270 = vor.u32 %v3269, %v3265
        %v3271 = vrot.slane %v3270, 4
        %v3273 = vshll.u32 %v3206, 16
        %v3275 = vrot.slane %v3273, 5
        %v3276 = vsel %vm347, %v3271, %v3275
        %v3277 = vshrl.u32 %v3206, 16
        %v3279 = vrot.slane %v3277, 4
        %v3280 = vor.u32 %v3279, %v3275
        %v3281 = vrot.slane %v3280, 4
        %v3283 = vshll.u32 %v3207, 16
        %v3285 = vrot.slane %v3283, 5
        %v3286 = vsel %vm347, %v3281, %v3285
        %v3287 = vshrl.u32 %v3207, 16
        %v3289 = vrot.slane %v3287, 4
        %v3290 = vor.u32 %v3289, %v3285
        %v3291 = vrot.slane %v3290, 4
        %v3293 = vshll.u32 %v3208, 16
        %v3295 = vrot.slane %v3293, 5
        %v3296 = vsel %vm347, %v3291, %v3295
        %v3297 = vshrl.u32 %v3208, 16
        %v3299 = vrot.slane %v3297, 4
        %v3300 = vor.u32 %v3299, %v3295
        %v3301 = vrot.slane %v3300, 4
        %v3303 = vshll.u32 %v3209, 16
        %v3305 = vrot.slane %v3303, 5
        %v3306 = vsel %vm347, %v3301, %v3305
        %v3307 = vshrl.u32 %v3209, 16
        %v3309 = vrot.slane %v3307, 4
        %v3310 = vor.u32 %v3309, %v3305
        %v3311 = vrot.slane %v3310, 4
        %v3313 = vshll.u32 %v3210, 16
        %v3315 = vrot.slane %v3313, 5
        %v3316 = vsel %vm347, %v3311, %v3315
        %v3317 = vshrl.u32 %v3210, 16
        %v3319 = vrot.slane %v3317, 4
        %v3320 = vor.u32 %v3319, %v3315
        %v3321 = vrot.slane %v3320, 4
        %v3323 = vshll.u32 %v3211, 16
        %v3325 = vrot.slane %v3323, 5
        %v3326 = vsel %vm347, %v3321, %v3325
        %v3327 = vshrl.u32 %v3211, 16
        %v3329 = vrot.slane %v3327, 4
        %v3330 = vor.u32 %v3329, %v3325
        %v3331 = vrot.slane %v3330, 4
        %v3333 = vshll.u32 %v3212, 16
        %v3335 = vrot.slane %v3333, 5
        %v3336 = vsel %vm347, %v3331, %v3335
        %v3337 = vshrl.u32 %v3212, 16
        %v3339 = vrot.slane %v3337, 4
        %v3340 = vor.u32 %v3339, %v3335
        %v3341 = vrot.slane %v3340, 4
        %v3343 = vshll.u32 %v3213, 16
        %v3345 = vrot.slane %v3343, 5
        %v3346 = vsel %vm347, %v3341, %v3345
        %v3347 = vshrl.u32 %v3213, 16
        %v3349 = vrot.slane %v3347, 4
        %v3350 = vor.u32 %v3349, %v3345
        %v3351 = vrot.slane %v3350, 4
        %v3353 = vshll.u32 %v3214, 16
        %v3355 = vrot.slane %v3353, 5
        %v3356 = vsel %vm347, %v3351, %v3355
        %v3357 = vshrl.u32 %v3214, 16
        %v3359 = vrot.slane %v3357, 4
        %v3360 = vor.u32 %v3359, %v3355
        %v3361 = vrot.slane %v3360, 4
        %v3363 = vshll.u32 %v3215, 16
        %v3365 = vrot.slane %v3363, 5
        %v3366 = vsel %vm347, %v3361, %v3365
        %v3367 = vshrl.u32 %v3215, 16
        %v3369 = vrot.slane %v3367, 4
        %v3370 = vor.u32 %v3369, %v3365
        %v3371 = vrot.slane %v3370, 4
        %v3373 = vshll.u32 %v3216, 16
        %v3375 = vrot.slane %v3373, 5
        %v3376 = vsel %vm347, %v3371, %v3375
        %v3377 = vshrl.u32 %v3216, 16
        %v3379 = vrot.slane %v3377, 4
        %v3380 = vor.u32 %v3379, %v3375
        %v3381 = vrot.slane %v3380, 4
        %v3383 = vshll.u32 %v3217, 16
        %v3385 = vrot.slane %v3383, 5
        %v3386 = vsel %vm347, %v3381, %v3385
        %v3387 = vshrl.u32 %v3217, 16
        %v3389 = vrot.slane %v3387, 4
        %v3390 = vor.u32 %v3389, %v3385
        %v3391 = vrot.slane %v3390, 4
        %v3393 = vshll.u32 %v3218, 16
        %v3395 = vrot.slane %v3393, 5
        %v3396 = vsel %vm347, %v3391, %v3395
        %v3397 = vshrl.u32 %v3218, 16
        %v3399 = vrot.slane %v3397, 4
        %v3400 = vor.u32 %v3399, %v3395
        %v3401 = vrot.slane %v3400, 4
        %v3403 = vshll.u32 %v3219, 16
        %v3405 = vrot.slane %v3403, 5
        %v3406 = vsel %vm347, %v3401, %v3405
        %v3407 = vshrl.u32 %v3219, 16
        %v3409 = vrot.slane %v3407, 4
        %v3410 = vor.u32 %v3409, %v3405
        %v3411 = vrot.slane %v3410, 4
        %v3413 = vshll.u32 %v3220, 16
        %v3415 = vrot.slane %v3413, 5
        %v3416 = vsel %vm347, %v3411, %v3415
        %v3417 = vshrl.u32 %v3220, 16
        %v3419 = vrot.slane %v3417, 4
        %v3420 = vor.u32 %v3419, %v3415
        %v3421 = vrot.slane %v3420, 4
        %v3423 = vshll.u32 %v3221, 16
        %v3425 = vrot.slane %v3423, 5
        %v3426 = vsel %vm347, %v3421, %v3425
        %v3427 = vshrl.u32 %v3221, 16
        %v3429 = vrot.slane %v3427, 4
        %v3430 = vor.u32 %v3429, %v3425
        %v3431 = vrot.slane %v3430, 4
        %v3433 = vshll.u32 %v3222, 16
        %v3435 = vrot.slane %v3433, 5
        %v3436 = vsel %vm347, %v3431, %v3435
        %v3437 = vshrl.u32 %v3222, 16
        %v3439 = vrot.slane %v3437, 4
        %v3440 = vor.u32 %v3439, %v3435
        %v3441 = vrot.slane %v3440, 4
        %v3443 = vshll.u32 %v3223, 16
        %v3445 = vrot.slane %v3443, 5
        %v3446 = vsel %vm347, %v3441, %v3445
        %v3447 = vshrl.u32 %v3223, 16
        %v3449 = vrot.slane %v3447, 4
        %v3450 = vor.u32 %v3449, %v3445
        %v3451 = vrot.slane %v3450, 4
        %v3453 = vshll.u32 %v3224, 16
        %v3455 = vrot.slane %v3453, 5
        %v3456 = vsel %vm347, %v3451, %v3455
        %v3457 = vshrl.u32 %v3224, 16
        %v3459 = vrot.slane %v3457, 4
        %v3460 = vor.u32 %v3459, %v3455
        %v3461 = vrot.slane %v3460, 4
        %v3463 = vshll.u32 %v3225, 16
        %v3465 = vrot.slane %v3463, 5
        %v3466 = vsel %vm347, %v3461, %v3465
        %v3467 = vshrl.u32 %v3225, 16
        %v3469 = vrot.slane %v3467, 4
        %v3470 = vor.u32 %v3469, %v3465
        %v3471 = vrot.slane %v3470, 4
        %v3473 = vshll.u32 %v3226, 16
        %v3475 = vrot.slane %v3473, 5
        %v3476 = vsel %vm347, %v3471, %v3475
        %v3477 = vshrl.u32 %v3226, 16
        %v3479 = vrot.slane %v3477, 4
        %v3480 = vor.u32 %v3479, %v3475
        %v3481 = vrot.slane %v3480, 4
        %v3483 = vshll.u32 %v3227, 16
        %v3485 = vrot.slane %v3483, 5
        %v3486 = vsel %vm347, %v3481, %v3485
        %v3487 = vshrl.u32 %v3227, 16
        %v3489 = vrot.slane %v3487, 4
        %v3490 = vor.u32 %v3489, %v3485
        %v3491 = vrot.slane %v3490, 4
        %v3493 = vshll.u32 %v3228, 16
        %v3495 = vrot.slane %v3493, 5
        %v3496 = vsel %vm347, %v3491, %v3495
        %v3497 = vshrl.u32 %v3228, 16
        %v3499 = vrot.slane %v3497, 4
        %v3500 = vor.u32 %v3499, %v3495
        %v3501 = vrot.slane %v3500, 4
        %v3503 = vshll.u32 %v3229, 16
        %v3505 = vrot.slane %v3503, 5
        %v3506 = vsel %vm347, %v3501, %v3505
        %v3507 = vshrl.u32 %v3229, 16
        %v3509 = vrot.slane %v3507, 4
        %v3510 = vor.u32 %v3509, %v3505
        %v3511 = vrot.slane %v3510, 4
        %v3513 = vshll.u32 %v3230, 16
        %v3515 = vrot.slane %v3513, 5
        %v3516 = vsel %vm347, %v3511, %v3515
        %v3517 = vshrl.u32 %v3230, 16
        %v3519 = vrot.slane %v3517, 4
        %v3520 = vor.u32 %v3519, %v3515
        %v3521 = vrot.slane %v3520, 4
        %v3523 = vshll.u32 %v3231, 16
        %v3525 = vrot.slane %v3523, 5
        %v3526 = vsel %vm347, %v3521, %v3525
        %v3527 = vshrl.u32 %v3231, 16
        %v3529 = vrot.slane %v3527, 4
        %v3530 = vor.u32 %v3529, %v3525
        %v3531 = vrot.slane %v3530, 4
        %v3533 = vshll.u32 %v3232, 16
        %v3535 = vrot.slane %v3533, 5
        %v3536 = vsel %vm347, %v3531, %v3535
        %v3537 = vshrl.u32 %v3232, 16
        %v3539 = vrot.slane %v3537, 4
        %v3540 = vor.u32 %v3539, %v3535
        %v3541 = vrot.slane %v3540, 4
        %v3543 = vshll.u32 %v3233, 16
        %v3545 = vrot.slane %v3543, 5
        %v3546 = vsel %vm347, %v3541, %v3545
        %v3547 = vshrl.u32 %v3233, 16
        %v3549 = vrot.slane %v3547, 4
        %v3550 = vor.u32 %v3549, %v3545
        %v3551 = vrot.slane %v3550, 4
        %v3553 = vshll.u32 %v3234, 16
        %v3555 = vrot.slane %v3553, 5
        %v3556 = vsel %vm347, %v3551, %v3555
        %v3557 = vshrl.u32 %v3234, 16
        %v3559 = vrot.slane %v3557, 4
        %v3560 = vor.u32 %v3559, %v3555
        %v3561 = vrot.slane %v3560, 4
        %v3563 = vshll.u32 %v3235, 16
        %v3565 = vrot.slane %v3563, 5
        %v3566 = vsel %vm347, %v3561, %v3565
        %v3567 = vshrl.u32 %v3235, 16
        %v3569 = vrot.slane %v3567, 4
        %v3570 = vor.u32 %v3569, %v3565
        %v3571 = vrot.slane %v3570, 4
        %v3573 = vshll.u32 %v3236, 16
        %v3575 = vrot.slane %v3573, 5
        %v3576 = vsel %vm347, %v3571, %v3575
        %v3577 = vshrl.u32 %v3236, 16
        %v3579 = vrot.slane %v3577, 4
        %v3580 = vor.u32 %v3579, %v3575
        %v3581 = vrot.slane %v3580, 4
        %v3583 = vshll.u32 %v3237, 16
        %v3585 = vrot.slane %v3583, 5
        %v3586 = vsel %vm347, %v3581, %v3585
        %v3587 = vshrl.u32 %v3237, 16
        %v3589 = vrot.slane %v3587, 4
        %v3590 = vor.u32 %v3589, %v3585
        %v3591 = vrot.slane %v3590, 4
        %v3593 = vshll.u32 %v3238, 16
        %v3595 = vrot.slane %v3593, 5
        %v3596 = vsel %vm347, %v3591, %v3595
        %v3597 = vshrl.u32 %v3238, 16
        %v3599 = vrot.slane %v3597, 4
        %v3600 = vor.u32 %v3599, %v3595
        %v3601 = vrot.slane %v3600, 4
        %v3603 = vshll.u32 %v3239, 16
        %v3605 = vrot.slane %v3603, 5
        %v3606 = vsel %vm347, %v3601, %v3605
        %v3607 = vshrl.u32 %v3239, 16
        %v3609 = vrot.slane %v3607, 4
        %v3610 = vor.u32 %v3609, %v3605
        %v3611 = vrot.slane %v3610, 4
        %v3613 = vshll.u32 %v3240, 16
        %v3615 = vrot.slane %v3613, 5
        %v3616 = vsel %vm347, %v3611, %v3615
        %v3617 = vshrl.u32 %v3240, 16
        %v3619 = vrot.slane %v3617, 4
        %v3620 = vor.u32 %v3619, %v3615
        %v3621 = vrot.slane %v3620, 4
        %v3623 = vshll.u32 %v3241, 16
        %v3625 = vrot.slane %v3623, 5
        %v3626 = vsel %vm347, %v3621, %v3625
        %v3627 = vshrl.u32 %v3241, 16
        %v3629 = vrot.slane %v3627, 4
        %v3630 = vor.u32 %v3629, %v3625
        %v3631 = vrot.slane %v3630, 4
        %v3633 = vshll.u32 %v3242, 16
        %v3635 = vrot.slane %v3633, 5
        %v3636 = vsel %vm347, %v3631, %v3635
        %v3637 = vshrl.u32 %v3242, 16
        %v3639 = vrot.slane %v3637, 4
        %v3640 = vor.u32 %v3639, %v3635
        %v3641 = vrot.slane %v3640, 4
        %v3643 = vshll.u32 %v3243, 16
        %v3645 = vrot.slane %v3643, 5
        %v3646 = vsel %vm347, %v3641, %v3645
        %v3647 = vshrl.u32 %v3243, 16
        %v3649 = vrot.slane %v3647, 4
        %v3650 = vor.u32 %v3649, %v3645
        %v3651 = vrot.slane %v3650, 4
        %v3653 = vshll.u32 %v3244, 16
        %v3655 = vrot.slane %v3653, 5
        %v3656 = vsel %vm347, %v3651, %v3655
        %v3657 = vshrl.u32 %v3244, 16
        %v3659 = vrot.slane %v3657, 4
        %v3660 = vor.u32 %v3659, %v3655
        %v3661 = vrot.slane %v3660, 4
        %v3663 = vshll.u32 %v3245, 16
        %v3665 = vrot.slane %v3663, 5
        %v3666 = vsel %vm347, %v3661, %v3665
        %v3667 = vshrl.u32 %v3245, 16
        %v3669 = vrot.slane %v3667, 4
        %v3670 = vor.u32 %v3669, %v3665
        %v3671 = vrot.slane %v3670, 4
        %v3673 = vshll.u32 %v3246, 16
        %v3675 = vrot.slane %v3673, 5
        %v3676 = vsel %vm347, %v3671, %v3675
        %v3677 = vshrl.u32 %v3246, 16
        %v3679 = vrot.slane %v3677, 4
        %v3680 = vor.u32 %v3679, %v3675
        %v3681 = vrot.slane %v3680, 4
        %v3683 = vshll.u32 %v3247, 16
        %v3685 = vrot.slane %v3683, 5
        %v3686 = vsel %vm347, %v3681, %v3685
        %v3687 = vshrl.u32 %v3247, 16
        %v3689 = vrot.slane %v3687, 4
        %v3690 = vor.u32 %v3689, %v3685
        %v3691 = vrot.slane %v3690, 4
        %v3693 = vshll.u32 %v3248, 16
        %v3695 = vrot.slane %v3693, 5
        %v3696 = vsel %vm347, %v3691, %v3695
        %v3697 = vshrl.u32 %v3248, 16
        %v3699 = vrot.slane %v3697, 4
        %v3700 = vor.u32 %v3699, %v3695
        %v3701 = vrot.slane %v3700, 4
        %v3703 = vshll.u32 %v3249, 16
        %v3705 = vrot.slane %v3703, 5
        %v3706 = vsel %vm347, %v3701, %v3705
        %v3707 = vshrl.u32 %v3249, 16
        %v3709 = vrot.slane %v3707, 4
        %v3710 = vor.u32 %v3709, %v3705
        %v3711 = vrot.slane %v3710, 4
        %v3713 = vshll.u32 %v3250, 16
        %v3715 = vrot.slane %v3713, 5
        %v3716 = vsel %vm347, %v3711, %v3715
        %v3717 = vshrl.u32 %v3250, 16
        %v3719 = vrot.slane %v3717, 4
        %v3720 = vor.u32 %v3719, %v3715
        %v3721 = vrot.slane %v3720, 4
        %v3723 = vshll.u32 %v3251, 16
        %v3725 = vrot.slane %v3723, 5
        %v3726 = vsel %vm347, %v3721, %v3725
        %v3727 = vshrl.u32 %v3251, 16
        %v3729 = vrot.slane %v3727, 4
        %v3730 = vor.u32 %v3729, %v3725
        %v3731 = vrot.slane %v3730, 4
        %v3733 = vshll.u32 %v3252, 16
        %v3735 = vrot.slane %v3733, 5
        %v3736 = vsel %vm347, %v3731, %v3735
        %3737 = vrot.lane.b32.xlu0 %v3266, 112
        %v3738 = vpop.permute.xlu0 %3737
        %3739 = vrot.lane.b32.xlu0 %v3276, 112
        %v3740 = vpop.permute.xlu0 %3739
        %3741 = vrot.lane.b32.xlu0 %v3286, 112
        %v3742 = vpop.permute.xlu0 %3741
        %3743 = vrot.lane.b32.xlu0 %v3296, 112
        %v3744 = vpop.permute.xlu0 %3743
        %3745 = vrot.lane.b32.xlu0 %v3306, 112
        %v3746 = vpop.permute.xlu0 %3745
        %3747 = vrot.lane.b32.xlu0 %v3316, 112
        %v3748 = vpop.permute.xlu0 %3747
        %3749 = vrot.lane.b32.xlu0 %v3326, 112
        %v3750 = vpop.permute.xlu0 %3749
        %3751 = vrot.lane.b32.xlu0 %v3336, 112
        %v3752 = vpop.permute.xlu0 %3751
        %3753 = vrot.lane.b32.xlu0 %v3346, 112
        %v3754 = vpop.permute.xlu0 %3753
        %3755 = vrot.lane.b32.xlu0 %v3356, 112
        %v3756 = vpop.permute.xlu0 %3755
        %3757 = vrot.lane.b32.xlu0 %v3366, 112
        %v3758 = vpop.permute.xlu0 %3757
        %3759 = vrot.lane.b32.xlu0 %v3376, 112
        %v3760 = vpop.permute.xlu0 %3759
        %3761 = vrot.lane.b32.xlu0 %v3386, 112
        %v3762 = vpop.permute.xlu0 %3761
        %3763 = vrot.lane.b32.xlu0 %v3396, 112
        %v3764 = vpop.permute.xlu0 %3763
        %3765 = vrot.lane.b32.xlu0 %v3406, 112
        %v3766 = vpop.permute.xlu0 %3765
        %3767 = vrot.lane.b32.xlu0 %v3416, 112
        %v3768 = vpop.permute.xlu0 %3767
        %3769 = vrot.lane.b32.xlu0 %v3426, 112
        %v3770 = vpop.permute.xlu0 %3769
        %3771 = vrot.lane.b32.xlu0 %v3436, 112
        %v3772 = vpop.permute.xlu0 %3771
        %3773 = vrot.lane.b32.xlu0 %v3446, 112
        %v3774 = vpop.permute.xlu0 %3773
        %3775 = vrot.lane.b32.xlu0 %v3456, 112
        %v3776 = vpop.permute.xlu0 %3775
        %3777 = vrot.lane.b32.xlu0 %v3466, 112
        %v3778 = vpop.permute.xlu0 %3777
        %3779 = vrot.lane.b32.xlu0 %v3476, 112
        %v3780 = vpop.permute.xlu0 %3779
        %3781 = vrot.lane.b32.xlu0 %v3486, 112
        %v3782 = vpop.permute.xlu0 %3781
        %3783 = vrot.lane.b32.xlu0 %v3496, 112
        %v3784 = vpop.permute.xlu0 %3783
        %3785 = vrot.lane.b32.xlu0 %v3506, 112
        %v3786 = vpop.permute.xlu0 %3785
        %3787 = vrot.lane.b32.xlu0 %v3516, 112
        %v3788 = vpop.permute.xlu0 %3787
        %3789 = vrot.lane.b32.xlu0 %v3526, 112
        %v3790 = vpop.permute.xlu0 %3789
        %3791 = vrot.lane.b32.xlu0 %v3536, 112
        %v3792 = vpop.permute.xlu0 %3791
        %3793 = vrot.lane.b32.xlu0 %v3546, 112
        %v3794 = vpop.permute.xlu0 %3793
        %3795 = vrot.lane.b32.xlu0 %v3556, 112
        %v3796 = vpop.permute.xlu0 %3795
        %3797 = vrot.lane.b32.xlu0 %v3566, 112
        %v3798 = vpop.permute.xlu0 %3797
        %3799 = vrot.lane.b32.xlu0 %v3576, 112
        %v3800 = vpop.permute.xlu0 %3799
        %3801 = vrot.lane.b32.xlu0 %v3586, 112
        %v3802 = vpop.permute.xlu0 %3801
        %3803 = vrot.lane.b32.xlu0 %v3596, 112
        %v3804 = vpop.permute.xlu0 %3803
        %3805 = vrot.lane.b32.xlu0 %v3606, 112
        %v3806 = vpop.permute.xlu0 %3805
        %3807 = vrot.lane.b32.xlu0 %v3616, 112
        %v3808 = vpop.permute.xlu0 %3807
        %3809 = vrot.lane.b32.xlu0 %v3626, 112
        %v3810 = vpop.permute.xlu0 %3809
        %3811 = vrot.lane.b32.xlu0 %v3636, 112
        %v3812 = vpop.permute.xlu0 %3811
        %3813 = vrot.lane.b32.xlu0 %v3646, 112
        %v3814 = vpop.permute.xlu0 %3813
        %3815 = vrot.lane.b32.xlu0 %v3656, 112
        %v3816 = vpop.permute.xlu0 %3815
        %3817 = vrot.lane.b32.xlu0 %v3666, 112
        %v3818 = vpop.permute.xlu0 %3817
        %3819 = vrot.lane.b32.xlu0 %v3676, 112
        %v3820 = vpop.permute.xlu0 %3819
        %3821 = vrot.lane.b32.xlu0 %v3686, 112
        %v3822 = vpop.permute.xlu0 %3821
        %3823 = vrot.lane.b32.xlu0 %v3696, 112
        %v3824 = vpop.permute.xlu0 %3823
        %3825 = vrot.lane.b32.xlu0 %v3706, 112
        %v3826 = vpop.permute.xlu0 %3825
        %3827 = vrot.lane.b32.xlu0 %v3716, 112
        %v3828 = vpop.permute.xlu0 %3827
        %3829 = vrot.lane.b32.xlu0 %v3726, 112
        %v3830 = vpop.permute.xlu0 %3829
        %3831 = vrot.lane.b32.xlu0 %v3736, 112
        %v3832 = vpop.permute.xlu0 %3831
        %vm3881 = vcmask 1044352
        %3882 = vst.msk [vmem:[#allocation2] sm:$0xf] %vm3881, %v3738
        %3883 = vst.msk [vmem:[#allocation2 + $0x8] sm:$0xf] %vm3881, %v3740
        %3884 = vst.msk [vmem:[#allocation2 + $0x10] sm:$0xf] %vm3881, %v3742
        %3885 = vst.msk [vmem:[#allocation2 + $0x18] sm:$0xf] %vm3881, %v3744
        %3886 = vst.msk [vmem:[#allocation2 + $0x20] sm:$0xf] %vm3881, %v3746
        %3887 = vst.msk [vmem:[#allocation2 + $0x28] sm:$0xf] %vm3881, %v3748
        %3888 = vst.msk [vmem:[#allocation2 + $0x30] sm:$0xf] %vm3881, %v3750
        %3889 = vst.msk [vmem:[#allocation2 + $0x38] sm:$0xf] %vm3881, %v3752
        %3890 = vst.msk [vmem:[#allocation2 + $0x40] sm:$0xf] %vm3881, %v3754
        %3891 = vst.msk [vmem:[#allocation2 + $0x48] sm:$0xf] %vm3881, %v3756
        %3892 = vst.msk [vmem:[#allocation2 + $0x50] sm:$0xf] %vm3881, %v3758
        %3893 = vst.msk [vmem:[#allocation2 + $0x58] sm:$0xf] %vm3881, %v3760
        %3894 = vst.msk [vmem:[#allocation2 + $0x60] sm:$0xf] %vm3881, %v3762
        %3895 = vst.msk [vmem:[#allocation2 + $0x68] sm:$0xf] %vm3881, %v3764
        %3896 = vst.msk [vmem:[#allocation2 + $0x70] sm:$0xf] %vm3881, %v3766
        %3897 = vst.msk [vmem:[#allocation2 + $0x78] sm:$0xf] %vm3881, %v3768
        %3898 = vst.msk [vmem:[#allocation2 + $0x80] sm:$0xf] %vm3881, %v3770
        %3899 = vst.msk [vmem:[#allocation2 + $0x88] sm:$0xf] %vm3881, %v3772
        %3900 = vst.msk [vmem:[#allocation2 + $0x90] sm:$0xf] %vm3881, %v3774
        %3901 = vst.msk [vmem:[#allocation2 + $0x98] sm:$0xf] %vm3881, %v3776
        %3902 = vst.msk [vmem:[#allocation2 + $0xa0] sm:$0xf] %vm3881, %v3778
        %3903 = vst.msk [vmem:[#allocation2 + $0xa8] sm:$0xf] %vm3881, %v3780
        %3904 = vst.msk [vmem:[#allocation2 + $0xb0] sm:$0xf] %vm3881, %v3782
        %3905 = vst.msk [vmem:[#allocation2 + $0xb8] sm:$0xf] %vm3881, %v3784
        %3906 = vst.msk [vmem:[#allocation2 + $0xc0] sm:$0xf] %vm3881, %v3786
        %3907 = vst.msk [vmem:[#allocation2 + $0xc8] sm:$0xf] %vm3881, %v3788
        %3908 = vst.msk [vmem:[#allocation2 + $0xd0] sm:$0xf] %vm3881, %v3790
        %3909 = vst.msk [vmem:[#allocation2 + $0xd8] sm:$0xf] %vm3881, %v3792
        %3910 = vst.msk [vmem:[#allocation2 + $0xe0] sm:$0xf] %vm3881, %v3794
        %3911 = vst.msk [vmem:[#allocation2 + $0xe8] sm:$0xf] %vm3881, %v3796
        %3912 = vst.msk [vmem:[#allocation2 + $0xf0] sm:$0xf] %vm3881, %v3798
        %3913 = vst.msk [vmem:[#allocation2 + $0xf8] sm:$0xf] %vm3881, %v3800
        %3914 = vst.msk [vmem:[#allocation2 + $0x100] sm:$0xf] %vm3881, %v3802
        %3915 = vst.msk [vmem:[#allocation2 + $0x108] sm:$0xf] %vm3881, %v3804
        %3916 = vst.msk [vmem:[#allocation2 + $0x110] sm:$0xf] %vm3881, %v3806
        %3917 = vst.msk [vmem:[#allocation2 + $0x118] sm:$0xf] %vm3881, %v3808
        %3918 = vst.msk [vmem:[#allocation2 + $0x120] sm:$0xf] %vm3881, %v3810
        %3919 = vst.msk [vmem:[#allocation2 + $0x128] sm:$0xf] %vm3881, %v3812
        %3920 = vst.msk [vmem:[#allocation2 + $0x130] sm:$0xf] %vm3881, %v3814
        %3921 = vst.msk [vmem:[#allocation2 + $0x138] sm:$0xf] %vm3881, %v3816
        %3922 = vst.msk [vmem:[#allocation2 + $0x140] sm:$0xf] %vm3881, %v3818
        %3923 = vst.msk [vmem:[#allocation2 + $0x148] sm:$0xf] %vm3881, %v3820
        %3924 = vst.msk [vmem:[#allocation2 + $0x150] sm:$0xf] %vm3881, %v3822
        %3925 = vst.msk [vmem:[#allocation2 + $0x158] sm:$0xf] %vm3881, %v3824
        %3926 = vst.msk [vmem:[#allocation2 + $0x160] sm:$0xf] %vm3881, %v3826
        %3927 = vst.msk [vmem:[#allocation2 + $0x168] sm:$0xf] %vm3881, %v3828
        %3928 = vst.msk [vmem:[#allocation2 + $0x170] sm:$0xf] %vm3881, %v3830
        %3929 = vst.msk [vmem:[#allocation2 + $0x178] sm:$0xf] %vm3881, %v3832
        %v3930 = vld [vmem:[%s196 + $0x18] sm:$0xe]
        %v3931 = vld [vmem:[%s196 + $0x1c] sm:$0xf]
        %v3932 = vld [vmem:[%s196 + $0x20] sm:$0xf]
        %v3933 = vld [vmem:[%s196 + $0x24] sm:$0xf]
        %v3934 = vld [vmem:[%s196 + $0x28] sm:$0xf]
        %v3935 = vld [vmem:[%s196 + $0x2c] sm:$0xf]
        %v3936 = vld [vmem:[%s196 + $0x30] sm:$0xf]
        %v3937 = vld [vmem:[%s196 + $0x34] sm:$0xf]
        %v3938 = vld [vmem:[%s196 + $0x38] sm:$0xf]
        %v3939 = vld [vmem:[%s196 + $0x3c] sm:$0xf]
        %v3940 = vld [vmem:[%s196 + $0x40] sm:$0xf]
        %v3941 = vld [vmem:[%s196 + $0x44] sm:$0xf]
        %v3942 = vld [vmem:[%s196 + $0x48] sm:$0xf]
        %v3943 = vld [vmem:[%s196 + $0x4c] sm:$0xf]
        %v3944 = vld [vmem:[%s196 + $0x50] sm:$0xf]
        %v3945 = vld [vmem:[%s196 + $0x54] sm:$0xf]
        %v3946 = vld [vmem:[%s196 + $0x58] sm:$0xf]
        %v3947 = vld [vmem:[%s196 + $0x5c] sm:$0xf]
        %v3948 = vld [vmem:[%s196 + $0x60] sm:$0xf]
        %v3949 = vld [vmem:[%s196 + $0x64] sm:$0xf]
        %v3950 = vld [vmem:[%s196 + $0x68] sm:$0xf]
        %v3951 = vld [vmem:[%s196 + $0x6c] sm:$0xf]
        %v3952 = vld [vmem:[%s196 + $0x70] sm:$0xf]
        %v3953 = vld [vmem:[%s196 + $0x74] sm:$0xf]
        %v3954 = vld [vmem:[%s196 + $0x78] sm:$0xf]
        %v3955 = vld [vmem:[%s196 + $0x7c] sm:$0xf]
        %v3956 = vld [vmem:[%s196 + $0x80] sm:$0xf]
        %v3957 = vld [vmem:[%s196 + $0x84] sm:$0xf]
        %v3958 = vld [vmem:[%s196 + $0x88] sm:$0xf]
        %v3959 = vld [vmem:[%s196 + $0x8c] sm:$0xf]
        %v3960 = vld [vmem:[%s196 + $0x90] sm:$0xf]
        %v3961 = vld [vmem:[%s196 + $0x94] sm:$0xf]
        %v3962 = vld [vmem:[%s196 + $0x98] sm:$0xf]
        %v3963 = vld [vmem:[%s196 + $0x9c] sm:$0xf]
        %v3964 = vld [vmem:[%s196 + $0xa0] sm:$0xf]
        %v3965 = vld [vmem:[%s196 + $0xa4] sm:$0xf]
        %v3966 = vld [vmem:[%s196 + $0xa8] sm:$0xf]
        %v3967 = vld [vmem:[%s196 + $0xac] sm:$0xf]
        %v3968 = vld [vmem:[%s196 + $0xb0] sm:$0xf]
        %v3969 = vld [vmem:[%s196 + $0xb4] sm:$0xf]
        %v3970 = vld [vmem:[%s196 + $0xb8] sm:$0xf]
        %v3971 = vld [vmem:[%s196 + $0xbc] sm:$0xf]
        %v3972 = vld [vmem:[%s196 + $0xc0] sm:$0xf]
        %v3973 = vld [vmem:[%s196 + $0xc4] sm:$0xf]
        %v3974 = vld [vmem:[%s196 + $0xc8] sm:$0xf]
        %v3975 = vld [vmem:[%s196 + $0xcc] sm:$0xf]
        %v3976 = vld [vmem:[%s196 + $0xd0] sm:$0xf]
        %v3977 = vld [vmem:[%s196 + $0xd4] sm:$0xf]
        %v3978 = vld [vmem:[%s196 + $0xd8] sm:$0x1]
        %v4028 = vrot.slane %v3930, 5
        %v4029 = vrot.slane %v4028, 4
        %v4030 = vrot.slane %v3931, 5
        %v4031 = vsel %vm1125, %v4029, %v4030
        %v4032 = vrot.slane %v4030, 4
        %v4033 = vrot.slane %v3932, 5
        %v4034 = vsel %vm1125, %v4032, %v4033
        %v4035 = vrot.slane %v4033, 4
        %v4036 = vrot.slane %v3933, 5
        %v4037 = vsel %vm1125, %v4035, %v4036
        %v4038 = vrot.slane %v4036, 4
        %v4039 = vrot.slane %v3934, 5
        %v4040 = vsel %vm1125, %v4038, %v4039
        %v4041 = vrot.slane %v4039, 4
        %v4042 = vrot.slane %v3935, 5
        %v4043 = vsel %vm1125, %v4041, %v4042
        %v4044 = vrot.slane %v4042, 4
        %v4045 = vrot.slane %v3936, 5
        %v4046 = vsel %vm1125, %v4044, %v4045
        %v4047 = vrot.slane %v4045, 4
        %v4048 = vrot.slane %v3937, 5
        %v4049 = vsel %vm1125, %v4047, %v4048
        %v4050 = vrot.slane %v4048, 4
        %v4051 = vrot.slane %v3938, 5
        %v4052 = vsel %vm1125, %v4050, %v4051
        %v4053 = vrot.slane %v4051, 4
        %v4054 = vrot.slane %v3939, 5
        %v4055 = vsel %vm1125, %v4053, %v4054
        %v4056 = vrot.slane %v4054, 4
        %v4057 = vrot.slane %v3940, 5
        %v4058 = vsel %vm1125, %v4056, %v4057
        %v4059 = vrot.slane %v4057, 4
        %v4060 = vrot.slane %v3941, 5
        %v4061 = vsel %vm1125, %v4059, %v4060
        %v4062 = vrot.slane %v4060, 4
        %v4063 = vrot.slane %v3942, 5
        %v4064 = vsel %vm1125, %v4062, %v4063
        %v4065 = vrot.slane %v4063, 4
        %v4066 = vrot.slane %v3943, 5
        %v4067 = vsel %vm1125, %v4065, %v4066
        %v4068 = vrot.slane %v4066, 4
        %v4069 = vrot.slane %v3944, 5
        %v4070 = vsel %vm1125, %v4068, %v4069
        %v4071 = vrot.slane %v4069, 4
        %v4072 = vrot.slane %v3945, 5
        %v4073 = vsel %vm1125, %v4071, %v4072
        %v4074 = vrot.slane %v4072, 4
        %v4075 = vrot.slane %v3946, 5
        %v4076 = vsel %vm1125, %v4074, %v4075
        %v4077 = vrot.slane %v4075, 4
        %v4078 = vrot.slane %v3947, 5
        %v4079 = vsel %vm1125, %v4077, %v4078
        %v4080 = vrot.slane %v4078, 4
        %v4081 = vrot.slane %v3948, 5
        %v4082 = vsel %vm1125, %v4080, %v4081
        %v4083 = vrot.slane %v4081, 4
        %v4084 = vrot.slane %v3949, 5
        %v4085 = vsel %vm1125, %v4083, %v4084
        %v4086 = vrot.slane %v4084, 4
        %v4087 = vrot.slane %v3950, 5
        %v4088 = vsel %vm1125, %v4086, %v4087
        %v4089 = vrot.slane %v4087, 4
        %v4090 = vrot.slane %v3951, 5
        %v4091 = vsel %vm1125, %v4089, %v4090
        %v4092 = vrot.slane %v4090, 4
        %v4093 = vrot.slane %v3952, 5
        %v4094 = vsel %vm1125, %v4092, %v4093
        %v4095 = vrot.slane %v4093, 4
        %v4096 = vrot.slane %v3953, 5
        %v4097 = vsel %vm1125, %v4095, %v4096
        %v4098 = vrot.slane %v4096, 4
        %v4099 = vrot.slane %v3954, 5
        %v4100 = vsel %vm1125, %v4098, %v4099
        %v4101 = vrot.slane %v4099, 4
        %v4102 = vrot.slane %v3955, 5
        %v4103 = vsel %vm1125, %v4101, %v4102
        %v4104 = vrot.slane %v4102, 4
        %v4105 = vrot.slane %v3956, 5
        %v4106 = vsel %vm1125, %v4104, %v4105
        %v4107 = vrot.slane %v4105, 4
        %v4108 = vrot.slane %v3957, 5
        %v4109 = vsel %vm1125, %v4107, %v4108
        %v4110 = vrot.slane %v4108, 4
        %v4111 = vrot.slane %v3958, 5
        %v4112 = vsel %vm1125, %v4110, %v4111
        %v4113 = vrot.slane %v4111, 4
        %v4114 = vrot.slane %v3959, 5
        %v4115 = vsel %vm1125, %v4113, %v4114
        %v4116 = vrot.slane %v4114, 4
        %v4117 = vrot.slane %v3960, 5
        %v4118 = vsel %vm1125, %v4116, %v4117
        %v4119 = vrot.slane %v4117, 4
        %v4120 = vrot.slane %v3961, 5
        %v4121 = vsel %vm1125, %v4119, %v4120
        %v4122 = vrot.slane %v4120, 4
        %v4123 = vrot.slane %v3962, 5
        %v4124 = vsel %vm1125, %v4122, %v4123
        %v4125 = vrot.slane %v4123, 4
        %v4126 = vrot.slane %v3963, 5
        %v4127 = vsel %vm1125, %v4125, %v4126
        %v4128 = vrot.slane %v4126, 4
        %v4129 = vrot.slane %v3964, 5
        %v4130 = vsel %vm1125, %v4128, %v4129
        %v4131 = vrot.slane %v4129, 4
        %v4132 = vrot.slane %v3965, 5
        %v4133 = vsel %vm1125, %v4131, %v4132
        %v4134 = vrot.slane %v4132, 4
        %v4135 = vrot.slane %v3966, 5
        %v4136 = vsel %vm1125, %v4134, %v4135
        %v4137 = vrot.slane %v4135, 4
        %v4138 = vrot.slane %v3967, 5
        %v4139 = vsel %vm1125, %v4137, %v4138
        %v4140 = vrot.slane %v4138, 4
        %v4141 = vrot.slane %v3968, 5
        %v4142 = vsel %vm1125, %v4140, %v4141
        %v4143 = vrot.slane %v4141, 4
        %v4144 = vrot.slane %v3969, 5
        %v4145 = vsel %vm1125, %v4143, %v4144
        %v4146 = vrot.slane %v4144, 4
        %v4147 = vrot.slane %v3970, 5
        %v4148 = vsel %vm1125, %v4146, %v4147
        %v4149 = vrot.slane %v4147, 4
        %v4150 = vrot.slane %v3971, 5
        %v4151 = vsel %vm1125, %v4149, %v4150
        %v4152 = vrot.slane %v4150, 4
        %v4153 = vrot.slane %v3972, 5
        %v4154 = vsel %vm1125, %v4152, %v4153
        %v4155 = vrot.slane %v4153, 4
        %v4156 = vrot.slane %v3973, 5
        %v4157 = vsel %vm1125, %v4155, %v4156
        %v4158 = vrot.slane %v4156, 4
        %v4159 = vrot.slane %v3974, 5
        %v4160 = vsel %vm1125, %v4158, %v4159
        %v4161 = vrot.slane %v4159, 4
        %v4162 = vrot.slane %v3975, 5
        %v4163 = vsel %vm1125, %v4161, %v4162
        %v4164 = vrot.slane %v4162, 4
        %v4165 = vrot.slane %v3976, 5
        %v4166 = vsel %vm1125, %v4164, %v4165
        %v4167 = vrot.slane %v4165, 4
        %v4168 = vrot.slane %v3977, 5
        %v4169 = vsel %vm1125, %v4167, %v4168
        %v4170 = vrot.slane %v4168, 4
        %v4171 = vrot.slane %v3978, 5
        %v4172 = vsel %vm1125, %v4170, %v4171
        %4221 = vst.msk [vmem:[#allocation2 + $0x4] sm:$0xf] %vm247, %v4031
        %4222 = vst.msk [vmem:[#allocation2 + $0xc] sm:$0xf] %vm247, %v4034
        %4223 = vst.msk [vmem:[#allocation2 + $0x14] sm:$0xf] %vm247, %v4037
        %4224 = vst.msk [vmem:[#allocation2 + $0x1c] sm:$0xf] %vm247, %v4040
        %4225 = vst.msk [vmem:[#allocation2 + $0x24] sm:$0xf] %vm247, %v4043
        %4226 = vst.msk [vmem:[#allocation2 + $0x2c] sm:$0xf] %vm247, %v4046
        %4227 = vst.msk [vmem:[#allocation2 + $0x34] sm:$0xf] %vm247, %v4049
        %4228 = vst.msk [vmem:[#allocation2 + $0x3c] sm:$0xf] %vm247, %v4052
        %4229 = vst.msk [vmem:[#allocation2 + $0x44] sm:$0xf] %vm247, %v4055
        %4230 = vst.msk [vmem:[#allocation2 + $0x4c] sm:$0xf] %vm247, %v4058
        %4231 = vst.msk [vmem:[#allocation2 + $0x54] sm:$0xf] %vm247, %v4061
        %4232 = vst.msk [vmem:[#allocation2 + $0x5c] sm:$0xf] %vm247, %v4064
        %4233 = vst.msk [vmem:[#allocation2 + $0x64] sm:$0xf] %vm247, %v4067
        %4234 = vst.msk [vmem:[#allocation2 + $0x6c] sm:$0xf] %vm247, %v4070
        %4235 = vst.msk [vmem:[#allocation2 + $0x74] sm:$0xf] %vm247, %v4073
        %4236 = vst.msk [vmem:[#allocation2 + $0x7c] sm:$0xf] %vm247, %v4076
        %4237 = vst.msk [vmem:[#allocation2 + $0x84] sm:$0xf] %vm247, %v4079
        %4238 = vst.msk [vmem:[#allocation2 + $0x8c] sm:$0xf] %vm247, %v4082
        %4239 = vst.msk [vmem:[#allocation2 + $0x94] sm:$0xf] %vm247, %v4085
        %4240 = vst.msk [vmem:[#allocation2 + $0x9c] sm:$0xf] %vm247, %v4088
        %4241 = vst.msk [vmem:[#allocation2 + $0xa4] sm:$0xf] %vm247, %v4091
        %4242 = vst.msk [vmem:[#allocation2 + $0xac] sm:$0xf] %vm247, %v4094
        %4243 = vst.msk [vmem:[#allocation2 + $0xb4] sm:$0xf] %vm247, %v4097
        %4244 = vst.msk [vmem:[#allocation2 + $0xbc] sm:$0xf] %vm247, %v4100
        %4245 = vst.msk [vmem:[#allocation2 + $0xc4] sm:$0xf] %vm247, %v4103
        %4246 = vst.msk [vmem:[#allocation2 + $0xcc] sm:$0xf] %vm247, %v4106
        %4247 = vst.msk [vmem:[#allocation2 + $0xd4] sm:$0xf] %vm247, %v4109
        %4248 = vst.msk [vmem:[#allocation2 + $0xdc] sm:$0xf] %vm247, %v4112
        %4249 = vst.msk [vmem:[#allocation2 + $0xe4] sm:$0xf] %vm247, %v4115
        %4250 = vst.msk [vmem:[#allocation2 + $0xec] sm:$0xf] %vm247, %v4118
        %4251 = vst.msk [vmem:[#allocation2 + $0xf4] sm:$0xf] %vm247, %v4121
        %4252 = vst.msk [vmem:[#allocation2 + $0xfc] sm:$0xf] %vm247, %v4124
        %4253 = vst.msk [vmem:[#allocation2 + $0x104] sm:$0xf] %vm247, %v4127
        %4254 = vst.msk [vmem:[#allocation2 + $0x10c] sm:$0xf] %vm247, %v4130
        %4255 = vst.msk [vmem:[#allocation2 + $0x114] sm:$0xf] %vm247, %v4133
        %4256 = vst.msk [vmem:[#allocation2 + $0x11c] sm:$0xf] %vm247, %v4136
        %4257 = vst.msk [vmem:[#allocation2 + $0x124] sm:$0xf] %vm247, %v4139
        %4258 = vst.msk [vmem:[#allocation2 + $0x12c] sm:$0xf] %vm247, %v4142
        %4259 = vst.msk [vmem:[#allocation2 + $0x134] sm:$0xf] %vm247, %v4145
        %4260 = vst.msk [vmem:[#allocation2 + $0x13c] sm:$0xf] %vm247, %v4148
        %4261 = vst.msk [vmem:[#allocation2 + $0x144] sm:$0xf] %vm247, %v4151
        %4262 = vst.msk [vmem:[#allocation2 + $0x14c] sm:$0xf] %vm247, %v4154
        %4263 = vst.msk [vmem:[#allocation2 + $0x154] sm:$0xf] %vm247, %v4157
        %4264 = vst.msk [vmem:[#allocation2 + $0x15c] sm:$0xf] %vm247, %v4160
        %4265 = vst.msk [vmem:[#allocation2 + $0x164] sm:$0xf] %vm247, %v4163
        %4266 = vst.msk [vmem:[#allocation2 + $0x16c] sm:$0xf] %vm247, %v4166
        %4267 = vst.msk [vmem:[#allocation2 + $0x174] sm:$0xf] %vm247, %v4169
        %4268 = vst.msk [vmem:[#allocation2 + $0x17c] sm:$0xf] %vm247, %v4172
        %v4269 = vld [vmem:[#allocation2] sm:$0xff]
        %v4270 = vld [vmem:[#allocation2 + $0x8] sm:$0xff]
        %v4271 = vld [vmem:[#allocation2 + $0x10] sm:$0xff]
        %v4272 = vld [vmem:[#allocation2 + $0x18] sm:$0xff]
        %v4273 = vld [vmem:[#allocation2 + $0x20] sm:$0xff]
        %v4274 = vld [vmem:[#allocation2 + $0x28] sm:$0xff]
        %v4275 = vld [vmem:[#allocation2 + $0x30] sm:$0xff]
        %v4276 = vld [vmem:[#allocation2 + $0x38] sm:$0xff]
        %v4277 = vld [vmem:[#allocation2 + $0x40] sm:$0xff]
        %v4278 = vld [vmem:[#allocation2 + $0x48] sm:$0xff]
        %v4279 = vld [vmem:[#allocation2 + $0x50] sm:$0xff]
        %v4280 = vld [vmem:[#allocation2 + $0x58] sm:$0xff]
        %v4281 = vld [vmem:[#allocation2 + $0x60] sm:$0xff]
        %v4282 = vld [vmem:[#allocation2 + $0x68] sm:$0xff]
        %v4283 = vld [vmem:[#allocation2 + $0x70] sm:$0xff]
        %v4284 = vld [vmem:[#allocation2 + $0x78] sm:$0xff]
        %v4285 = vld [vmem:[#allocation2 + $0x80] sm:$0xff]
        %v4286 = vld [vmem:[#allocation2 + $0x88] sm:$0xff]
        %v4287 = vld [vmem:[#allocation2 + $0x90] sm:$0xff]
        %v4288 = vld [vmem:[#allocation2 + $0x98] sm:$0xff]
        %v4289 = vld [vmem:[#allocation2 + $0xa0] sm:$0xff]
        %v4290 = vld [vmem:[#allocation2 + $0xa8] sm:$0xff]
        %v4291 = vld [vmem:[#allocation2 + $0xb0] sm:$0xff]
        %v4292 = vld [vmem:[#allocation2 + $0xb8] sm:$0xff]
        %v4293 = vld [vmem:[#allocation2 + $0xc0] sm:$0xff]
        %v4294 = vld [vmem:[#allocation2 + $0xc8] sm:$0xff]
        %v4295 = vld [vmem:[#allocation2 + $0xd0] sm:$0xff]
        %v4296 = vld [vmem:[#allocation2 + $0xd8] sm:$0xff]
        %v4297 = vld [vmem:[#allocation2 + $0xe0] sm:$0xff]
        %v4298 = vld [vmem:[#allocation2 + $0xe8] sm:$0xff]
        %v4299 = vld [vmem:[#allocation2 + $0xf0] sm:$0xff]
        %v4300 = vld [vmem:[#allocation2 + $0xf8] sm:$0xff]
        %v4301 = vld [vmem:[#allocation2 + $0x100] sm:$0xff]
        %v4302 = vld [vmem:[#allocation2 + $0x108] sm:$0xff]
        %v4303 = vld [vmem:[#allocation2 + $0x110] sm:$0xff]
        %v4304 = vld [vmem:[#allocation2 + $0x118] sm:$0xff]
        %v4305 = vld [vmem:[#allocation2 + $0x120] sm:$0xff]
        %v4306 = vld [vmem:[#allocation2 + $0x128] sm:$0xff]
        %v4307 = vld [vmem:[#allocation2 + $0x130] sm:$0xff]
        %v4308 = vld [vmem:[#allocation2 + $0x138] sm:$0xff]
        %v4309 = vld [vmem:[#allocation2 + $0x140] sm:$0xff]
        %v4310 = vld [vmem:[#allocation2 + $0x148] sm:$0xff]
        %v4311 = vld [vmem:[#allocation2 + $0x150] sm:$0xff]
        %v4312 = vld [vmem:[#allocation2 + $0x158] sm:$0xff]
        %v4313 = vld [vmem:[#allocation2 + $0x160] sm:$0xff]
        %v4314 = vld [vmem:[#allocation2 + $0x168] sm:$0xff]
        %v4315 = vld [vmem:[#allocation2 + $0x170] sm:$0xff]
        %v4316 = vld [vmem:[#allocation2 + $0x178] sm:$0xff]
        %v4317 = vld [vmem:[%s1] sm:$0xf]
        %v4318 = vld [vmem:[%s1 + $0x4] sm:$0xf]
        %v4319 = vld [vmem:[%s1 + $0x8] sm:$0xf]
        %v4320 = vld [vmem:[%s1 + $0xc] sm:$0xf]
        %v4321 = vld [vmem:[%s1 + $0x10] sm:$0xf]
        %v4322 = vld [vmem:[%s1 + $0x14] sm:$0xf]
        %v4323 = vld [vmem:[%s1 + $0x18] sm:$0xf]
        %v4324 = vld [vmem:[%s1 + $0x1c] sm:$0xf]
        %v4325 = vld [vmem:[%s1 + $0x20] sm:$0xf]
        %v4326 = vld [vmem:[%s1 + $0x24] sm:$0xf]
        %v4327 = vld [vmem:[%s1 + $0x28] sm:$0xf]
        %v4328 = vld [vmem:[%s1 + $0x2c] sm:$0xf]
        %v4329 = vld [vmem:[%s1 + $0x30] sm:$0xf]
        %v4330 = vld [vmem:[%s1 + $0x34] sm:$0xf]
        %v4331 = vld [vmem:[%s1 + $0x38] sm:$0xf]
        %v4332 = vld [vmem:[%s1 + $0x3c] sm:$0xf]
        %v4333 = vld [vmem:[%s1 + $0x40] sm:$0xf]
        %v4334 = vld [vmem:[%s1 + $0x44] sm:$0xf]
        %v4335 = vld [vmem:[%s2] sm:$0x1]
        %v4337 = vlaneseq
        %v4338 = vshrl.u32 %v4337, 7
        %v4339 = vsub.s32 0, %v4338
        %v4340 = vrot.slane %v4335, %v4339
        %v4390 = vunpack.c.l.b16 %v4269
        %v4391 = vunpack.c.h.b16 %v4269
        %v4392 = vunpack.c.l.b16 %v4270
        %v4393 = vunpack.c.h.b16 %v4270
        %v4394 = vunpack.c.l.b16 %v4271
        %v4395 = vunpack.c.h.b16 %v4271
        %v4396 = vunpack.c.l.b16 %v4272
        %v4397 = vunpack.c.h.b16 %v4272
        %v4398 = vunpack.c.l.b16 %v4273
        %v4399 = vunpack.c.h.b16 %v4273
        %v4400 = vunpack.c.l.b16 %v4274
        %v4401 = vunpack.c.h.b16 %v4274
        %v4402 = vunpack.c.l.b16 %v4275
        %v4403 = vunpack.c.h.b16 %v4275
        %v4404 = vunpack.c.l.b16 %v4276
        %v4405 = vunpack.c.h.b16 %v4276
        %v4406 = vunpack.c.l.b16 %v4277
        %v4407 = vunpack.c.h.b16 %v4277
        %v4408 = vunpack.c.l.b16 %v4278
        %v4409 = vunpack.c.h.b16 %v4278
        %v4410 = vunpack.c.l.b16 %v4279
        %v4411 = vunpack.c.h.b16 %v4279
        %v4412 = vunpack.c.l.b16 %v4280
        %v4413 = vunpack.c.h.b16 %v4280
        %v4414 = vunpack.c.l.b16 %v4281
        %v4415 = vunpack.c.h.b16 %v4281
        %v4416 = vunpack.c.l.b16 %v4282
        %v4417 = vunpack.c.h.b16 %v4282
        %v4418 = vunpack.c.l.b16 %v4283
        %v4419 = vunpack.c.h.b16 %v4283
        %v4420 = vunpack.c.l.b16 %v4284
        %v4421 = vunpack.c.h.b16 %v4284
        %v4422 = vunpack.c.l.b16 %v4285
        %v4423 = vunpack.c.h.b16 %v4285
        %v4424 = vunpack.c.l.b16 %v4286
        %v4425 = vunpack.c.h.b16 %v4286
        %v4426 = vunpack.c.l.b16 %v4287
        %v4427 = vunpack.c.h.b16 %v4287
        %v4428 = vunpack.c.l.b16 %v4288
        %v4429 = vunpack.c.h.b16 %v4288
        %v4430 = vunpack.c.l.b16 %v4289
        %v4431 = vunpack.c.h.b16 %v4289
        %v4432 = vunpack.c.l.b16 %v4290
        %v4433 = vunpack.c.h.b16 %v4290
        %v4434 = vunpack.c.l.b16 %v4291
        %v4435 = vunpack.c.h.b16 %v4291
        %v4436 = vunpack.c.l.b16 %v4292
        %v4437 = vunpack.c.h.b16 %v4292
        %v4438 = vunpack.c.l.b16 %v4293
        %v4439 = vunpack.c.h.b16 %v4293
        %v4440 = vunpack.c.l.b16 %v4294
        %v4441 = vunpack.c.h.b16 %v4294
        %v4442 = vunpack.c.l.b16 %v4295
        %v4443 = vunpack.c.h.b16 %v4295
        %v4444 = vunpack.c.l.b16 %v4296
        %v4445 = vunpack.c.h.b16 %v4296
        %v4446 = vunpack.c.l.b16 %v4297
        %v4447 = vunpack.c.h.b16 %v4297
        %v4448 = vunpack.c.l.b16 %v4298
        %v4449 = vunpack.c.h.b16 %v4298
        %v4450 = vunpack.c.l.b16 %v4299
        %v4451 = vunpack.c.h.b16 %v4299
        %v4452 = vunpack.c.l.b16 %v4300
        %v4453 = vunpack.c.h.b16 %v4300
        %v4454 = vunpack.c.l.b16 %v4301
        %v4455 = vunpack.c.h.b16 %v4301
        %v4456 = vunpack.c.l.b16 %v4302
        %v4457 = vunpack.c.h.b16 %v4302
        %v4458 = vunpack.c.l.b16 %v4303
        %v4459 = vunpack.c.h.b16 %v4303
        %v4460 = vunpack.c.l.b16 %v4304
        %v4461 = vunpack.c.h.b16 %v4304
        %v4462 = vunpack.c.l.b16 %v4305
        %v4463 = vunpack.c.h.b16 %v4305
        %v4464 = vunpack.c.l.b16 %v4306
        %v4465 = vunpack.c.h.b16 %v4306
        %v4466 = vunpack.c.l.b16 %v4307
        %v4467 = vunpack.c.h.b16 %v4307
        %v4468 = vunpack.c.l.b16 %v4308
        %v4469 = vunpack.c.h.b16 %v4308
        %v4470 = vunpack.c.l.b16 %v4309
        %v4471 = vunpack.c.h.b16 %v4309
        %v4472 = vunpack.c.l.b16 %v4310
        %v4473 = vunpack.c.h.b16 %v4310
        %v4474 = vunpack.c.l.b16 %v4311
        %v4475 = vunpack.c.h.b16 %v4311
        %v4476 = vunpack.c.l.b16 %v4312
        %v4477 = vunpack.c.h.b16 %v4312
        %v4478 = vunpack.c.l.b16 %v4313
        %v4479 = vunpack.c.h.b16 %v4313
        %v4480 = vunpack.c.l.b16 %v4314
        %v4481 = vunpack.c.h.b16 %v4314
        %v4482 = vunpack.c.l.b16 %v4315
        %v4483 = vunpack.c.h.b16 %v4315
        %v4484 = vunpack.c.l.b16 %v4316
        %v4485 = vunpack.c.h.b16 %v4316
        %v4486 = vpack.c.b16 %v4392, %v4390
        %v4487 = vpack.c.b16 %v4393, %v4391
        %v4488 = vpack.c.b16 %v4396, %v4394
        %v4489 = vpack.c.b16 %v4397, %v4395
        %v4490 = vpack.c.b16 %v4400, %v4398
        %v4491 = vpack.c.b16 %v4401, %v4399
        %v4492 = vpack.c.b16 %v4404, %v4402
        %v4493 = vpack.c.b16 %v4405, %v4403
        %v4494 = vpack.c.b16 %v4408, %v4406
        %v4495 = vpack.c.b16 %v4409, %v4407
        %v4496 = vpack.c.b16 %v4412, %v4410
        %v4497 = vpack.c.b16 %v4413, %v4411
        %v4498 = vpack.c.b16 %v4416, %v4414
        %v4499 = vpack.c.b16 %v4417, %v4415
        %v4500 = vpack.c.b16 %v4420, %v4418
        %v4501 = vpack.c.b16 %v4421, %v4419
        %v4502 = vpack.c.b16 %v4424, %v4422
        %v4503 = vpack.c.b16 %v4425, %v4423
        %v4504 = vpack.c.b16 %v4428, %v4426
        %v4505 = vpack.c.b16 %v4429, %v4427
        %v4506 = vpack.c.b16 %v4432, %v4430
        %v4507 = vpack.c.b16 %v4433, %v4431
        %v4508 = vpack.c.b16 %v4436, %v4434
        %v4509 = vpack.c.b16 %v4437, %v4435
        %v4510 = vpack.c.b16 %v4440, %v4438
        %v4511 = vpack.c.b16 %v4441, %v4439
        %v4512 = vpack.c.b16 %v4444, %v4442
        %v4513 = vpack.c.b16 %v4445, %v4443
        %v4514 = vpack.c.b16 %v4448, %v4446
        %v4515 = vpack.c.b16 %v4449, %v4447
        %v4516 = vpack.c.b16 %v4452, %v4450
        %v4517 = vpack.c.b16 %v4453, %v4451
        %v4518 = vpack.c.b16 %v4456, %v4454
        %v4519 = vpack.c.b16 %v4457, %v4455
        %v4520 = vpack.c.b16 %v4460, %v4458
        %v4521 = vpack.c.b16 %v4461, %v4459
        %v4522 = vpack.c.b16 %v4464, %v4462
        %v4523 = vpack.c.b16 %v4465, %v4463
        %v4524 = vpack.c.b16 %v4468, %v4466
        %v4525 = vpack.c.b16 %v4469, %v4467
        %v4526 = vpack.c.b16 %v4472, %v4470
        %v4527 = vpack.c.b16 %v4473, %v4471
        %v4528 = vpack.c.b16 %v4476, %v4474
        %v4529 = vpack.c.b16 %v4477, %v4475
        %v4530 = vpack.c.b16 %v4480, %v4478
        %v4531 = vpack.c.b16 %v4481, %v4479
        %v4532 = vpack.c.b16 %v4484, %v4482
        %v4533 = vpack.c.b16 %v4485, %v4483
        %v4576 = vunpack.c.l.b16 %v4317
        %v4577 = vunpack.c.l.b16 %v4318
        %v4578 = vunpack.c.l.b16 %v4319
        %v4579 = vunpack.c.l.b16 %v4320
        %v4580 = vunpack.c.l.b16 %v4321
        %v4581 = vunpack.c.l.b16 %v4322
        %v4582 = vunpack.c.l.b16 %v4323
        %v4583 = vunpack.c.l.b16 %v4324
        %v4584 = vunpack.c.l.b16 %v4325
        %v4585 = vunpack.c.l.b16 %v4326
        %v4586 = vunpack.c.l.b16 %v4327
        %v4587 = vunpack.c.l.b16 %v4328
        %v4588 = vunpack.c.l.b16 %v4329
        %v4589 = vunpack.c.l.b16 %v4330
        %v4590 = vunpack.c.l.b16 %v4331
        %v4591 = vunpack.c.l.b16 %v4332
        %v4592 = vunpack.c.l.b16 %v4333
        %v4593 = vunpack.c.l.b16 %v4334
        %v4594 = vpack.c.b16 %v4577, %v4576
        %v4595 = vpack.c.b16 %v4579, %v4578
        %v4596 = vpack.c.b16 %v4581, %v4580
        %v4597 = vpack.c.b16 %v4583, %v4582
        %v4598 = vpack.c.b16 %v4585, %v4584
        %v4599 = vpack.c.b16 %v4587, %v4586
        %v4600 = vpack.c.b16 %v4589, %v4588
        %v4601 = vpack.c.b16 %v4591, %v4590
        %v4602 = vpack.c.b16 %v4593, %v4592
        %vm4612 = vcmask 130048
        %v4614 = vsel %vm4612, %v4487, 0
        %v4617 = vsel %vm4612, %v4489, 0
        %v4620 = vsel %vm4612, %v4491, 0
        %v4623 = vsel %vm4612, %v4493, 0
        %v4626 = vsel %vm4612, %v4495, 0
        %v4629 = vsel %vm4612, %v4497, 0
        %v4632 = vsel %vm4612, %v4499, 0
        %v4635 = vsel %vm4612, %v4501, 0
        %v4638 = vsel %vm4612, %v4503, 0
        %v4641 = vsel %vm4612, %v4505, 0
        %v4644 = vsel %vm4612, %v4507, 0
        %v4647 = vsel %vm4612, %v4509, 0
        %v4650 = vsel %vm4612, %v4511, 0
        %v4653 = vsel %vm4612, %v4513, 0
        %v4656 = vsel %vm4612, %v4515, 0
        %v4659 = vsel %vm4612, %v4517, 0
        %v4662 = vsel %vm4612, %v4519, 0
        %v4665 = vsel %vm4612, %v4521, 0
        %v4668 = vsel %vm4612, %v4523, 0
        %v4671 = vsel %vm4612, %v4525, 0
        %v4674 = vsel %vm4612, %v4527, 0
        %v4677 = vsel %vm4612, %v4529, 0
        %v4680 = vsel %vm4612, %v4531, 0
        %v4683 = vsel %vm4612, %v4533, 0
        %4685 = vmatprep.subr.bf16.mxu0 0
        %4686 = vmatpush1.bf16.msra.mxu0 %v4601
        %4687 = vmatprep.subr.bf16.mxu0 0
        %4688 = vmatpush1.bf16.msra.mxu0 %v4600
        %4689 = vmatprep.subr.bf16.mxu0 0
        %4690 = vmatpush1.bf16.msra.mxu0 %v4599
        %4691 = vmatprep.subr.bf16.mxu0 0
        %4692 = vmatpush1.bf16.msra.mxu0 %v4598
        %4693 = vmatprep.subr.bf16.mxu0 0
        %4694 = vmatpush1.bf16.msra.mxu0 %v4597
        %4695 = vmatprep.subr.bf16.mxu0 0
        %4696 = vmatpush1.bf16.msra.mxu0 %v4596
        %4697 = vmatprep.subr.bf16.mxu0 0
        %4698 = vmatpush1.bf16.msra.mxu0 %v4595
        %4699 = vmatprep.subr.bf16.mxu0 0
        %4700 = vmatpush1.bf16.msra.mxu0 %v4594
        %4701 = vmatprep.subr.bf16.mxu0 0
        %4702 = vmatpush2.bf16.msra.mxu0 0
        %4703 = vmatprep.subr.bf16.mxu0 0
        %4704 = vmatpush2.bf16.msra.mxu0 0
        %4705 = vmatprep.subr.bf16.mxu0 0
        %4706 = vmatpush2.bf16.msra.mxu0 0
        %4707 = vmatprep.subr.bf16.mxu0 0
        %4708 = vmatpush2.bf16.msra.mxu0 0
        %4709 = vmatprep.subr.bf16.mxu0 0
        %4710 = vmatpush2.bf16.msra.mxu0 0
        %4711 = vmatprep.subr.bf16.mxu0 0
        %4712 = vmatpush2.bf16.msra.mxu0 0
        %4713 = vmatprep.subr.bf16.mxu0 0
        %4714 = vmatpush2.bf16.msra.mxu0 0
        %4715 = vmatprep.subr.bf16.mxu0 0
        %4716 = vmatpush2.bf16.msra.mxu0 %v4602
        %4717 = vmatprep.mubr.bf16.mxu0 %v4614
        %4718 = vmatmul.mubr.bf16.gmra.mxu0 %v4486
        %v4719 = vpop.f32.mrf.mxu0
        %v4720 = vadd.f32 %v4340, %v4719
        %v4721 = vpop.f32.mrf.mxu0
        %v4722 = vpop.f32.mrf.mxu0
        %v4723 = vadd.f32 %v4340, %v4722
        %v4724 = vpop.f32.mrf.mxu0
        %4725 = vmatprep.mubr.bf16.mxu0 %v4617
        %4726 = vmatmul.mubr.bf16.gmra.mxu0 %v4488
        %v4727 = vpop.f32.mrf.mxu0
        %v4728 = vadd.f32 %v4340, %v4727
        %v4729 = vpop.f32.mrf.mxu0
        %v4730 = vpop.f32.mrf.mxu0
        %v4731 = vadd.f32 %v4340, %v4730
        %v4732 = vpop.f32.mrf.mxu0
        %4733 = vmatprep.mubr.bf16.mxu0 %v4620
        %4734 = vmatmul.mubr.bf16.gmra.mxu0 %v4490
        %v4735 = vpop.f32.mrf.mxu0
        %v4736 = vadd.f32 %v4340, %v4735
        %v4737 = vpop.f32.mrf.mxu0
        %v4738 = vpop.f32.mrf.mxu0
        %v4739 = vadd.f32 %v4340, %v4738
        %v4740 = vpop.f32.mrf.mxu0
        %4741 = vmatprep.mubr.bf16.mxu0 %v4623
        %4742 = vmatmul.mubr.bf16.gmra.mxu0 %v4492
        %v4743 = vpop.f32.mrf.mxu0
        %v4744 = vadd.f32 %v4340, %v4743
        %v4745 = vpop.f32.mrf.mxu0
        %v4746 = vpop.f32.mrf.mxu0
        %v4747 = vadd.f32 %v4340, %v4746
        %v4748 = vpop.f32.mrf.mxu0
        %4749 = vmatprep.mubr.bf16.mxu0 %v4626
        %4750 = vmatmul.mubr.bf16.gmra.mxu0 %v4494
        %v4751 = vpop.f32.mrf.mxu0
        %v4752 = vadd.f32 %v4340, %v4751
        %v4753 = vpop.f32.mrf.mxu0
        %v4754 = vpop.f32.mrf.mxu0
        %v4755 = vadd.f32 %v4340, %v4754
        %v4756 = vpop.f32.mrf.mxu0
        %4757 = vmatprep.mubr.bf16.mxu0 %v4629
        %4758 = vmatmul.mubr.bf16.gmra.mxu0 %v4496
        %v4759 = vpop.f32.mrf.mxu0
        %v4760 = vadd.f32 %v4340, %v4759
        %v4761 = vpop.f32.mrf.mxu0
        %v4762 = vpop.f32.mrf.mxu0
        %v4763 = vadd.f32 %v4340, %v4762
        %v4764 = vpop.f32.mrf.mxu0
        %4765 = vmatprep.mubr.bf16.mxu0 %v4632
        %4766 = vmatmul.mubr.bf16.gmra.mxu0 %v4498
        %v4767 = vpop.f32.mrf.mxu0
        %v4768 = vadd.f32 %v4340, %v4767
        %v4769 = vpop.f32.mrf.mxu0
        %v4770 = vpop.f32.mrf.mxu0
        %v4771 = vadd.f32 %v4340, %v4770
        %v4772 = vpop.f32.mrf.mxu0
        %4773 = vmatprep.mubr.bf16.mxu0 %v4635
        %4774 = vmatmul.mubr.bf16.gmra.mxu0 %v4500
        %v4775 = vpop.f32.mrf.mxu0
        %v4776 = vadd.f32 %v4340, %v4775
        %v4777 = vpop.f32.mrf.mxu0
        %v4778 = vpop.f32.mrf.mxu0
        %v4779 = vadd.f32 %v4340, %v4778
        %v4780 = vpop.f32.mrf.mxu0
        %4781 = vmatprep.mubr.bf16.mxu0 %v4638
        %4782 = vmatmul.mubr.bf16.gmra.mxu0 %v4502
        %v4783 = vpop.f32.mrf.mxu0
        %v4784 = vadd.f32 %v4340, %v4783
        %v4785 = vpop.f32.mrf.mxu0
        %v4786 = vpop.f32.mrf.mxu0
        %v4787 = vadd.f32 %v4340, %v4786
        %v4788 = vpop.f32.mrf.mxu0
        %4789 = vmatprep.mubr.bf16.mxu0 %v4641
        %4790 = vmatmul.mubr.bf16.gmra.mxu0 %v4504
        %v4791 = vpop.f32.mrf.mxu0
        %v4792 = vadd.f32 %v4340, %v4791
        %v4793 = vpop.f32.mrf.mxu0
        %v4794 = vpop.f32.mrf.mxu0
        %v4795 = vadd.f32 %v4340, %v4794
        %v4796 = vpop.f32.mrf.mxu0
        %4797 = vmatprep.mubr.bf16.mxu0 %v4644
        %4798 = vmatmul.mubr.bf16.gmra.mxu0 %v4506
        %v4799 = vpop.f32.mrf.mxu0
        %v4800 = vadd.f32 %v4340, %v4799
        %v4801 = vpop.f32.mrf.mxu0
        %v4802 = vpop.f32.mrf.mxu0
        %v4803 = vadd.f32 %v4340, %v4802
        %v4804 = vpop.f32.mrf.mxu0
        %4805 = vmatprep.mubr.bf16.mxu0 %v4647
        %4806 = vmatmul.mubr.bf16.gmra.mxu0 %v4508
        %v4807 = vpop.f32.mrf.mxu0
        %v4808 = vadd.f32 %v4340, %v4807
        %v4809 = vpop.f32.mrf.mxu0
        %v4810 = vpop.f32.mrf.mxu0
        %v4811 = vadd.f32 %v4340, %v4810
        %v4812 = vpop.f32.mrf.mxu0
        %4813 = vmatprep.mubr.bf16.mxu0 %v4650
        %4814 = vmatmul.mubr.bf16.gmra.mxu0 %v4510
        %v4815 = vpop.f32.mrf.mxu0
        %v4816 = vadd.f32 %v4340, %v4815
        %v4817 = vpop.f32.mrf.mxu0
        %v4818 = vpop.f32.mrf.mxu0
        %v4819 = vadd.f32 %v4340, %v4818
        %v4820 = vpop.f32.mrf.mxu0
        %4821 = vmatprep.mubr.bf16.mxu0 %v4653
        %4822 = vmatmul.mubr.bf16.gmra.mxu0 %v4512
        %v4823 = vpop.f32.mrf.mxu0
        %v4824 = vadd.f32 %v4340, %v4823
        %v4825 = vpop.f32.mrf.mxu0
        %v4826 = vpop.f32.mrf.mxu0
        %v4827 = vadd.f32 %v4340, %v4826
        %v4828 = vpop.f32.mrf.mxu0
        %4829 = vmatprep.mubr.bf16.mxu0 %v4656
        %4830 = vmatmul.mubr.bf16.gmra.mxu0 %v4514
        %v4831 = vpop.f32.mrf.mxu0
        %v4832 = vadd.f32 %v4340, %v4831
        %v4833 = vpop.f32.mrf.mxu0
        %v4834 = vpop.f32.mrf.mxu0
        %v4835 = vadd.f32 %v4340, %v4834
        %v4836 = vpop.f32.mrf.mxu0
        %4837 = vmatprep.mubr.bf16.mxu0 %v4659
        %4838 = vmatmul.mubr.bf16.gmra.mxu0 %v4516
        %v4839 = vpop.f32.mrf.mxu0
        %v4840 = vadd.f32 %v4340, %v4839
        %v4841 = vpop.f32.mrf.mxu0
        %v4842 = vpop.f32.mrf.mxu0
        %v4843 = vadd.f32 %v4340, %v4842
        %v4844 = vpop.f32.mrf.mxu0
        %4845 = vmatprep.mubr.bf16.mxu0 %v4662
        %4846 = vmatmul.mubr.bf16.gmra.mxu0 %v4518
        %v4847 = vpop.f32.mrf.mxu0
        %v4848 = vadd.f32 %v4340, %v4847
        %v4849 = vpop.f32.mrf.mxu0
        %v4850 = vpop.f32.mrf.mxu0
        %v4851 = vadd.f32 %v4340, %v4850
        %v4852 = vpop.f32.mrf.mxu0
        %4853 = vmatprep.mubr.bf16.mxu0 %v4665
        %4854 = vmatmul.mubr.bf16.gmra.mxu0 %v4520
        %v4855 = vpop.f32.mrf.mxu0
        %v4856 = vadd.f32 %v4340, %v4855
        %v4857 = vpop.f32.mrf.mxu0
        %v4858 = vpop.f32.mrf.mxu0
        %v4859 = vadd.f32 %v4340, %v4858
        %v4860 = vpop.f32.mrf.mxu0
        %4861 = vmatprep.mubr.bf16.mxu0 %v4668
        %4862 = vmatmul.mubr.bf16.gmra.mxu0 %v4522
        %v4863 = vpop.f32.mrf.mxu0
        %v4864 = vadd.f32 %v4340, %v4863
        %v4865 = vpop.f32.mrf.mxu0
        %v4866 = vpop.f32.mrf.mxu0
        %v4867 = vadd.f32 %v4340, %v4866
        %v4868 = vpop.f32.mrf.mxu0
        %4869 = vmatprep.mubr.bf16.mxu0 %v4671
        %4870 = vmatmul.mubr.bf16.gmra.mxu0 %v4524
        %v4871 = vpop.f32.mrf.mxu0
        %v4872 = vadd.f32 %v4340, %v4871
        %v4873 = vpop.f32.mrf.mxu0
        %v4874 = vpop.f32.mrf.mxu0
        %v4875 = vadd.f32 %v4340, %v4874
        %v4876 = vpop.f32.mrf.mxu0
        %4877 = vmatprep.mubr.bf16.mxu0 %v4674
        %4878 = vmatmul.mubr.bf16.gmra.mxu0 %v4526
        %v4879 = vpop.f32.mrf.mxu0
        %v4880 = vadd.f32 %v4340, %v4879
        %v4881 = vpop.f32.mrf.mxu0
        %v4882 = vpop.f32.mrf.mxu0
        %v4883 = vadd.f32 %v4340, %v4882
        %v4884 = vpop.f32.mrf.mxu0
        %4885 = vmatprep.mubr.bf16.mxu0 %v4677
        %4886 = vmatmul.mubr.bf16.gmra.mxu0 %v4528
        %v4887 = vpop.f32.mrf.mxu0
        %v4888 = vadd.f32 %v4340, %v4887
        %v4889 = vpop.f32.mrf.mxu0
        %v4890 = vpop.f32.mrf.mxu0
        %v4891 = vadd.f32 %v4340, %v4890
        %v4892 = vpop.f32.mrf.mxu0
        %4893 = vmatprep.mubr.bf16.mxu0 %v4680
        %4894 = vmatmul.mubr.bf16.gmra.mxu0 %v4530
        %v4895 = vpop.f32.mrf.mxu0
        %v4896 = vadd.f32 %v4340, %v4895
        %v4897 = vpop.f32.mrf.mxu0
        %v4898 = vpop.f32.mrf.mxu0
        %v4899 = vadd.f32 %v4340, %v4898
        %v4900 = vpop.f32.mrf.mxu0
        %4901 = vmatprep.mubr.bf16.mxu0 %v4683
        %4902 = vmatmul.mubr.bf16.gmra.mxu0 %v4532
        %v4903 = vpop.f32.mrf.mxu0
        %v4904 = vadd.f32 %v4340, %v4903
        %v4905 = vpop.f32.mrf.mxu0
        %v4906 = vpop.f32.mrf.mxu0
        %v4907 = vadd.f32 %v4340, %v4906
        %v4908 = vpop.f32.mrf.mxu0
        %4909 = vdwg.mxu0
        %v4910 = vmax.f32 %v4720, 0.0
        %v4911 = vmax.f32 %v4723, 0.0
        %v4912 = vmax.f32 %v4728, 0.0
        %v4913 = vmax.f32 %v4731, 0.0
        %v4914 = vmax.f32 %v4736, 0.0
        %v4915 = vmax.f32 %v4739, 0.0
        %v4916 = vmax.f32 %v4744, 0.0
        %v4917 = vmax.f32 %v4747, 0.0
        %v4918 = vmax.f32 %v4752, 0.0
        %v4919 = vmax.f32 %v4755, 0.0
        %v4920 = vmax.f32 %v4760, 0.0
        %v4921 = vmax.f32 %v4763, 0.0
        %v4922 = vmax.f32 %v4768, 0.0
        %v4923 = vmax.f32 %v4771, 0.0
        %v4924 = vmax.f32 %v4776, 0.0
        %v4925 = vmax.f32 %v4779, 0.0
        %v4926 = vmax.f32 %v4784, 0.0
        %v4927 = vmax.f32 %v4787, 0.0
        %v4928 = vmax.f32 %v4792, 0.0
        %v4929 = vmax.f32 %v4795, 0.0
        %v4930 = vmax.f32 %v4800, 0.0
        %v4931 = vmax.f32 %v4803, 0.0
        %v4932 = vmax.f32 %v4808, 0.0
        %v4933 = vmax.f32 %v4811, 0.0
        %v4934 = vmax.f32 %v4816, 0.0
        %v4935 = vmax.f32 %v4819, 0.0
        %v4936 = vmax.f32 %v4824, 0.0
        %v4937 = vmax.f32 %v4827, 0.0
        %v4938 = vmax.f32 %v4832, 0.0
        %v4939 = vmax.f32 %v4835, 0.0
        %v4940 = vmax.f32 %v4840, 0.0
        %v4941 = vmax.f32 %v4843, 0.0
        %v4942 = vmax.f32 %v4848, 0.0
        %v4943 = vmax.f32 %v4851, 0.0
        %v4944 = vmax.f32 %v4856, 0.0
        %v4945 = vmax.f32 %v4859, 0.0
        %v4946 = vmax.f32 %v4864, 0.0
        %v4947 = vmax.f32 %v4867, 0.0
        %v4948 = vmax.f32 %v4872, 0.0
        %v4949 = vmax.f32 %v4875, 0.0
        %v4950 = vmax.f32 %v4880, 0.0
        %v4951 = vmax.f32 %v4883, 0.0
        %v4952 = vmax.f32 %v4888, 0.0
        %v4953 = vmax.f32 %v4891, 0.0
        %v4954 = vmax.f32 %v4896, 0.0
        %v4955 = vmax.f32 %v4899, 0.0
        %v4956 = vmax.f32 %v4904, 0.0
        %v4957 = vmax.f32 %v4907, 0.0
        %v4958 = vpack.c.bf16 %v4911, %v4910
        %v4959 = vpack.c.bf16 %v4913, %v4912
        %v4960 = vpack.c.bf16 %v4915, %v4914
        %v4961 = vpack.c.bf16 %v4917, %v4916
        %v4962 = vpack.c.bf16 %v4919, %v4918
        %v4963 = vpack.c.bf16 %v4921, %v4920
        %v4964 = vpack.c.bf16 %v4923, %v4922
        %v4965 = vpack.c.bf16 %v4925, %v4924
        %v4966 = vpack.c.bf16 %v4927, %v4926
        %v4967 = vpack.c.bf16 %v4929, %v4928
        %v4968 = vpack.c.bf16 %v4931, %v4930
        %v4969 = vpack.c.bf16 %v4933, %v4932
        %v4970 = vpack.c.bf16 %v4935, %v4934
        %v4971 = vpack.c.bf16 %v4937, %v4936
        %v4972 = vpack.c.bf16 %v4939, %v4938
        %v4973 = vpack.c.bf16 %v4941, %v4940
        %v4974 = vpack.c.bf16 %v4943, %v4942
        %v4975 = vpack.c.bf16 %v4945, %v4944
        %v4976 = vpack.c.bf16 %v4947, %v4946
        %v4977 = vpack.c.bf16 %v4949, %v4948
        %v4978 = vpack.c.bf16 %v4951, %v4950
        %v4979 = vpack.c.bf16 %v4953, %v4952
        %v4980 = vpack.c.bf16 %v4955, %v4954
        %v4981 = vpack.c.bf16 %v4957, %v4956
        %v5006 = vunpack.c.l.b16 %v4958
        %v5007 = vunpack.c.h.b16 %v4958
        %v5008 = vunpack.c.l.b16 %v4959
        %v5009 = vunpack.c.h.b16 %v4959
        %v5010 = vunpack.c.l.b16 %v4960
        %v5011 = vunpack.c.h.b16 %v4960
        %v5012 = vunpack.c.l.b16 %v4961
        %v5013 = vunpack.c.h.b16 %v4961
        %v5014 = vunpack.c.l.b16 %v4962
        %v5015 = vunpack.c.h.b16 %v4962
        %v5016 = vunpack.c.l.b16 %v4963
        %v5017 = vunpack.c.h.b16 %v4963
        %v5018 = vunpack.c.l.b16 %v4964
        %v5019 = vunpack.c.h.b16 %v4964
        %v5020 = vunpack.c.l.b16 %v4965
        %v5021 = vunpack.c.h.b16 %v4965
        %v5022 = vunpack.c.l.b16 %v4966
        %v5023 = vunpack.c.h.b16 %v4966
        %v5024 = vunpack.c.l.b16 %v4967
        %v5025 = vunpack.c.h.b16 %v4967
        %v5026 = vunpack.c.l.b16 %v4968
        %v5027 = vunpack.c.h.b16 %v4968
        %v5028 = vunpack.c.l.b16 %v4969
        %v5029 = vunpack.c.h.b16 %v4969
        %v5030 = vunpack.c.l.b16 %v4970
        %v5031 = vunpack.c.h.b16 %v4970
        %v5032 = vunpack.c.l.b16 %v4971
        %v5033 = vunpack.c.h.b16 %v4971
        %v5034 = vunpack.c.l.b16 %v4972
        %v5035 = vunpack.c.h.b16 %v4972
        %v5036 = vunpack.c.l.b16 %v4973
        %v5037 = vunpack.c.h.b16 %v4973
        %v5038 = vunpack.c.l.b16 %v4974
        %v5039 = vunpack.c.h.b16 %v4974
        %v5040 = vunpack.c.l.b16 %v4975
        %v5041 = vunpack.c.h.b16 %v4975
        %v5042 = vunpack.c.l.b16 %v4976
        %v5043 = vunpack.c.h.b16 %v4976
        %v5044 = vunpack.c.l.b16 %v4977
        %v5045 = vunpack.c.h.b16 %v4977
        %v5046 = vunpack.c.l.b16 %v4978
        %v5047 = vunpack.c.h.b16 %v4978
        %v5048 = vunpack.c.l.b16 %v4979
        %v5049 = vunpack.c.h.b16 %v4979
        %v5050 = vunpack.c.l.b16 %v4980
        %v5051 = vunpack.c.h.b16 %v4980
        %v5052 = vunpack.c.l.b16 %v4981
        %v5053 = vunpack.c.h.b16 %v4981
        %v5054 = vpack.c.b16 %v5006, %v5006
        %v5055 = vpack.c.b16 %v5007, %v5007
        %v5056 = vpack.c.b16 %v5008, %v5008
        %v5057 = vpack.c.b16 %v5009, %v5009
        %v5058 = vpack.c.b16 %v5010, %v5010
        %v5059 = vpack.c.b16 %v5011, %v5011
        %v5060 = vpack.c.b16 %v5012, %v5012
        %v5061 = vpack.c.b16 %v5013, %v5013
        %v5062 = vpack.c.b16 %v5014, %v5014
        %v5063 = vpack.c.b16 %v5015, %v5015
        %v5064 = vpack.c.b16 %v5016, %v5016
        %v5065 = vpack.c.b16 %v5017, %v5017
        %v5066 = vpack.c.b16 %v5018, %v5018
        %v5067 = vpack.c.b16 %v5019, %v5019
        %v5068 = vpack.c.b16 %v5020, %v5020
        %v5069 = vpack.c.b16 %v5021, %v5021
        %v5070 = vpack.c.b16 %v5022, %v5022
        %v5071 = vpack.c.b16 %v5023, %v5023
        %v5072 = vpack.c.b16 %v5024, %v5024
        %v5073 = vpack.c.b16 %v5025, %v5025
        %v5074 = vpack.c.b16 %v5026, %v5026
        %v5075 = vpack.c.b16 %v5027, %v5027
        %v5076 = vpack.c.b16 %v5028, %v5028
        %v5077 = vpack.c.b16 %v5029, %v5029
        %v5078 = vpack.c.b16 %v5030, %v5030
        %v5079 = vpack.c.b16 %v5031, %v5031
        %v5080 = vpack.c.b16 %v5032, %v5032
        %v5081 = vpack.c.b16 %v5033, %v5033
        %v5082 = vpack.c.b16 %v5034, %v5034
        %v5083 = vpack.c.b16 %v5035, %v5035
        %v5084 = vpack.c.b16 %v5036, %v5036
        %v5085 = vpack.c.b16 %v5037, %v5037
        %v5086 = vpack.c.b16 %v5038, %v5038
        %v5087 = vpack.c.b16 %v5039, %v5039
        %v5088 = vpack.c.b16 %v5040, %v5040
        %v5089 = vpack.c.b16 %v5041, %v5041
        %v5090 = vpack.c.b16 %v5042, %v5042
        %v5091 = vpack.c.b16 %v5043, %v5043
        %v5092 = vpack.c.b16 %v5044, %v5044
        %v5093 = vpack.c.b16 %v5045, %v5045
        %v5094 = vpack.c.b16 %v5046, %v5046
        %v5095 = vpack.c.b16 %v5047, %v5047
        %v5096 = vpack.c.b16 %v5048, %v5048
        %v5097 = vpack.c.b16 %v5049, %v5049
        %v5098 = vpack.c.b16 %v5050, %v5050
        %v5099 = vpack.c.b16 %v5051, %v5051
        %v5100 = vpack.c.b16 %v5052, %v5052
        %v5101 = vpack.c.b16 %v5053, %v5053
        %5150 = vst [vmem:[%s187] sm:$0xf] %v5054
        %5151 = vst [vmem:[%s187 + $0x4] sm:$0xf] %v5055
        %5152 = vst [vmem:[%s187 + $0x8] sm:$0xf] %v5056
        %5153 = vst [vmem:[%s187 + $0xc] sm:$0xf] %v5057
        %5154 = vst [vmem:[%s187 + $0x10] sm:$0xf] %v5058
        %5155 = vst [vmem:[%s187 + $0x14] sm:$0xf] %v5059
        %5156 = vst [vmem:[%s187 + $0x18] sm:$0xf] %v5060
        %5157 = vst [vmem:[%s187 + $0x1c] sm:$0xf] %v5061
        %5158 = vst [vmem:[%s187 + $0x20] sm:$0xf] %v5062
        %5159 = vst [vmem:[%s187 + $0x24] sm:$0xf] %v5063
        %5160 = vst [vmem:[%s187 + $0x28] sm:$0xf] %v5064
        %5161 = vst [vmem:[%s187 + $0x2c] sm:$0xf] %v5065
        %5162 = vst [vmem:[%s187 + $0x30] sm:$0xf] %v5066
        %5163 = vst [vmem:[%s187 + $0x34] sm:$0xf] %v5067
        %5164 = vst [vmem:[%s187 + $0x38] sm:$0xf] %v5068
        %5165 = vst [vmem:[%s187 + $0x3c] sm:$0xf] %v5069
        %5166 = vst [vmem:[%s187 + $0x40] sm:$0xf] %v5070
        %5167 = vst [vmem:[%s187 + $0x44] sm:$0xf] %v5071
        %5168 = vst [vmem:[%s187 + $0x48] sm:$0xf] %v5072
        %5169 = vst [vmem:[%s187 + $0x4c] sm:$0xf] %v5073
        %5170 = vst [vmem:[%s187 + $0x50] sm:$0xf] %v5074
        %5171 = vst [vmem:[%s187 + $0x54] sm:$0xf] %v5075
        %5172 = vst [vmem:[%s187 + $0x58] sm:$0xf] %v5076
        %5173 = vst [vmem:[%s187 + $0x5c] sm:$0xf] %v5077
        %5174 = vst [vmem:[%s187 + $0x60] sm:$0xf] %v5078
        %5175 = vst [vmem:[%s187 + $0x64] sm:$0xf] %v5079
        %5176 = vst [vmem:[%s187 + $0x68] sm:$0xf] %v5080
        %5177 = vst [vmem:[%s187 + $0x6c] sm:$0xf] %v5081
        %5178 = vst [vmem:[%s187 + $0x70] sm:$0xf] %v5082
        %5179 = vst [vmem:[%s187 + $0x74] sm:$0xf] %v5083
        %5180 = vst [vmem:[%s187 + $0x78] sm:$0xf] %v5084
        %5181 = vst [vmem:[%s187 + $0x7c] sm:$0xf] %v5085
        %5182 = vst [vmem:[%s187 + $0x80] sm:$0xf] %v5086
        %5183 = vst [vmem:[%s187 + $0x84] sm:$0xf] %v5087
        %5184 = vst [vmem:[%s187 + $0x88] sm:$0xf] %v5088
        %5185 = vst [vmem:[%s187 + $0x8c] sm:$0xf] %v5089
        %5186 = vst [vmem:[%s187 + $0x90] sm:$0xf] %v5090
        %5187 = vst [vmem:[%s187 + $0x94] sm:$0xf] %v5091
        %5188 = vst [vmem:[%s187 + $0x98] sm:$0xf] %v5092
        %5189 = vst [vmem:[%s187 + $0x9c] sm:$0xf] %v5093
        %5190 = vst [vmem:[%s187 + $0xa0] sm:$0xf] %v5094
        %5191 = vst [vmem:[%s187 + $0xa4] sm:$0xf] %v5095
        %5192 = vst [vmem:[%s187 + $0xa8] sm:$0xf] %v5096
        %5193 = vst [vmem:[%s187 + $0xac] sm:$0xf] %v5097
        %5194 = vst [vmem:[%s187 + $0xb0] sm:$0xf] %v5098
        %5195 = vst [vmem:[%s187 + $0xb4] sm:$0xf] %v5099
        %5196 = vst [vmem:[%s187 + $0xb8] sm:$0xf] %v5100
        %5197 = vst [vmem:[%s187 + $0xbc] sm:$0xf] %v5101
        %s5198 = sand.u32 %s109, 1
        %s5199 = scalar_lea.sflag [#allocation4], %s5198
        %s5200 = sand.u32 %s109, 1
        %s5201 = smul.addr %s5200, 192
        %s5202 = scalar_lea.vmem [#allocation3], %s5201
        // Predicated region
        $region33: #{tpu_custom_call.1} parent=31 // pred_check
          %p5203 = pneg %p119
        $region34: #{tpu_custom_call.1} parent=31 // pred_check_branch
          %5205 = sbr.rel (%p5203) target = $region36
        $region35: #{tpu_custom_call.1} parent=31 // pred_region
          %s5206 = smul.u32 48, %s22
          %s5208 = ssub.s32 3072, 3072
          %5209 = vsyncadd %s5199, %s5208
          %s5210 = smul.addr %s21, 48
          %s5211 = sadd.s32 %s5206, %s5210
          %s5212 = smul.addr %s5211, 64
          %s5213 = scalar_lea.hbm %s3, %s5212
          %s5214 = sshll.u32 %s5202, 4
          %s5215 = int_to_ptr.vmem [resolvable:$true] %s5214
          %5220 = dma.vmem_to_hbm [thread:$0]  %s5215, 3072, %s5213, %s5199, 64, 64, 4
        $region36: #{tpu_custom_call.1} parent=31 // pred_fallthru
          _
      $region32: #{tpu_custom_call.1} parent=5 // pred_fallthru
        _
      %p5221 = scmp.le.s32.totalorder 2, %s12
      // Predicated region
      $region37: #{tpu_custom_call.1} parent=5 // pred_check
        %p5222 = pneg %p5221
      $region38: #{tpu_custom_call.1} parent=5 // pred_check_branch
        %5224 = sbr.rel (%p5222) target = $region40
      $region39: #{tpu_custom_call.1} parent=5 // pred_region
        %s5225 = ssub.s32 %s12, 2
        // Predicated region
        $region41: #{tpu_custom_call.1} parent=39 // pred_check
          %p5226 = pneg %p125
        $region42: #{tpu_custom_call.1} parent=39 // pred_check_branch
          %5228 = sbr.rel (%p5226) target = $region44
        $region43: #{tpu_custom_call.1} parent=39 // pred_region
          %s5229 = sand.u32 %s110, 1
          %s5230 = scalar_lea.sflag [#allocation4], %s5229
          %s5231 = sand.u32 %s110, 1
          %s5232 = smul.addr %s5231, 192
          %s5233 = scalar_lea.vmem [#allocation3], %s5232
          %5234 = dma.done %s5230, 3072
        $region44: #{tpu_custom_call.1} parent=39 // pred_fallthru
          _
      $region40: #{tpu_custom_call.1} parent=5 // pred_fallthru
        _
    $region6: #{tpu_custom_call.1} parent=1 // loop_footer
      %s16 = sadd.s32 1, %s12
    $region7: #{tpu_custom_call.1} parent=1 // loop_footer_branch
      %11 = sbr.rel target = $region3
    $region8: #{tpu_custom_call.1} parent=1 // loop_exit
      _
    %5235 = vsyncpa [#allocation4], 1
    %s5236 = scalar_lea.sflag [#allocation4], 1
    %5237 = vsyncpa %s5236, 1

</llo_original>
